<compile_context>
chip_gen: v5e
topology: v5e:2x2
jax: 0.10.0
libtpu: 0.0.40
codegen_flags: <defaults>
</compile_context>

<pallas_src>
import functools

import jax
import jax.numpy as jnp
import numpy as np
from jax.experimental import pallas as pl
from jax.experimental.pallas import tpu as pltpu

EPS = 0.001


def _conv_along_h(x, pad_ref, w_ref, b, d):
    """3x1 conv (along H) with dilation d, zero padding d.  x: (H, W, C) f32."""
    h, w, c = x.shape
    pad_ref[0:d] = jnp.zeros((d, w, c), jnp.float32)
    pad_ref[h + d:h + 2 * d] = jnp.zeros((d, w, c), jnp.float32)
    pad_ref[d:d + h] = x
    acc = jnp.zeros((h * w, c), jnp.float32)
    for k in range(3):
        xs = pad_ref[k * d:k * d + h].reshape(h * w, c)
        acc = acc + jnp.dot(xs, w_ref[k], preferred_element_type=jnp.float32)
    return (acc + b).reshape(h, w, c)


def _conv_along_w(x, pad_ref, w_ref, b, d):
    """1x3 conv (along W) with dilation d, zero padding d.  x: (H, W, C) f32."""
    h, w, c = x.shape
    pad_ref[:, 0:d, :] = jnp.zeros((h, d, c), jnp.float32)
    pad_ref[:, w + d:w + 2 * d, :] = jnp.zeros((h, d, c), jnp.float32)
    pad_ref[:, d:d + w, :] = x
    acc = jnp.zeros((h * w, c), jnp.float32)
    for k in range(3):
        xs = pad_ref[:, k * d:k * d + w, :].reshape(h * w, c)
        acc = acc + jnp.dot(xs, w_ref[k], preferred_element_type=jnp.float32)
    return (acc + b).reshape(h, w, c)


def _stage1_kernel(x_ref, w1h_ref, b1h_ref, w1w_ref, b1w_ref,
                   y2_ref, stats_ref, padh_ref, padw_ref):
    """conv3x1_1 -> relu -> conv1x3_1, plus one-pass BN partial stats."""
    x = x_ref[...]
    h, w, c = x.shape
    y1 = jnp.maximum(_conv_along_h(x, padh_ref, w1h_ref, b1h_ref[...], 1), 0.0)
    y2 = _conv_along_w(y1, padw_ref, w1w_ref, b1w_ref[...], 1)
    y2_ref[...] = y2
    y2f = y2.reshape(h * w, c)
    stats_ref[0:1, :] = jnp.sum(y2f, axis=0, keepdims=True)
    stats_ref[1:2, :] = jnp.sum(y2f * y2f, axis=0, keepdims=True)


def _stage2_kernel(x_ref, y2_ref, scale_ref, shift_ref,
                   w2h_ref, b2h_ref, w2w_ref, b2w_ref,
                   out_ref, padh_ref, padw_ref, *, dil):
    """BN(folded)+relu -> dilated conv3x1_2+relu -> dilated conv1x3_2
       -> InstanceNorm -> residual add -> relu."""
    x = x_ref[...]
    h, w, c = x.shape
    # BatchNorm (pre-folded per-channel scale/shift) + ReLU
    y3 = jnp.maximum(y2_ref[...] * scale_ref[...] + shift_ref[...], 0.0)
    # dilated 3x1 conv + ReLU
    y4 = jnp.maximum(
        _conv_along_h(y3, padh_ref, w2h_ref, b2h_ref[...], dil), 0.0)
    # dilated 1x3 conv
    y5 = _conv_along_w(y4, padw_ref, w2w_ref, b2w_ref[...], dil)
    # InstanceNorm2d (per sample/channel over HxW, biased var, no affine),
    # one-pass stats (sum + sum of squares)
    y5f = y5.reshape(h * w, c)
    m = jnp.mean(y5f, axis=0, keepdims=True)
    v = jnp.maximum(jnp.mean(y5f * y5f, axis=0, keepdims=True) - m * m, 0.0)
    y6 = ((y5f - m) * jax.lax.rsqrt(v + EPS)).reshape(h, w, c)
    # residual + ReLU, single lane-dense full-tile store
    out_ref[...] = jnp.maximum(y6 + x, 0.0)
    # TODO(synk): Dropout2d with dropprob > 0 (training-mode channel masking)
    # is not modeled; the example uses dropprob=0 so PyTorch skips it too.


def _w_to_mat(wgt):
    """PyTorch (Cout, Cin, 3, 1) or (Cout, Cin, 1, 3) -> (3, Cin, Cout)."""
    if wgt.shape[2] == 3:
        return jnp.transpose(wgt[:, :, :, 0], (2, 1, 0)).astype(jnp.float32)
    return jnp.transpose(wgt[:, :, 0, :], (2, 1, 0)).astype(jnp.float32)


@functools.partial(jax.jit, static_argnames=("dilated",))
def non_bottleneck_1d_inst_forward(x_nchw, w1h, b1h, w1w, b1w, gamma, beta,
                                   w2h, b2h, w2w, b2w, *, dilated):
    n, c, h, w = x_nchw.shape
    dil = int(dilated)
    x = jnp.transpose(x_nchw, (0, 2, 3, 1)).astype(jnp.float32)  # NHWC

    w1h_m, w1w_m = _w_to_mat(w1h), _w_to_mat(w1w)
    w2h_m, w2w_m = _w_to_mat(w2h), _w_to_mat(w2w)
    b1h_m = b1h.reshape(1, c).astype(jnp.float32)
    b1w_m = b1w.reshape(1, c).astype(jnp.float32)
    b2h_m = b2h.reshape(1, c).astype(jnp.float32)
    b2w_m = b2w.reshape(1, c).astype(jnp.float32)

    map_bytes = h * w * c * 4
    vmem_limit = int(min(64 * 2**20, max(16 * 2**20, 16 * map_bytes)))
    cp = pltpu.CompilerParams(dimension_semantics=("parallel",),
                              vmem_limit_bytes=vmem_limit)

    map_spec = pl.BlockSpec((None, h, w, c), lambda i: (i, 0, 0, 0))
    w_spec = pl.BlockSpec((3, c, c), lambda i: (0, 0, 0))
    b_spec = pl.BlockSpec((1, c), lambda i: (0, 0))
    stats_spec = pl.BlockSpec((None, 2, c), lambda i: (i, 0, 0))

    # ---- stage 1: conv3x1_1 -> relu -> conv1x3_1 (+ BN partial stats) ----
    y2, stats = pl.pallas_call(
        _stage1_kernel,
        out_shape=(jax.ShapeDtypeStruct((n, h, w, c), jnp.float32),
                   jax.ShapeDtypeStruct((n, 2, c), jnp.float32)),
        grid_spec=pltpu.PrefetchScalarGridSpec(
            num_scalar_prefetch=0,
            grid=(n,),
            in_specs=[map_spec, w_spec, b_spec, w_spec, b_spec],
            out_specs=[map_spec, stats_spec],
            scratch_shapes=[pltpu.VMEM((h + 2, w, c), jnp.float32),
                            pltpu.VMEM((h, w + 2, c), jnp.float32)]),
        compiler_params=cp,
    )(x, w1h_m, b1h_m, w1w_m, b1w_m)

    # ---- fold global training-mode BN stats (biased var) into scale/shift ----
    tot = jnp.sum(stats, axis=0)                  # (2, C)
    cnt = jnp.float32(n * h * w)
    mean = tot[0] / cnt
    var = jnp.maximum(tot[1] / cnt - mean * mean, 0.0)
    scale = gamma.astype(jnp.float32) * jax.lax.rsqrt(var + EPS)
    shift = beta.astype(jnp.float32) - mean * scale
    scale = scale.reshape(1, c)
    shift = shift.reshape(1, c)

    # ---- stage 2: BN+relu -> dilated convs -> InstanceNorm -> residual ----
    out = pl.pallas_call(
        functools.partial(_stage2_kernel, dil=dil),
        out_shape=jax.ShapeDtypeStruct((n, h, w, c), jnp.float32),
        grid_spec=pltpu.PrefetchScalarGridSpec(
            num_scalar_prefetch=0,
            grid=(n,),
            in_specs=[map_spec, map_spec, b_spec, b_spec,
                      w_spec, b_spec, w_spec, b_spec],
            out_specs=map_spec,
            scratch_shapes=[pltpu.VMEM((h + 2 * dil, w, c), jnp.float32),
                            pltpu.VMEM((h, w + 2 * dil, c), jnp.float32)]),
        compiler_params=cp,
    )(x, y2, scale, shift, w2h_m, b2h_m, w2w_m, b2w_m)

    return jnp.transpose(out, (0, 3, 1, 2))  # back to NCHW


def _reference(x, w1h, b1h, w1w, b1w, gamma, beta, w2h, b2h, w2w, b2w, dil):
    """Pure-JAX reference of the PyTorch forward (NCHW, train-mode BN)."""
    def conv(y, wgt, bias, pad, dilation):
        r = jax.lax.conv_general_dilated(
            y, wgt, window_strides=(1, 1), padding=pad, rhs_dilation=dilation,
            dimension_numbers=("NCHW", "OIHW", "NCHW"))
        return r + bias[None, :, None, None]

    y = jax.nn.relu(conv(x, w1h, b1h, ((1, 1), (0, 0)), (1, 1)))
    y = conv(y, w1w, b1w, ((0, 0), (1, 1)), (1, 1))
    mean = jnp.mean(y, axis=(0, 2, 3), keepdims=True)
    var = jnp.mean((y - mean) ** 2, axis=(0, 2, 3), keepdims=True)
    y = (y - mean) / jnp.sqrt(var + EPS)
    y = y * gamma[None, :, None, None] + beta[None, :, None, None]
    y = jax.nn.relu(y)
    y = jax.nn.relu(conv(y, w2h, b2h, ((dil, dil), (0, 0)), (dil, 1)))
    y = conv(y, w2w, b2w, ((0, 0), (dil, dil)), (1, dil))
    m = jnp.mean(y, axis=(2, 3), keepdims=True)
    v = jnp.mean((y - m) ** 2, axis=(2, 3), keepdims=True)
    y = (y - m) / jnp.sqrt(v + EPS)
    return jax.nn.relu(y + x)


if __name__ == "__main__":
    chann, dilated, dropprob = 8, 2, 0.0
    n, h, w = 2, 16, 16

    key = jax.random.PRNGKey(0)
    ks = jax.random.split(key, 11)
    x = jax.random.normal(ks[0], (n, chann, h, w), jnp.float32)
    w1h = 0.1 * jax.random.normal(ks[1], (chann, chann, 3, 1), jnp.float32)
    b1h = 0.1 * jax.random.normal(ks[2], (chann,), jnp.float32)
    w1w = 0.1 * jax.random.normal(ks[3], (chann, chann, 1, 3), jnp.float32)
    b1w = 0.1 * jax.random.normal(ks[4], (chann,), jnp.float32)
    gamma = 1.0 + 0.1 * jax.random.normal(ks[5], (chann,), jnp.float32)
    beta = 0.1 * jax.random.normal(ks[6], (chann,), jnp.float32)
    w2h = 0.1 * jax.random.normal(ks[7], (chann, chann, 3, 1), jnp.float32)
    b2h = 0.1 * jax.random.normal(ks[8], (chann,), jnp.float32)
    w2w = 0.1 * jax.random.normal(ks[9], (chann, chann, 1, 3), jnp.float32)
    b2w = 0.1 * jax.random.normal(ks[10], (chann,), jnp.float32)

    out = non_bottleneck_1d_inst_forward(
        x, w1h, b1h, w1w, b1w, gamma, beta, w2h, b2h, w2w, b2w,
        dilated=dilated)
    out = jax.block_until_ready(out)

    ref = jax.block_until_ready(
        _reference(x, w1h, b1h, w1w, b1w, gamma, beta, w2h, b2h, w2w, b2w,
                   dilated))
    np.testing.assert_allclose(np.asarray(out), np.asarray(ref),
                               rtol=1e-3, atol=1e-3)

    # TODO(synk): training-mode BatchNorm also updates running stats as a side
    # effect; that state mutation is not modeled (it does not affect output).
    print("KERNEL_OK")
</pallas_src>

<mosaic_0001>
module attributes {stable_mosaic.version = 11 : i64} {
  func.func @_stage1_kernel(%arg0: i32, %arg1: memref<1x16x16x8xf32, #tpu.memory_space<vmem>>, %arg2: memref<3x8x8xf32, #tpu.memory_space<vmem>>, %arg3: memref<1x8xf32, #tpu.memory_space<vmem>>, %arg4: memref<3x8x8xf32, #tpu.memory_space<vmem>>, %arg5: memref<1x8xf32, #tpu.memory_space<vmem>>, %arg6: memref<1x16x16x8xf32, #tpu.memory_space<vmem>>, %arg7: memref<1x2x8xf32, #tpu.memory_space<vmem>>, %arg8: memref<18x16x8xf32, #tpu.memory_space<vmem>>, %arg9: memref<16x18x8xf32, #tpu.memory_space<vmem>>) attributes {dimension_semantics = [#tpu.dimension_semantics<parallel>], iteration_bounds = array<i64: 2>, scalar_prefetch = 0 : i64, scratch_operands = 2 : i64, tpu.core_type = #tpu.core_type<tc>, window_params = [{transform_indices = @transform_0, window_bounds = array<i64: 1, 16, 16, 8>}, {pipeline_mode = #tpu.pipeline_mode<synchronous>, transform_indices = @transform_1, window_bounds = array<i64: 3, 8, 8>}, {pipeline_mode = #tpu.pipeline_mode<synchronous>, transform_indices = @transform_2, window_bounds = array<i64: 1, 8>}, {pipeline_mode = #tpu.pipeline_mode<synchronous>, transform_indices = @transform_3, window_bounds = array<i64: 3, 8, 8>}, {pipeline_mode = #tpu.pipeline_mode<synchronous>, transform_indices = @transform_4, window_bounds = array<i64: 1, 8>}, {transform_indices = @transform_5, window_bounds = array<i64: 1, 16, 16, 8>}, {transform_indices = @transform_6, window_bounds = array<i64: 1, 2, 8>}]} {
    %c0 = arith.constant 0 : index
    %c0_0 = arith.constant 0 : index
    %c0_1 = arith.constant 0 : index
    %c0_2 = arith.constant 0 : index
    %0 = vector.load %arg1[%c0, %c0_0, %c0_1, %c0_2] : memref<1x16x16x8xf32, #tpu.memory_space<vmem>>, vector<1x16x16x8xf32>
    %1 = vector.shape_cast %0 : vector<1x16x16x8xf32> to vector<16x16x8xf32>
    %c0_3 = arith.constant 0 : index
    %c0_4 = arith.constant 0 : index
    %2 = vector.load %arg3[%c0_3, %c0_4] : memref<1x8xf32, #tpu.memory_space<vmem>>, vector<1x8xf32>
    %cst = arith.constant 0.000000e+00 : f32
    %3 = vector.broadcast %cst : f32 to vector<1x16x8xf32>
    %c0_5 = arith.constant 0 : index
    %c0_6 = arith.constant 0 : index
    %c0_7 = arith.constant 0 : index
    %4 = vector.load %arg8[%c0_5, %c0_6, %c0_7] : memref<18x16x8xf32, #tpu.memory_space<vmem>>, vector<1x16x8xf32>
    tpu.vector_store %arg8[%c0_5, %c0_6, %c0_7], %3 {strides = array<i32>} : memref<18x16x8xf32, #tpu.memory_space<vmem>>, vector<1x16x8xf32>,
    %cst_8 = arith.constant 0.000000e+00 : f32
    %5 = vector.broadcast %cst_8 : f32 to vector<1x16x8xf32>
    %c17 = arith.constant 17 : index
    %c0_9 = arith.constant 0 : index
    %c0_10 = arith.constant 0 : index
    %6 = vector.load %arg8[%c17, %c0_9, %c0_10] : memref<18x16x8xf32, #tpu.memory_space<vmem>>, vector<1x16x8xf32>
    tpu.vector_store %arg8[%c17, %c0_9, %c0_10], %5 {strides = array<i32>} : memref<18x16x8xf32, #tpu.memory_space<vmem>>, vector<1x16x8xf32>,
    %c1 = arith.constant 1 : index
    %c0_11 = arith.constant 0 : index
    %c0_12 = arith.constant 0 : index
    %7 = vector.load %arg8[%c1, %c0_11, %c0_12] : memref<18x16x8xf32, #tpu.memory_space<vmem>>, vector<16x16x8xf32>
    tpu.vector_store %arg8[%c1, %c0_11, %c0_12], %1 {strides = array<i32>} : memref<18x16x8xf32, #tpu.memory_space<vmem>>, vector<16x16x8xf32>,
    %cst_13 = arith.constant 0.000000e+00 : f32
    %8 = vector.broadcast %cst_13 : f32 to vector<256x8xf32>
    %c0_14 = arith.constant 0 : index
    %c0_15 = arith.constant 0 : index
    %c0_16 = arith.constant 0 : index
    %9 = vector.load %arg8[%c0_14, %c0_15, %c0_16] : memref<18x16x8xf32, #tpu.memory_space<vmem>>, vector<16x16x8xf32>
    %10 = vector.shape_cast %9 : vector<16x16x8xf32> to vector<256x8xf32>
    %c0_17 = arith.constant 0 : index
    %c0_18 = arith.constant 0 : index
    %c0_19 = arith.constant 0 : index
    %11 = vector.load %arg2[%c0_17, %c0_18, %c0_19] : memref<3x8x8xf32, #tpu.memory_space<vmem>>, vector<1x8x8xf32>
    %12 = vector.shape_cast %11 : vector<1x8x8xf32> to vector<8x8xf32>
    %cst_20 = arith.constant dense<0.000000e+00> : vector<256x8xf32>
    %13 = tpu.matmul %10, %12, %cst_20 {dimension_numbers = #tpu.dot_dimension_numbers<[1], [0], [0], [1], [0, 0, 1, 1], [], []>} : vector<256x8xf32>, vector<8x8xf32>, vector<256x8xf32> -> vector<256x8xf32>
    %14 = arith.addf %8, %13 : vector<256x8xf32>
    %c1_21 = arith.constant 1 : index
    %c0_22 = arith.constant 0 : index
    %c0_23 = arith.constant 0 : index
    %15 = vector.load %arg8[%c1_21, %c0_22, %c0_23] : memref<18x16x8xf32, #tpu.memory_space<vmem>>, vector<16x16x8xf32>
    %16 = vector.shape_cast %15 : vector<16x16x8xf32> to vector<256x8xf32>
    %c1_24 = arith.constant 1 : index
    %c0_25 = arith.constant 0 : index
    %c0_26 = arith.constant 0 : index
    %17 = vector.load %arg2[%c1_24, %c0_25, %c0_26] : memref<3x8x8xf32, #tpu.memory_space<vmem>>, vector<1x8x8xf32>
    %18 = vector.shape_cast %17 : vector<1x8x8xf32> to vector<8x8xf32>
    %cst_27 = arith.constant dense<0.000000e+00> : vector<256x8xf32>
    %19 = tpu.matmul %16, %18, %cst_27 {dimension_numbers = #tpu.dot_dimension_numbers<[1], [0], [0], [1], [0, 0, 1, 1], [], []>} : vector<256x8xf32>, vector<8x8xf32>, vector<256x8xf32> -> vector<256x8xf32>
    %20 = arith.addf %14, %19 : vector<256x8xf32>
    %c2 = arith.constant 2 : index
    %c0_28 = arith.constant 0 : index
    %c0_29 = arith.constant 0 : index
    %21 = vector.load %arg8[%c2, %c0_28, %c0_29] : memref<18x16x8xf32, #tpu.memory_space<vmem>>, vector<16x16x8xf32>
    %22 = vector.shape_cast %21 : vector<16x16x8xf32> to vector<256x8xf32>
    %c2_30 = arith.constant 2 : index
    %c0_31 = arith.constant 0 : index
    %c0_32 = arith.constant 0 : index
    %23 = vector.load %arg2[%c2_30, %c0_31, %c0_32] : memref<3x8x8xf32, #tpu.memory_space<vmem>>, vector<1x8x8xf32>
    %24 = vector.shape_cast %23 : vector<1x8x8xf32> to vector<8x8xf32>
    %cst_33 = arith.constant dense<0.000000e+00> : vector<256x8xf32>
    %25 = tpu.matmul %22, %24, %cst_33 {dimension_numbers = #tpu.dot_dimension_numbers<[1], [0], [0], [1], [0, 0, 1, 1], [], []>} : vector<256x8xf32>, vector<8x8xf32>, vector<256x8xf32> -> vector<256x8xf32>
    %26 = arith.addf %20, %25 : vector<256x8xf32>
    %27 = vector.broadcast %2 : vector<1x8xf32> to vector<256x8xf32>
    %28 = arith.addf %26, %27 : vector<256x8xf32>
    %29 = vector.shape_cast %28 : vector<256x8xf32> to vector<16x16x8xf32>
    %cst_34 = arith.constant 0.000000e+00 : f32
    %30 = vector.broadcast %cst_34 : f32 to vector<16x16x8xf32>
    %31 = arith.maximumf %29, %30 : vector<16x16x8xf32>
    %c0_35 = arith.constant 0 : index
    %c0_36 = arith.constant 0 : index
    %32 = vector.load %arg5[%c0_35, %c0_36] : memref<1x8xf32, #tpu.memory_space<vmem>>, vector<1x8xf32>
    %cst_37 = arith.constant 0.000000e+00 : f32
    %33 = vector.broadcast %cst_37 : f32 to vector<16x1x8xf32>
    %c0_38 = arith.constant 0 : index
    %c0_39 = arith.constant 0 : index
    %c0_40 = arith.constant 0 : index
    %34 = vector.load %arg9[%c0_38, %c0_39, %c0_40] : memref<16x18x8xf32, #tpu.memory_space<vmem>>, vector<16x1x8xf32>
    tpu.vector_store %arg9[%c0_38, %c0_39, %c0_40], %33 {strides = array<i32>} : memref<16x18x8xf32, #tpu.memory_space<vmem>>, vector<16x1x8xf32>,
    %cst_41 = arith.constant 0.000000e+00 : f32
    %35 = vector.broadcast %cst_41 : f32 to vector<16x1x8xf32>
    %c0_42 = arith.constant 0 : index
    %c17_43 = arith.constant 17 : index
    %c0_44 = arith.constant 0 : index
    %36 = vector.load %arg9[%c0_42, %c17_43, %c0_44] : memref<16x18x8xf32, #tpu.memory_space<vmem>>, vector<16x1x8xf32>
    tpu.vector_store %arg9[%c0_42, %c17_43, %c0_44], %35 {strides = array<i32>} : memref<16x18x8xf32, #tpu.memory_space<vmem>>, vector<16x1x8xf32>,
    %c0_45 = arith.constant 0 : index
    %c1_46 = arith.constant 1 : index
    %c0_47 = arith.constant 0 : index
    %37 = vector.load %arg9[%c0_45, %c1_46, %c0_47] : memref<16x18x8xf32, #tpu.memory_space<vmem>>, vector<16x16x8xf32>
    tpu.vector_store %arg9[%c0_45, %c1_46, %c0_47], %31 {strides = array<i32>} : memref<16x18x8xf32, #tpu.memory_space<vmem>>, vector<16x16x8xf32>,
    %cst_48 = arith.constant 0.000000e+00 : f32
    %38 = vector.broadcast %cst_48 : f32 to vector<256x8xf32>
    %c0_49 = arith.constant 0 : index
    %c0_50 = arith.constant 0 : index
    %c0_51 = arith.constant 0 : index
    %39 = vector.load %arg9[%c0_49, %c0_50, %c0_51] : memref<16x18x8xf32, #tpu.memory_space<vmem>>, vector<16x16x8xf32>
    %40 = vector.shape_cast %39 : vector<16x16x8xf32> to vector<256x8xf32>
    %c0_52 = arith.constant 0 : index
    %c0_53 = arith.constant 0 : index
    %c0_54 = arith.constant 0 : index
    %41 = vector.load %arg4[%c0_52, %c0_53, %c0_54] : memref<3x8x8xf32, #tpu.memory_space<vmem>>, vector<1x8x8xf32>
    %42 = vector.shape_cast %41 : vector<1x8x8xf32> to vector<8x8xf32>
    %cst_55 = arith.constant dense<0.000000e+00> : vector<256x8xf32>
    %43 = tpu.matmul %40, %42, %cst_55 {dimension_numbers = #tpu.dot_dimension_numbers<[1], [0], [0], [1], [0, 0, 1, 1], [], []>} : vector<256x8xf32>, vector<8x8xf32>, vector<256x8xf32> -> vector<256x8xf32>
    %44 = arith.addf %38, %43 : vector<256x8xf32>
    %c0_56 = arith.constant 0 : index
    %c1_57 = arith.constant 1 : index
    %c0_58 = arith.constant 0 : index
    %45 = vector.load %arg9[%c0_56, %c1_57, %c0_58] : memref<16x18x8xf32, #tpu.memory_space<vmem>>, vector<16x16x8xf32>
    %46 = vector.shape_cast %45 : vector<16x16x8xf32> to vector<256x8xf32>
    %c1_59 = arith.constant 1 : index
    %c0_60 = arith.constant 0 : index
    %c0_61 = arith.constant 0 : index
    %47 = vector.load %arg4[%c1_59, %c0_60, %c0_61] : memref<3x8x8xf32, #tpu.memory_space<vmem>>, vector<1x8x8xf32>
    %48 = vector.shape_cast %47 : vector<1x8x8xf32> to vector<8x8xf32>
    %cst_62 = arith.constant dense<0.000000e+00> : vector<256x8xf32>
    %49 = tpu.matmul %46, %48, %cst_62 {dimension_numbers = #tpu.dot_dimension_numbers<[1], [0], [0], [1], [0, 0, 1, 1], [], []>} : vector<256x8xf32>, vector<8x8xf32>, vector<256x8xf32> -> vector<256x8xf32>
    %50 = arith.addf %44, %49 : vector<256x8xf32>
    %c0_63 = arith.constant 0 : index
    %c2_64 = arith.constant 2 : index
    %c0_65 = arith.constant 0 : index
    %51 = vector.load %arg9[%c0_63, %c2_64, %c0_65] : memref<16x18x8xf32, #tpu.memory_space<vmem>>, vector<16x16x8xf32>
    %52 = vector.shape_cast %51 : vector<16x16x8xf32> to vector<256x8xf32>
    %c2_66 = arith.constant 2 : index
    %c0_67 = arith.constant 0 : index
    %c0_68 = arith.constant 0 : index
    %53 = vector.load %arg4[%c2_66, %c0_67, %c0_68] : memref<3x8x8xf32, #tpu.memory_space<vmem>>, vector<1x8x8xf32>
    %54 = vector.shape_cast %53 : vector<1x8x8xf32> to vector<8x8xf32>
    %cst_69 = arith.constant dense<0.000000e+00> : vector<256x8xf32>
    %55 = tpu.matmul %52, %54, %cst_69 {dimension_numbers = #tpu.dot_dimension_numbers<[1], [0], [0], [1], [0, 0, 1, 1], [], []>} : vector<256x8xf32>, vector<8x8xf32>, vector<256x8xf32> -> vector<256x8xf32>
    %56 = arith.addf %50, %55 : vector<256x8xf32>
    %57 = vector.broadcast %32 : vector<1x8xf32> to vector<256x8xf32>
    %58 = arith.addf %56, %57 : vector<256x8xf32>
    %59 = vector.shape_cast %58 : vector<256x8xf32> to vector<16x16x8xf32>
    %c0_70 = arith.constant 0 : index
    %c0_71 = arith.constant 0 : index
    %c0_72 = arith.constant 0 : index
    %c0_73 = arith.constant 0 : index
    %60 = vector.load %arg6[%c0_70, %c0_71, %c0_72, %c0_73] : memref<1x16x16x8xf32, #tpu.memory_space<vmem>>, vector<1x16x16x8xf32>
    %61 = vector.shape_cast %60 : vector<1x16x16x8xf32> to vector<16x16x8xf32>
    %62 = vector.shape_cast %59 : vector<16x16x8xf32> to vector<1x16x16x8xf32>
    tpu.vector_store %arg6[%c0_70, %c0_71, %c0_72, %c0_73], %62 {strides = array<i32>} : memref<1x16x16x8xf32, #tpu.memory_space<vmem>>, vector<1x16x16x8xf32>,
    %63 = vector.shape_cast %59 : vector<16x16x8xf32> to vector<256x8xf32>
    %cst_74 = arith.constant dense<0.000000e+00> : vector<8xf32>
    %64 = vector.multi_reduction <add>, %63, %cst_74 [0] : vector<256x8xf32> to vector<8xf32>
    %65 = vector.shape_cast %64 : vector<8xf32> to vector<1x8xf32>
    %c0_75 = arith.constant 0 : index
    %c0_76 = arith.constant 0 : index
    %c0_77 = arith.constant 0 : index
    %66 = vector.load %arg7[%c0_75, %c0_76, %c0_77] : memref<1x2x8xf32, #tpu.memory_space<vmem>>, vector<1x1x8xf32>
    %67 = vector.shape_cast %66 : vector<1x1x8xf32> to vector<1x8xf32>
    %68 = vector.shape_cast %65 : vector<1x8xf32> to vector<1x1x8xf32>
    tpu.vector_store %arg7[%c0_75, %c0_76, %c0_77], %68 {strides = array<i32>} : memref<1x2x8xf32, #tpu.memory_space<vmem>>, vector<1x1x8xf32>,
    %69 = arith.mulf %63, %63 : vector<256x8xf32>
    %cst_78 = arith.constant dense<0.000000e+00> : vector<8xf32>
    %70 = vector.multi_reduction <add>, %69, %cst_78 [0] : vector<256x8xf32> to vector<8xf32>
    %71 = vector.shape_cast %70 : vector<8xf32> to vector<1x8xf32>
    %c0_79 = arith.constant 0 : index
    %c1_80 = arith.constant 1 : index
    %c0_81 = arith.constant 0 : index
    %72 = vector.load %arg7[%c0_79, %c1_80, %c0_81] : memref<1x2x8xf32, #tpu.memory_space<vmem>>, vector<1x1x8xf32>
    %73 = vector.shape_cast %72 : vector<1x1x8xf32> to vector<1x8xf32>
    %74 = vector.shape_cast %71 : vector<1x8xf32> to vector<1x1x8xf32>
    tpu.vector_store %arg7[%c0_79, %c1_80, %c0_81], %74 {strides = array<i32>} : memref<1x2x8xf32, #tpu.memory_space<vmem>>, vector<1x1x8xf32>,
    return
  }
  func.func @transform_0(%arg0: i32) -> (i32, i32, i32, i32) {
    %c0_i32 = arith.constant 0 : i32
    %c0_i32_0 = arith.constant 0 : i32
    %c0_i32_1 = arith.constant 0 : i32
    %c0_i32_2 = arith.constant 0 : i32
    return %arg0, %c0_i32, %c0_i32_0, %c0_i32_1 : i32, i32, i32, i32
  }
  func.func @transform_1(%arg0: i32) -> (i32, i32, i32) {
    %c0_i32 = arith.constant 0 : i32
    %c0_i32_0 = arith.constant 0 : i32
    %c0_i32_1 = arith.constant 0 : i32
    %c0_i32_2 = arith.constant 0 : i32
    return %c0_i32, %c0_i32_0, %c0_i32_1 : i32, i32, i32
  }
  func.func @transform_2(%arg0: i32) -> (i32, i32) {
    %c0_i32 = arith.constant 0 : i32
    %c0_i32_0 = arith.constant 0 : i32
    %c0_i32_1 = arith.constant 0 : i32
    return %c0_i32, %c0_i32_0 : i32, i32
  }
  func.func @transform_3(%arg0: i32) -> (i32, i32, i32) {
    %c0_i32 = arith.constant 0 : i32
    %c0_i32_0 = arith.constant 0 : i32
    %c0_i32_1 = arith.constant 0 : i32
    %c0_i32_2 = arith.constant 0 : i32
    return %c0_i32, %c0_i32_0, %c0_i32_1 : i32, i32, i32
  }
  func.func @transform_4(%arg0: i32) -> (i32, i32) {
    %c0_i32 = arith.constant 0 : i32
    %c0_i32_0 = arith.constant 0 : i32
    %c0_i32_1 = arith.constant 0 : i32
    return %c0_i32, %c0_i32_0 : i32, i32
  }
  func.func @transform_5(%arg0: i32) -> (i32, i32, i32, i32) {
    %c0_i32 = arith.constant 0 : i32
    %c0_i32_0 = arith.constant 0 : i32
    %c0_i32_1 = arith.constant 0 : i32
    %c0_i32_2 = arith.constant 0 : i32
    return %arg0, %c0_i32, %c0_i32_0, %c0_i32_1 : i32, i32, i32, i32
  }
  func.func @transform_6(%arg0: i32) -> (i32, i32, i32) {
    %c0_i32 = arith.constant 0 : i32
    %c0_i32_0 = arith.constant 0 : i32
    %c0_i32_1 = arith.constant 0 : i32
    return %arg0, %c0_i32, %c0_i32_0 : i32, i32, i32
  }
}

module attributes {stable_mosaic.version = 11 : i64} {
  func.func @_stage2_kernel(%arg0: i32, %arg1: memref<1x16x16x8xf32, #tpu.memory_space<vmem>>, %arg2: memref<1x16x16x8xf32, #tpu.memory_space<vmem>>, %arg3: memref<1x8xf32, #tpu.memory_space<vmem>>, %arg4: memref<1x8xf32, #tpu.memory_space<vmem>>, %arg5: memref<3x8x8xf32, #tpu.memory_space<vmem>>, %arg6: memref<1x8xf32, #tpu.memory_space<vmem>>, %arg7: memref<3x8x8xf32, #tpu.memory_space<vmem>>, %arg8: memref<1x8xf32, #tpu.memory_space<vmem>>, %arg9: memref<1x16x16x8xf32, #tpu.memory_space<vmem>>, %arg10: memref<20x16x8xf32, #tpu.memory_space<vmem>>, %arg11: memref<16x20x8xf32, #tpu.memory_space<vmem>>) attributes {dimension_semantics = [#tpu.dimension_semantics<parallel>], iteration_bounds = array<i64: 2>, scalar_prefetch = 0 : i64, scratch_operands = 2 : i64, tpu.core_type = #tpu.core_type<tc>, window_params = [{transform_indices = @transform_0, window_bounds = array<i64: 1, 16, 16, 8>}, {transform_indices = @transform_1, window_bounds = array<i64: 1, 16, 16, 8>}, {pipeline_mode = #tpu.pipeline_mode<synchronous>, transform_indices = @transform_2, window_bounds = array<i64: 1, 8>}, {pipeline_mode = #tpu.pipeline_mode<synchronous>, transform_indices = @transform_3, window_bounds = array<i64: 1, 8>}, {pipeline_mode = #tpu.pipeline_mode<synchronous>, transform_indices = @transform_4, window_bounds = array<i64: 3, 8, 8>}, {pipeline_mode = #tpu.pipeline_mode<synchronous>, transform_indices = @transform_5, window_bounds = array<i64: 1, 8>}, {pipeline_mode = #tpu.pipeline_mode<synchronous>, transform_indices = @transform_6, window_bounds = array<i64: 3, 8, 8>}, {pipeline_mode = #tpu.pipeline_mode<synchronous>, transform_indices = @transform_7, window_bounds = array<i64: 1, 8>}, {transform_indices = @transform_8, window_bounds = array<i64: 1, 16, 16, 8>}]} {
    %c0 = arith.constant 0 : index
    %c0_0 = arith.constant 0 : index
    %c0_1 = arith.constant 0 : index
    %c0_2 = arith.constant 0 : index
    %0 = vector.load %arg1[%c0, %c0_0, %c0_1, %c0_2] : memref<1x16x16x8xf32, #tpu.memory_space<vmem>>, vector<1x16x16x8xf32>
    %1 = vector.shape_cast %0 : vector<1x16x16x8xf32> to vector<16x16x8xf32>
    %c0_3 = arith.constant 0 : index
    %c0_4 = arith.constant 0 : index
    %c0_5 = arith.constant 0 : index
    %c0_6 = arith.constant 0 : index
    %2 = vector.load %arg2[%c0_3, %c0_4, %c0_5, %c0_6] : memref<1x16x16x8xf32, #tpu.memory_space<vmem>>, vector<1x16x16x8xf32>
    %3 = vector.shape_cast %2 : vector<1x16x16x8xf32> to vector<16x16x8xf32>
    %c0_7 = arith.constant 0 : index
    %c0_8 = arith.constant 0 : index
    %4 = vector.load %arg3[%c0_7, %c0_8] : memref<1x8xf32, #tpu.memory_space<vmem>>, vector<1x8xf32>
    %5 = vector.shape_cast %4 : vector<1x8xf32> to vector<1x1x8xf32>
    %6 = vector.broadcast %5 : vector<1x1x8xf32> to vector<16x16x8xf32>
    %7 = arith.mulf %3, %6 : vector<16x16x8xf32>
    %c0_9 = arith.constant 0 : index
    %c0_10 = arith.constant 0 : index
    %8 = vector.load %arg4[%c0_9, %c0_10] : memref<1x8xf32, #tpu.memory_space<vmem>>, vector<1x8xf32>
    %9 = vector.shape_cast %8 : vector<1x8xf32> to vector<1x1x8xf32>
    %10 = vector.broadcast %9 : vector<1x1x8xf32> to vector<16x16x8xf32>
    %11 = arith.addf %7, %10 : vector<16x16x8xf32>
    %cst = arith.constant 0.000000e+00 : f32
    %12 = vector.broadcast %cst : f32 to vector<16x16x8xf32>
    %13 = arith.maximumf %11, %12 : vector<16x16x8xf32>
    %c0_11 = arith.constant 0 : index
    %c0_12 = arith.constant 0 : index
    %14 = vector.load %arg6[%c0_11, %c0_12] : memref<1x8xf32, #tpu.memory_space<vmem>>, vector<1x8xf32>
    %cst_13 = arith.constant 0.000000e+00 : f32
    %15 = vector.broadcast %cst_13 : f32 to vector<2x16x8xf32>
    %c0_14 = arith.constant 0 : index
    %c0_15 = arith.constant 0 : index
    %c0_16 = arith.constant 0 : index
    %16 = vector.load %arg10[%c0_14, %c0_15, %c0_16] : memref<20x16x8xf32, #tpu.memory_space<vmem>>, vector<2x16x8xf32>
    tpu.vector_store %arg10[%c0_14, %c0_15, %c0_16], %15 {strides = array<i32>} : memref<20x16x8xf32, #tpu.memory_space<vmem>>, vector<2x16x8xf32>,
    %cst_17 = arith.constant 0.000000e+00 : f32
    %17 = vector.broadcast %cst_17 : f32 to vector<2x16x8xf32>
    %c18 = arith.constant 18 : index
    %c0_18 = arith.constant 0 : index
    %c0_19 = arith.constant 0 : index
    %18 = vector.load %arg10[%c18, %c0_18, %c0_19] : memref<20x16x8xf32, #tpu.memory_space<vmem>>, vector<2x16x8xf32>
    tpu.vector_store %arg10[%c18, %c0_18, %c0_19], %17 {strides = array<i32>} : memref<20x16x8xf32, #tpu.memory_space<vmem>>, vector<2x16x8xf32>,
    %c2 = arith.constant 2 : index
    %c0_20 = arith.constant 0 : index
    %c0_21 = arith.constant 0 : index
    %19 = vector.load %arg10[%c2, %c0_20, %c0_21] : memref<20x16x8xf32, #tpu.memory_space<vmem>>, vector<16x16x8xf32>
    tpu.vector_store %arg10[%c2, %c0_20, %c0_21], %13 {strides = array<i32>} : memref<20x16x8xf32, #tpu.memory_space<vmem>>, vector<16x16x8xf32>,
    %cst_22 = arith.constant 0.000000e+00 : f32
    %20 = vector.broadcast %cst_22 : f32 to vector<256x8xf32>
    %c0_23 = arith.constant 0 : index
    %c0_24 = arith.constant 0 : index
    %c0_25 = arith.constant 0 : index
    %21 = vector.load %arg10[%c0_23, %c0_24, %c0_25] : memref<20x16x8xf32, #tpu.memory_space<vmem>>, vector<16x16x8xf32>
    %22 = vector.shape_cast %21 : vector<16x16x8xf32> to vector<256x8xf32>
    %c0_26 = arith.constant 0 : index
    %c0_27 = arith.constant 0 : index
    %c0_28 = arith.constant 0 : index
    %23 = vector.load %arg5[%c0_26, %c0_27, %c0_28] : memref<3x8x8xf32, #tpu.memory_space<vmem>>, vector<1x8x8xf32>
    %24 = vector.shape_cast %23 : vector<1x8x8xf32> to vector<8x8xf32>
    %cst_29 = arith.constant dense<0.000000e+00> : vector<256x8xf32>
    %25 = tpu.matmul %22, %24, %cst_29 {dimension_numbers = #tpu.dot_dimension_numbers<[1], [0], [0], [1], [0, 0, 1, 1], [], []>} : vector<256x8xf32>, vector<8x8xf32>, vector<256x8xf32> -> vector<256x8xf32>
    %26 = arith.addf %20, %25 : vector<256x8xf32>
    %c2_30 = arith.constant 2 : index
    %c0_31 = arith.constant 0 : index
    %c0_32 = arith.constant 0 : index
    %27 = vector.load %arg10[%c2_30, %c0_31, %c0_32] : memref<20x16x8xf32, #tpu.memory_space<vmem>>, vector<16x16x8xf32>
    %28 = vector.shape_cast %27 : vector<16x16x8xf32> to vector<256x8xf32>
    %c1 = arith.constant 1 : index
    %c0_33 = arith.constant 0 : index
    %c0_34 = arith.constant 0 : index
    %29 = vector.load %arg5[%c1, %c0_33, %c0_34] : memref<3x8x8xf32, #tpu.memory_space<vmem>>, vector<1x8x8xf32>
    %30 = vector.shape_cast %29 : vector<1x8x8xf32> to vector<8x8xf32>
    %cst_35 = arith.constant dense<0.000000e+00> : vector<256x8xf32>
    %31 = tpu.matmul %28, %30, %cst_35 {dimension_numbers = #tpu.dot_dimension_numbers<[1], [0], [0], [1], [0, 0, 1, 1], [], []>} : vector<256x8xf32>, vector<8x8xf32>, vector<256x8xf32> -> vector<256x8xf32>
    %32 = arith.addf %26, %31 : vector<256x8xf32>
    %c4 = arith.constant 4 : index
    %c0_36 = arith.constant 0 : index
    %c0_37 = arith.constant 0 : index
    %33 = vector.load %arg10[%c4, %c0_36, %c0_37] : memref<20x16x8xf32, #tpu.memory_space<vmem>>, vector<16x16x8xf32>
    %34 = vector.shape_cast %33 : vector<16x16x8xf32> to vector<256x8xf32>
    %c2_38 = arith.constant 2 : index
    %c0_39 = arith.constant 0 : index
    %c0_40 = arith.constant 0 : index
    %35 = vector.load %arg5[%c2_38, %c0_39, %c0_40] : memref<3x8x8xf32, #tpu.memory_space<vmem>>, vector<1x8x8xf32>
    %36 = vector.shape_cast %35 : vector<1x8x8xf32> to vector<8x8xf32>
    %cst_41 = arith.constant dense<0.000000e+00> : vector<256x8xf32>
    %37 = tpu.matmul %34, %36, %cst_41 {dimension_numbers = #tpu.dot_dimension_numbers<[1], [0], [0], [1], [0, 0, 1, 1], [], []>} : vector<256x8xf32>, vector<8x8xf32>, vector<256x8xf32> -> vector<256x8xf32>
    %38 = arith.addf %32, %37 : vector<256x8xf32>
    %39 = vector.broadcast %14 : vector<1x8xf32> to vector<256x8xf32>
    %40 = arith.addf %38, %39 : vector<256x8xf32>
    %41 = vector.shape_cast %40 : vector<256x8xf32> to vector<16x16x8xf32>
    %cst_42 = arith.constant 0.000000e+00 : f32
    %42 = vector.broadcast %cst_42 : f32 to vector<16x16x8xf32>
    %43 = arith.maximumf %41, %42 : vector<16x16x8xf32>
    %c0_43 = arith.constant 0 : index
    %c0_44 = arith.constant 0 : index
    %44 = vector.load %arg8[%c0_43, %c0_44] : memref<1x8xf32, #tpu.memory_space<vmem>>, vector<1x8xf32>
    %cst_45 = arith.constant 0.000000e+00 : f32
    %45 = vector.broadcast %cst_45 : f32 to vector<16x2x8xf32>
    %c0_46 = arith.constant 0 : index
    %c0_47 = arith.constant 0 : index
    %c0_48 = arith.constant 0 : index
    %46 = vector.load %arg11[%c0_46, %c0_47, %c0_48] : memref<16x20x8xf32, #tpu.memory_space<vmem>>, vector<16x2x8xf32>
    tpu.vector_store %arg11[%c0_46, %c0_47, %c0_48], %45 {strides = array<i32>} : memref<16x20x8xf32, #tpu.memory_space<vmem>>, vector<16x2x8xf32>,
    %cst_49 = arith.constant 0.000000e+00 : f32
    %47 = vector.broadcast %cst_49 : f32 to vector<16x2x8xf32>
    %c0_50 = arith.constant 0 : index
    %c18_51 = arith.constant 18 : index
    %c0_52 = arith.constant 0 : index
    %48 = vector.load %arg11[%c0_50, %c18_51, %c0_52] : memref<16x20x8xf32, #tpu.memory_space<vmem>>, vector<16x2x8xf32>
    tpu.vector_store %arg11[%c0_50, %c18_51, %c0_52], %47 {strides = array<i32>} : memref<16x20x8xf32, #tpu.memory_space<vmem>>, vector<16x2x8xf32>,
    %c0_53 = arith.constant 0 : index
    %c2_54 = arith.constant 2 : index
    %c0_55 = arith.constant 0 : index
    %49 = vector.load %arg11[%c0_53, %c2_54, %c0_55] : memref<16x20x8xf32, #tpu.memory_space<vmem>>, vector<16x16x8xf32>
    tpu.vector_store %arg11[%c0_53, %c2_54, %c0_55], %43 {strides = array<i32>} : memref<16x20x8xf32, #tpu.memory_space<vmem>>, vector<16x16x8xf32>,
    %cst_56 = arith.constant 0.000000e+00 : f32
    %50 = vector.broadcast %cst_56 : f32 to vector<256x8xf32>
    %c0_57 = arith.constant 0 : index
    %c0_58 = arith.constant 0 : index
    %c0_59 = arith.constant 0 : index
    %51 = vector.load %arg11[%c0_57, %c0_58, %c0_59] : memref<16x20x8xf32, #tpu.memory_space<vmem>>, vector<16x16x8xf32>
    %52 = vector.shape_cast %51 : vector<16x16x8xf32> to vector<256x8xf32>
    %c0_60 = arith.constant 0 : index
    %c0_61 = arith.constant 0 : index
    %c0_62 = arith.constant 0 : index
    %53 = vector.load %arg7[%c0_60, %c0_61, %c0_62] : memref<3x8x8xf32, #tpu.memory_space<vmem>>, vector<1x8x8xf32>
    %54 = vector.shape_cast %53 : vector<1x8x8xf32> to vector<8x8xf32>
    %cst_63 = arith.constant dense<0.000000e+00> : vector<256x8xf32>
    %55 = tpu.matmul %52, %54, %cst_63 {dimension_numbers = #tpu.dot_dimension_numbers<[1], [0], [0], [1], [0, 0, 1, 1], [], []>} : vector<256x8xf32>, vector<8x8xf32>, vector<256x8xf32> -> vector<256x8xf32>
    %56 = arith.addf %50, %55 : vector<256x8xf32>
    %c0_64 = arith.constant 0 : index
    %c2_65 = arith.constant 2 : index
    %c0_66 = arith.constant 0 : index
    %57 = vector.load %arg11[%c0_64, %c2_65, %c0_66] : memref<16x20x8xf32, #tpu.memory_space<vmem>>, vector<16x16x8xf32>
    %58 = vector.shape_cast %57 : vector<16x16x8xf32> to vector<256x8xf32>
    %c1_67 = arith.constant 1 : index
    %c0_68 = arith.constant 0 : index
    %c0_69 = arith.constant 0 : index
    %59 = vector.load %arg7[%c1_67, %c0_68, %c0_69] : memref<3x8x8xf32, #tpu.memory_space<vmem>>, vector<1x8x8xf32>
    %60 = vector.shape_cast %59 : vector<1x8x8xf32> to vector<8x8xf32>
    %cst_70 = arith.constant dense<0.000000e+00> : vector<256x8xf32>
    %61 = tpu.matmul %58, %60, %cst_70 {dimension_numbers = #tpu.dot_dimension_numbers<[1], [0], [0], [1], [0, 0, 1, 1], [], []>} : vector<256x8xf32>, vector<8x8xf32>, vector<256x8xf32> -> vector<256x8xf32>
    %62 = arith.addf %56, %61 : vector<256x8xf32>
    %c0_71 = arith.constant 0 : index
    %c4_72 = arith.constant 4 : index
    %c0_73 = arith.constant 0 : index
    %63 = vector.load %arg11[%c0_71, %c4_72, %c0_73] : memref<16x20x8xf32, #tpu.memory_space<vmem>>, vector<16x16x8xf32>
    %64 = vector.shape_cast %63 : vector<16x16x8xf32> to vector<256x8xf32>
    %c2_74 = arith.constant 2 : index
    %c0_75 = arith.constant 0 : index
    %c0_76 = arith.constant 0 : index
    %65 = vector.load %arg7[%c2_74, %c0_75, %c0_76] : memref<3x8x8xf32, #tpu.memory_space<vmem>>, vector<1x8x8xf32>
    %66 = vector.shape_cast %65 : vector<1x8x8xf32> to vector<8x8xf32>
    %cst_77 = arith.constant dense<0.000000e+00> : vector<256x8xf32>
    %67 = tpu.matmul %64, %66, %cst_77 {dimension_numbers = #tpu.dot_dimension_numbers<[1], [0], [0], [1], [0, 0, 1, 1], [], []>} : vector<256x8xf32>, vector<8x8xf32>, vector<256x8xf32> -> vector<256x8xf32>
    %68 = arith.addf %62, %67 : vector<256x8xf32>
    %69 = vector.broadcast %44 : vector<1x8xf32> to vector<256x8xf32>
    %70 = arith.addf %68, %69 : vector<256x8xf32>
    %71 = vector.shape_cast %70 : vector<256x8xf32> to vector<16x16x8xf32>
    %72 = vector.shape_cast %71 : vector<16x16x8xf32> to vector<256x8xf32>
    %cst_78 = arith.constant dense<0.000000e+00> : vector<8xf32>
    %73 = vector.multi_reduction <add>, %72, %cst_78 [0] : vector<256x8xf32> to vector<8xf32>
    %74 = vector.shape_cast %73 : vector<8xf32> to vector<1x8xf32>
    %cst_79 = arith.constant 2.560000e+02 : f32
    %75 = vector.broadcast %cst_79 : f32 to vector<1x8xf32>
    %76 = arith.divf %74, %75 : vector<1x8xf32>
    %77 = arith.mulf %72, %72 : vector<256x8xf32>
    %cst_80 = arith.constant dense<0.000000e+00> : vector<8xf32>
    %78 = vector.multi_reduction <add>, %77, %cst_80 [0] : vector<256x8xf32> to vector<8xf32>
    %79 = vector.shape_cast %78 : vector<8xf32> to vector<1x8xf32>
    %cst_81 = arith.constant 2.560000e+02 : f32
    %80 = vector.broadcast %cst_81 : f32 to vector<1x8xf32>
    %81 = arith.divf %79, %80 : vector<1x8xf32>
    %82 = arith.mulf %76, %76 : vector<1x8xf32>
    %83 = arith.subf %81, %82 : vector<1x8xf32>
    %cst_82 = arith.constant 0.000000e+00 : f32
    %84 = vector.broadcast %cst_82 : f32 to vector<1x8xf32>
    %85 = arith.maximumf %83, %84 : vector<1x8xf32>
    %86 = vector.broadcast %76 : vector<1x8xf32> to vector<256x8xf32>
    %87 = arith.subf %72, %86 : vector<256x8xf32>
    %cst_83 = arith.constant 1.000000e-03 : f32
    %88 = vector.broadcast %cst_83 : f32 to vector<1x8xf32>
    %89 = arith.addf %85, %88 : vector<1x8xf32>
    %90 = math.rsqrt %89 : vector<1x8xf32>
    %91 = vector.broadcast %90 : vector<1x8xf32> to vector<256x8xf32>
    %92 = arith.mulf %87, %91 : vector<256x8xf32>
    %93 = vector.shape_cast %92 : vector<256x8xf32> to vector<16x16x8xf32>
    %94 = arith.addf %93, %1 : vector<16x16x8xf32>
    %cst_84 = arith.constant 0.000000e+00 : f32
    %95 = vector.broadcast %cst_84 : f32 to vector<16x16x8xf32>
    %96 = arith.maximumf %94, %95 : vector<16x16x8xf32>
    %c0_85 = arith.constant 0 : index
    %c0_86 = arith.constant 0 : index
    %c0_87 = arith.constant 0 : index
    %c0_88 = arith.constant 0 : index
    %97 = vector.load %arg9[%c0_85, %c0_86, %c0_87, %c0_88] : memref<1x16x16x8xf32, #tpu.memory_space<vmem>>, vector<1x16x16x8xf32>
    %98 = vector.shape_cast %97 : vector<1x16x16x8xf32> to vector<16x16x8xf32>
    %99 = vector.shape_cast %96 : vector<16x16x8xf32> to vector<1x16x16x8xf32>
    tpu.vector_store %arg9[%c0_85, %c0_86, %c0_87, %c0_88], %99 {strides = array<i32>} : memref<1x16x16x8xf32, #tpu.memory_space<vmem>>, vector<1x16x16x8xf32>,
    return
  }
  func.func @transform_0(%arg0: i32) -> (i32, i32, i32, i32) {
    %c0_i32 = arith.constant 0 : i32
    %c0_i32_0 = arith.constant 0 : i32
    %c0_i32_1 = arith.constant 0 : i32
    %c0_i32_2 = arith.constant 0 : i32
    return %arg0, %c0_i32, %c0_i32_0, %c0_i32_1 : i32, i32, i32, i32
  }
  func.func @transform_1(%arg0: i32) -> (i32, i32, i32, i32) {
    %c0_i32 = arith.constant 0 : i32
    %c0_i32_0 = arith.constant 0 : i32
    %c0_i32_1 = arith.constant 0 : i32
    %c0_i32_2 = arith.constant 0 : i32
    return %arg0, %c0_i32, %c0_i32_0, %c0_i32_1 : i32, i32, i32, i32
  }
  func.func @transform_2(%arg0: i32) -> (i32, i32) {
    %c0_i32 = arith.constant 0 : i32
    %c0_i32_0 = arith.constant 0 : i32
    %c0_i32_1 = arith.constant 0 : i32
    return %c0_i32, %c0_i32_0 : i32, i32
  }
  func.func @transform_3(%arg0: i32) -> (i32, i32) {
    %c0_i32 = arith.constant 0 : i32
    %c0_i32_0 = arith.constant 0 : i32
    %c0_i32_1 = arith.constant 0 : i32
    return %c0_i32, %c0_i32_0 : i32, i32
  }
  func.func @transform_4(%arg0: i32) -> (i32, i32, i32) {
    %c0_i32 = arith.constant 0 : i32
    %c0_i32_0 = arith.constant 0 : i32
    %c0_i32_1 = arith.constant 0 : i32
    %c0_i32_2 = arith.constant 0 : i32
    return %c0_i32, %c0_i32_0, %c0_i32_1 : i32, i32, i32
  }
  func.func @transform_5(%arg0: i32) -> (i32, i32) {
    %c0_i32 = arith.constant 0 : i32
    %c0_i32_0 = arith.constant 0 : i32
    %c0_i32_1 = arith.constant 0 : i32
    return %c0_i32, %c0_i32_0 : i32, i32
  }
  func.func @transform_6(%arg0: i32) -> (i32, i32, i32) {
    %c0_i32 = arith.constant 0 : i32
    %c0_i32_0 = arith.constant 0 : i32
    %c0_i32_1 = arith.constant 0 : i32
    %c0_i32_2 = arith.constant 0 : i32
    return %c0_i32, %c0_i32_0, %c0_i32_1 : i32, i32, i32
  }
  func.func @transform_7(%arg0: i32) -> (i32, i32) {
    %c0_i32 = arith.constant 0 : i32
    %c0_i32_0 = arith.constant 0 : i32
    %c0_i32_1 = arith.constant 0 : i32
    return %c0_i32, %c0_i32_0 : i32, i32
  }
  func.func @transform_8(%arg0: i32) -> (i32, i32, i32, i32) {
    %c0_i32 = arith.constant 0 : i32
    %c0_i32_0 = arith.constant 0 : i32
    %c0_i32_1 = arith.constant 0 : i32
    %c0_i32_2 = arith.constant 0 : i32
    return %arg0, %c0_i32, %c0_i32_0, %c0_i32_1 : i32, i32, i32, i32
  }
}

</mosaic_0001>

<llo_original>
// kernel: non_bottleneck_1d_inst_forward.2
$region0: #{non_bottleneck_1d_inst_forward.2}
  #allocation0 [shape = 'u32[]', space=smem, size = 0x4, offset = 0x4, fixed_abs, tag = 'smem constant byte address 0x4 - core index']
  #allocation1 [shape = 'u32[72,128]{1,0:T(1,128)}', space=vmem, size = 0x9000, scoped, tag = 'internal scratch']
  #allocation2 [shape = 'f32[18,16,8]{2,1,0:T(8,128)}', space=vmem, size = 0x24000, scoped, tag = 'scratch operand']
  #allocation3 [shape = 'f32[16,18,8]{2,1,0:T(8,128)}', space=vmem, size = 0x30000, scoped, tag = 'scratch operand']
  %s0 = inlined_call_operand.vmem [shape: f32[2,16,16,8], index: 0, kind: input, shape index: {}]
  %s1 = inlined_call_operand.vmem [shape: f32[3,8,8], index: 1, kind: input, shape index: {}]
  %s2 = inlined_call_operand.vmem [shape: f32[1,8], index: 2, kind: input, shape index: {}]
  %s3 = inlined_call_operand.vmem [shape: f32[3,8,8], index: 3, kind: input, shape index: {}]
  %s4 = inlined_call_operand.vmem [shape: f32[1,8], index: 4, kind: input, shape index: {}]
  %s5 = inlined_call_operand.vmem [shape: f32[2,16,16,8], index: 5, kind: output, shape index: {0}]
  %s6 = inlined_call_operand.vmem [shape: f32[2,2,8], index: 6, kind: output, shape index: {1}]
  %7 = xla_tuple %s5, %s6
  %s8 = sld [smem:[#allocation0]]
  $region61: #{non_bottleneck_1d_inst_forward.2} parent=0
    _
  %s10 = ssub.s32 1, %s8
  %s11 = scalar_select 0, %s10, %s8
  loop: start=0, step=1, limit=4
  $region2: #{non_bottleneck_1d_inst_forward.2} parent=0 // loop_pre_header
    _
  $region3: #{non_bottleneck_1d_inst_forward.2} parent=0 // loop_header
    %s13 = sphi 0, %s17
    %p14 = scmp.ge.s32.totalorder %s13, 4
    %s23 = sphi 0, %s25
    %s26 = sphi 0, %s23
    %s27 = sphi 0, %s26
    %s43 = sphi 0, %s27
    %s47 = sphi 0, %s47
    %s49 = sphi 0, %s47
    %s50 = sphi 0, %s49
    %s64 = sphi 0, %s50
    %s68 = sphi 0, %s68
    %s70 = sphi 0, %s68
    %s71 = sphi 0, %s70
    %s85 = sphi 0, %s71
    %s89 = sphi 0, %s89
    %s91 = sphi 0, %s89
    %s92 = sphi 0, %s91
    %s106 = sphi 0, %s92
    %s110 = sphi 0, %s110
    %s112 = sphi 0, %s110
    %s113 = sphi 0, %s112
    %s127 = sphi 0, %s113
    %s133 = sphi 0, %s135
    %s136 = sphi 0, %s133
    %s137 = sphi 0, %s136
    %s153 = sphi 0, %s137
    %s159 = sphi 0, %s161
    %s162 = sphi 0, %s159
    %s163 = sphi 0, %s162
    %s179 = sphi 0, %s163
  $region4: #{non_bottleneck_1d_inst_forward.2} parent=0 // loop_header_branch
    %16 = sbr.rel (%p14) target = $region8
  $region5: #{non_bottleneck_1d_inst_forward.2} parent=0 // loop_body
    %s18 = ssub.s32 %s13, 1
    %s19 = ssub.s32 %s13, 2
    %s20 = sadd.s32 %s13, 1
    %s21 = ssub.s32 %s13, %s20
    %p22 = scmp.eq.s32.totalorder %s21, 0
    %s24 = sadd.s32 %s23, 1
    %s25 = scalar_select %p22, %s23, %s24
    %p28 = pneg %p22
    %p29 = scmp.eq.s32.totalorder %s13, 1
    %p30 = por %p28, %p29
    %p31 = scmp.ne.s32.totalorder %s23, %s26
    %p32 = scmp.eq.s32.totalorder %s13, 0
    %p33 = por %p31, %p32
    %p34 = scmp.ne.s32.totalorder %s23, %s26
    %p35 = scmp.eq.s32.totalorder %s18, 1
    %p36 = por %p34, %p35
    %p37 = scmp.ne.s32.totalorder %s26, %s27
    %p38 = scmp.eq.s32.totalorder %s18, 0
    %p39 = por %p37, %p38
    %p40 = scmp.ne.s32.totalorder %s26, %s27
    %p41 = scmp.eq.s32.totalorder %s19, 1
    %p42 = por %p40, %p41
    %p44 = scmp.ne.s32.totalorder %s27, %s43
    %p45 = scmp.eq.s32.totalorder %s19, 0
    %p46 = por %p44, %p45
    %s48 = sadd.s32 %s47, 1
    %p51 = scmp.eq.s32.totalorder %s13, 1
    %p52 = scmp.ne.s32.totalorder %s47, %s49
    %p53 = scmp.eq.s32.totalorder %s13, 0
    %p54 = por %p52, %p53
    %p55 = scmp.ne.s32.totalorder %s47, %s49
    %p56 = scmp.eq.s32.totalorder %s18, 1
    %p57 = por %p55, %p56
    %p58 = scmp.ne.s32.totalorder %s49, %s50
    %p59 = scmp.eq.s32.totalorder %s18, 0
    %p60 = por %p58, %p59
    %p61 = scmp.ne.s32.totalorder %s49, %s50
    %p62 = scmp.eq.s32.totalorder %s19, 1
    %p63 = por %p61, %p62
    %p65 = scmp.ne.s32.totalorder %s50, %s64
    %p66 = scmp.eq.s32.totalorder %s19, 0
    %p67 = por %p65, %p66
    %s69 = sadd.s32 %s68, 1
    %p72 = scmp.eq.s32.totalorder %s13, 1
    %p73 = scmp.ne.s32.totalorder %s68, %s70
    %p74 = scmp.eq.s32.totalorder %s13, 0
    %p75 = por %p73, %p74
    %p76 = scmp.ne.s32.totalorder %s68, %s70
    %p77 = scmp.eq.s32.totalorder %s18, 1
    %p78 = por %p76, %p77
    %p79 = scmp.ne.s32.totalorder %s70, %s71
    %p80 = scmp.eq.s32.totalorder %s18, 0
    %p81 = por %p79, %p80
    %p82 = scmp.ne.s32.totalorder %s70, %s71
    %p83 = scmp.eq.s32.totalorder %s19, 1
    %p84 = por %p82, %p83
    %p86 = scmp.ne.s32.totalorder %s71, %s85
    %p87 = scmp.eq.s32.totalorder %s19, 0
    %p88 = por %p86, %p87
    %s90 = sadd.s32 %s89, 1
    %p93 = scmp.eq.s32.totalorder %s13, 1
    %p94 = scmp.ne.s32.totalorder %s89, %s91
    %p95 = scmp.eq.s32.totalorder %s13, 0
    %p96 = por %p94, %p95
    %p97 = scmp.ne.s32.totalorder %s89, %s91
    %p98 = scmp.eq.s32.totalorder %s18, 1
    %p99 = por %p97, %p98
    %p100 = scmp.ne.s32.totalorder %s91, %s92
    %p101 = scmp.eq.s32.totalorder %s18, 0
    %p102 = por %p100, %p101
    %p103 = scmp.ne.s32.totalorder %s91, %s92
    %p104 = scmp.eq.s32.totalorder %s19, 1
    %p105 = por %p103, %p104
    %p107 = scmp.ne.s32.totalorder %s92, %s106
    %p108 = scmp.eq.s32.totalorder %s19, 0
    %p109 = por %p107, %p108
    %s111 = sadd.s32 %s110, 1
    %p114 = scmp.eq.s32.totalorder %s13, 1
    %p115 = scmp.ne.s32.totalorder %s110, %s112
    %p116 = scmp.eq.s32.totalorder %s13, 0
    %p117 = por %p115, %p116
    %p118 = scmp.ne.s32.totalorder %s110, %s112
    %p119 = scmp.eq.s32.totalorder %s18, 1
    %p120 = por %p118, %p119
    %p121 = scmp.ne.s32.totalorder %s112, %s113
    %p122 = scmp.eq.s32.totalorder %s18, 0
    %p123 = por %p121, %p122
    %p124 = scmp.ne.s32.totalorder %s112, %s113
    %p125 = scmp.eq.s32.totalorder %s19, 1
    %p126 = por %p124, %p125
    %p128 = scmp.ne.s32.totalorder %s113, %s127
    %p129 = scmp.eq.s32.totalorder %s19, 0
    %p130 = por %p128, %p129
    %s131 = ssub.s32 %s13, %s20
    %p132 = scmp.eq.s32.totalorder %s131, 0
    %s134 = sadd.s32 %s133, 1
    %s135 = scalar_select %p132, %s133, %s134
    %p138 = pneg %p132
    %p139 = scmp.eq.s32.totalorder %s13, 1
    %p140 = por %p138, %p139
    %p141 = scmp.ne.s32.totalorder %s133, %s136
    %p142 = scmp.eq.s32.totalorder %s13, 0
    %p143 = por %p141, %p142
    %p144 = scmp.ne.s32.totalorder %s133, %s136
    %p145 = scmp.eq.s32.totalorder %s18, 1
    %p146 = por %p144, %p145
    %p147 = scmp.ne.s32.totalorder %s136, %s137
    %p148 = scmp.eq.s32.totalorder %s18, 0
    %p149 = por %p147, %p148
    %p150 = scmp.ne.s32.totalorder %s136, %s137
    %p151 = scmp.eq.s32.totalorder %s19, 1
    %p152 = por %p150, %p151
    %p154 = scmp.ne.s32.totalorder %s137, %s153
    %p155 = scmp.eq.s32.totalorder %s19, 0
    %p156 = por %p154, %p155
    %s157 = ssub.s32 %s13, %s20
    %p158 = scmp.eq.s32.totalorder %s157, 0
    %s160 = sadd.s32 %s159, 1
    %s161 = scalar_select %p158, %s159, %s160
    %p164 = pneg %p158
    %p165 = scmp.eq.s32.totalorder %s13, 1
    %p166 = por %p164, %p165
    %p167 = scmp.ne.s32.totalorder %s159, %s162
    %p168 = scmp.eq.s32.totalorder %s13, 0
    %p169 = por %p167, %p168
    %p170 = scmp.ne.s32.totalorder %s159, %s162
    %p171 = scmp.eq.s32.totalorder %s18, 1
    %p172 = por %p170, %p171
    %p173 = scmp.ne.s32.totalorder %s162, %s163
    %p174 = scmp.eq.s32.totalorder %s18, 0
    %p175 = por %p173, %p174
    %p176 = scmp.ne.s32.totalorder %s162, %s163
    %p177 = scmp.eq.s32.totalorder %s19, 1
    %p178 = por %p176, %p177
    %p180 = scmp.ne.s32.totalorder %s163, %s179
    %p181 = scmp.eq.s32.totalorder %s19, 0
    %p182 = por %p180, %p181
    %p183 = scmp.le.s32.totalorder 1, %s13
    %p184 = scmp.lt.s32.totalorder %s13, 3
    %p185 = pnand %p183, %p184
    %p186 = pneg %p185
    // Predicated region
    $region9: #{non_bottleneck_1d_inst_forward.2} parent=5 // pred_check
      _
    $region10: #{non_bottleneck_1d_inst_forward.2} parent=5 // pred_check_branch
      %188 = sbr.rel (%p185) target = $region12
    $region11: #{non_bottleneck_1d_inst_forward.2} parent=5 // pred_region
      %s189 = ssub.s32 %s13, 1
      // Predicated region
      $region13: #{non_bottleneck_1d_inst_forward.2} parent=11 // pred_check
        %p190 = pneg %p60
      $region14: #{non_bottleneck_1d_inst_forward.2} parent=11 // pred_check_branch
        %192 = sbr.rel (%p190) target = $region16
      $region15: #{non_bottleneck_1d_inst_forward.2} parent=11 // pred_region
        _
      $region16: #{non_bottleneck_1d_inst_forward.2} parent=11 // pred_fallthru
        _
      // Predicated region
      $region17: #{non_bottleneck_1d_inst_forward.2} parent=11 // pred_check
        %p193 = pneg %p81
      $region18: #{non_bottleneck_1d_inst_forward.2} parent=11 // pred_check_branch
        %195 = sbr.rel (%p193) target = $region20
      $region19: #{non_bottleneck_1d_inst_forward.2} parent=11 // pred_region
        _
      $region20: #{non_bottleneck_1d_inst_forward.2} parent=11 // pred_fallthru
        _
      // Predicated region
      $region21: #{non_bottleneck_1d_inst_forward.2} parent=11 // pred_check
        %p196 = pneg %p102
      $region22: #{non_bottleneck_1d_inst_forward.2} parent=11 // pred_check_branch
        %198 = sbr.rel (%p196) target = $region24
      $region23: #{non_bottleneck_1d_inst_forward.2} parent=11 // pred_region
        _
      $region24: #{non_bottleneck_1d_inst_forward.2} parent=11 // pred_fallthru
        _
      // Predicated region
      $region25: #{non_bottleneck_1d_inst_forward.2} parent=11 // pred_check
        %p199 = pneg %p123
      $region26: #{non_bottleneck_1d_inst_forward.2} parent=11 // pred_check_branch
        %201 = sbr.rel (%p199) target = $region28
      $region27: #{non_bottleneck_1d_inst_forward.2} parent=11 // pred_region
        _
      $region28: #{non_bottleneck_1d_inst_forward.2} parent=11 // pred_fallthru
        _
    $region12: #{non_bottleneck_1d_inst_forward.2} parent=5 // pred_fallthru
      _
    %p202 = scmp.lt.s32.totalorder %s13, 2
    // Predicated region
    $region29: #{non_bottleneck_1d_inst_forward.2} parent=5 // pred_check
      %p203 = pneg %p202
    $region30: #{non_bottleneck_1d_inst_forward.2} parent=5 // pred_check_branch
      %205 = sbr.rel (%p203) target = $region32
    $region31: #{non_bottleneck_1d_inst_forward.2} parent=5 // pred_region
      // Predicated region
      $region33: #{non_bottleneck_1d_inst_forward.2} parent=31 // pred_check
        %p206 = pneg %p33
      $region34: #{non_bottleneck_1d_inst_forward.2} parent=31 // pred_check_branch
        %208 = sbr.rel (%p206) target = $region36
      $region35: #{non_bottleneck_1d_inst_forward.2} parent=31 // pred_region
        %p209 = scmp.lt.s32.totalorder %s13, 1
        %s210 = scalar_select %p209, %s13, 1
        %s211 = smul.addr %s210, 32
        %s212 = smul.addr %s211, 8
        %s213 = scalar_lea.vmem %s0, %s212
      $region36: #{non_bottleneck_1d_inst_forward.2} parent=31 // pred_fallthru
        _
    $region32: #{non_bottleneck_1d_inst_forward.2} parent=5 // pred_fallthru
      _
    %p214 = scmp.le.s32.totalorder 1, %s13
    %p215 = scmp.lt.s32.totalorder %s13, 3
    %p216 = pnand %p214, %p215
    %p217 = pneg %p216
    // Predicated region
    $region37: #{non_bottleneck_1d_inst_forward.2} parent=5 // pred_check
      _
    $region38: #{non_bottleneck_1d_inst_forward.2} parent=5 // pred_check_branch
      %219 = sbr.rel (%p216) target = $region40
    $region39: #{non_bottleneck_1d_inst_forward.2} parent=5 // pred_region
      %s220 = ssub.s32 %s13, 1
      %p221 = scmp.lt.s32.totalorder %s18, 1
      %s222 = scalar_select %p221, %s18, 1
      %s223 = smul.addr %s222, 32
      %s224 = smul.addr %s223, 8
      %s225 = scalar_lea.vmem %s0, %s224
      %p226 = pneg %p39
      %p227 = pneg %p36
      %p228 = pneg %p60
      %p229 = pneg %p57
      %p230 = pneg %p81
      %p231 = pneg %p78
      %p232 = pneg %p102
      %p233 = pneg %p99
      %p234 = pneg %p123
      %p235 = pneg %p120
      %p236 = pneg %p149
      %p237 = pneg %p146
      %p238 = scmp.lt.s32.totalorder %s18, 1
      %s239 = scalar_select %p238, %s18, 1
      %s240 = smul.addr %s239, 32
      %s241 = smul.addr %s240, 8
      %s242 = scalar_lea.vmem %s5, %s241
      %p243 = pneg %p175
      %p244 = pneg %p172
      %p245 = scmp.lt.s32.totalorder %s18, 1
      %s246 = scalar_select %p245, %s18, 1
      %s247 = smul.addr %s246, 2
      %s248 = scalar_lea.vmem %s6, %s247
      %p249 = scmp.lt.s32.totalorder %s18, 1
      %s250 = scalar_select %p249, %s18, 1
      %s251 = smul.addr %s250, 32
      %s252 = smul.addr %s251, 8
      %s253 = scalar_lea.vmem %s0, %s252
      %p254 = scmp.lt.s32.totalorder %s18, 1
      %s255 = scalar_select %p254, %s18, 1
      %s256 = smul.addr %s255, 32
      %s257 = smul.addr %s256, 8
      %s258 = scalar_lea.vmem %s5, %s257
      %p259 = scmp.lt.s32.totalorder %s18, 1
      %s260 = scalar_select %p259, %s18, 1
      %s261 = smul.addr %s260, 2
      %s262 = scalar_lea.vmem %s6, %s261
      %v263 = vld [vmem:[%s253] sm:$0xff]
      %v264 = vld [vmem:[%s253 + $0x8] sm:$0xff]
      %v265 = vld [vmem:[%s253 + $0x10] sm:$0xff]
      %v266 = vld [vmem:[%s253 + $0x18] sm:$0xff]
      %v267 = vld [vmem:[%s253 + $0x20] sm:$0xff]
      %v268 = vld [vmem:[%s253 + $0x28] sm:$0xff]
      %v269 = vld [vmem:[%s253 + $0x30] sm:$0xff]
      %v270 = vld [vmem:[%s253 + $0x38] sm:$0xff]
      %v271 = vld [vmem:[%s253 + $0x40] sm:$0xff]
      %v272 = vld [vmem:[%s253 + $0x48] sm:$0xff]
      %v273 = vld [vmem:[%s253 + $0x50] sm:$0xff]
      %v274 = vld [vmem:[%s253 + $0x58] sm:$0xff]
      %v275 = vld [vmem:[%s253 + $0x60] sm:$0xff]
      %v276 = vld [vmem:[%s253 + $0x68] sm:$0xff]
      %v277 = vld [vmem:[%s253 + $0x70] sm:$0xff]
      %v278 = vld [vmem:[%s253 + $0x78] sm:$0xff]
      %v279 = vld [vmem:[%s253 + $0x80] sm:$0xff]
      %v280 = vld [vmem:[%s253 + $0x88] sm:$0xff]
      %v281 = vld [vmem:[%s253 + $0x90] sm:$0xff]
      %v282 = vld [vmem:[%s253 + $0x98] sm:$0xff]
      %v283 = vld [vmem:[%s253 + $0xa0] sm:$0xff]
      %v284 = vld [vmem:[%s253 + $0xa8] sm:$0xff]
      %v285 = vld [vmem:[%s253 + $0xb0] sm:$0xff]
      %v286 = vld [vmem:[%s253 + $0xb8] sm:$0xff]
      %v287 = vld [vmem:[%s253 + $0xc0] sm:$0xff]
      %v288 = vld [vmem:[%s253 + $0xc8] sm:$0xff]
      %v289 = vld [vmem:[%s253 + $0xd0] sm:$0xff]
      %v290 = vld [vmem:[%s253 + $0xd8] sm:$0xff]
      %v291 = vld [vmem:[%s253 + $0xe0] sm:$0xff]
      %v292 = vld [vmem:[%s253 + $0xe8] sm:$0xff]
      %v293 = vld [vmem:[%s253 + $0xf0] sm:$0xff]
      %v294 = vld [vmem:[%s253 + $0xf8] sm:$0xff]
      %v295 = vld [vmem:[%s2] sm:$0x1]
      %vm296 = vcmask 64512
      %297 = vst.msk [vmem:[#allocation2] sm:$0xff] %vm296, 0.0
      %298 = vst.msk [vmem:[#allocation2 + $0x8] sm:$0xff] %vm296, 0.0
      %s299 = scalar_lea.vmem [#allocation2], 272
      %300 = vst.msk [vmem:[%s299] sm:$0xff] %vm296, 0.0
      %301 = vst.msk [vmem:[%s299 + $0x8] sm:$0xff] %vm296, 0.0
      %s302 = scalar_lea.vmem [#allocation2], 16
      %303 = vst.msk [vmem:[%s302] sm:$0xff] %vm296, %v263
      %304 = vst.msk [vmem:[%s302 + $0x8] sm:$0xff] %vm296, %v264
      %305 = vst.msk [vmem:[%s302 + $0x10] sm:$0xff] %vm296, %v265
      %306 = vst.msk [vmem:[%s302 + $0x18] sm:$0xff] %vm296, %v266
      %307 = vst.msk [vmem:[%s302 + $0x20] sm:$0xff] %vm296, %v267
      %308 = vst.msk [vmem:[%s302 + $0x28] sm:$0xff] %vm296, %v268
      %309 = vst.msk [vmem:[%s302 + $0x30] sm:$0xff] %vm296, %v269
      %310 = vst.msk [vmem:[%s302 + $0x38] sm:$0xff] %vm296, %v270
      %311 = vst.msk [vmem:[%s302 + $0x40] sm:$0xff] %vm296, %v271
      %312 = vst.msk [vmem:[%s302 + $0x48] sm:$0xff] %vm296, %v272
      %313 = vst.msk [vmem:[%s302 + $0x50] sm:$0xff] %vm296, %v273
      %314 = vst.msk [vmem:[%s302 + $0x58] sm:$0xff] %vm296, %v274
      %315 = vst.msk [vmem:[%s302 + $0x60] sm:$0xff] %vm296, %v275
      %316 = vst.msk [vmem:[%s302 + $0x68] sm:$0xff] %vm296, %v276
      %317 = vst.msk [vmem:[%s302 + $0x70] sm:$0xff] %vm296, %v277
      %318 = vst.msk [vmem:[%s302 + $0x78] sm:$0xff] %vm296, %v278
      %319 = vst.msk [vmem:[%s302 + $0x80] sm:$0xff] %vm296, %v279
      %320 = vst.msk [vmem:[%s302 + $0x88] sm:$0xff] %vm296, %v280
      %321 = vst.msk [vmem:[%s302 + $0x90] sm:$0xff] %vm296, %v281
      %322 = vst.msk [vmem:[%s302 + $0x98] sm:$0xff] %vm296, %v282
      %323 = vst.msk [vmem:[%s302 + $0xa0] sm:$0xff] %vm296, %v283
      %324 = vst.msk [vmem:[%s302 + $0xa8] sm:$0xff] %vm296, %v284
      %325 = vst.msk [vmem:[%s302 + $0xb0] sm:$0xff] %vm296, %v285
      %326 = vst.msk [vmem:[%s302 + $0xb8] sm:$0xff] %vm296, %v286
      %327 = vst.msk [vmem:[%s302 + $0xc0] sm:$0xff] %vm296, %v287
      %328 = vst.msk [vmem:[%s302 + $0xc8] sm:$0xff] %vm296, %v288
      %329 = vst.msk [vmem:[%s302 + $0xd0] sm:$0xff] %vm296, %v289
      %330 = vst.msk [vmem:[%s302 + $0xd8] sm:$0xff] %vm296, %v290
      %331 = vst.msk [vmem:[%s302 + $0xe0] sm:$0xff] %vm296, %v291
      %332 = vst.msk [vmem:[%s302 + $0xe8] sm:$0xff] %vm296, %v292
      %333 = vst.msk [vmem:[%s302 + $0xf0] sm:$0xff] %vm296, %v293
      %334 = vst.msk [vmem:[%s302 + $0xf8] sm:$0xff] %vm296, %v294
      %v335 = vld [vmem:[#allocation2] sm:$0xff]
      %v336 = vld [vmem:[#allocation2 + $0x8] sm:$0xff]
      %v337 = vld [vmem:[#allocation2 + $0x10] sm:$0xff]
      %v338 = vld [vmem:[#allocation2 + $0x18] sm:$0xff]
      %v339 = vld [vmem:[#allocation2 + $0x20] sm:$0xff]
      %v340 = vld [vmem:[#allocation2 + $0x28] sm:$0xff]
      %v341 = vld [vmem:[#allocation2 + $0x30] sm:$0xff]
      %v342 = vld [vmem:[#allocation2 + $0x38] sm:$0xff]
      %v343 = vld [vmem:[#allocation2 + $0x40] sm:$0xff]
      %v344 = vld [vmem:[#allocation2 + $0x48] sm:$0xff]
      %v345 = vld [vmem:[#allocation2 + $0x50] sm:$0xff]
      %v346 = vld [vmem:[#allocation2 + $0x58] sm:$0xff]
      %v347 = vld [vmem:[#allocation2 + $0x60] sm:$0xff]
      %v348 = vld [vmem:[#allocation2 + $0x68] sm:$0xff]
      %v349 = vld [vmem:[#allocation2 + $0x70] sm:$0xff]
      %v350 = vld [vmem:[#allocation2 + $0x78] sm:$0xff]
      %v351 = vld [vmem:[#allocation2 + $0x80] sm:$0xff]
      %v352 = vld [vmem:[#allocation2 + $0x88] sm:$0xff]
      %v353 = vld [vmem:[#allocation2 + $0x90] sm:$0xff]
      %v354 = vld [vmem:[#allocation2 + $0x98] sm:$0xff]
      %v355 = vld [vmem:[#allocation2 + $0xa0] sm:$0xff]
      %v356 = vld [vmem:[#allocation2 + $0xa8] sm:$0xff]
      %v357 = vld [vmem:[#allocation2 + $0xb0] sm:$0xff]
      %v358 = vld [vmem:[#allocation2 + $0xb8] sm:$0xff]
      %v359 = vld [vmem:[#allocation2 + $0xc0] sm:$0xff]
      %v360 = vld [vmem:[#allocation2 + $0xc8] sm:$0xff]
      %v361 = vld [vmem:[#allocation2 + $0xd0] sm:$0xff]
      %v362 = vld [vmem:[#allocation2 + $0xd8] sm:$0xff]
      %v363 = vld [vmem:[#allocation2 + $0xe0] sm:$0xff]
      %v364 = vld [vmem:[#allocation2 + $0xe8] sm:$0xff]
      %v365 = vld [vmem:[#allocation2 + $0xf0] sm:$0xff]
      %v366 = vld [vmem:[#allocation2 + $0xf8] sm:$0xff]
      %v367 = vld [vmem:[%s1] sm:$0xff]
      %v368 = vld [vmem:[%s302] sm:$0xff]
      %v369 = vld [vmem:[%s302 + $0x8] sm:$0xff]
      %v370 = vld [vmem:[%s302 + $0x10] sm:$0xff]
      %v371 = vld [vmem:[%s302 + $0x18] sm:$0xff]
      %v372 = vld [vmem:[%s302 + $0x20] sm:$0xff]
      %v373 = vld [vmem:[%s302 + $0x28] sm:$0xff]
      %v374 = vld [vmem:[%s302 + $0x30] sm:$0xff]
      %v375 = vld [vmem:[%s302 + $0x38] sm:$0xff]
      %v376 = vld [vmem:[%s302 + $0x40] sm:$0xff]
      %v377 = vld [vmem:[%s302 + $0x48] sm:$0xff]
      %v378 = vld [vmem:[%s302 + $0x50] sm:$0xff]
      %v379 = vld [vmem:[%s302 + $0x58] sm:$0xff]
      %v380 = vld [vmem:[%s302 + $0x60] sm:$0xff]
      %v381 = vld [vmem:[%s302 + $0x68] sm:$0xff]
      %v382 = vld [vmem:[%s302 + $0x70] sm:$0xff]
      %v383 = vld [vmem:[%s302 + $0x78] sm:$0xff]
      %v384 = vld [vmem:[%s302 + $0x80] sm:$0xff]
      %v385 = vld [vmem:[%s302 + $0x88] sm:$0xff]
      %v386 = vld [vmem:[%s302 + $0x90] sm:$0xff]
      %v387 = vld [vmem:[%s302 + $0x98] sm:$0xff]
      %v388 = vld [vmem:[%s302 + $0xa0] sm:$0xff]
      %v389 = vld [vmem:[%s302 + $0xa8] sm:$0xff]
      %v390 = vld [vmem:[%s302 + $0xb0] sm:$0xff]
      %v391 = vld [vmem:[%s302 + $0xb8] sm:$0xff]
      %v392 = vld [vmem:[%s302 + $0xc0] sm:$0xff]
      %v393 = vld [vmem:[%s302 + $0xc8] sm:$0xff]
      %v394 = vld [vmem:[%s302 + $0xd0] sm:$0xff]
      %v395 = vld [vmem:[%s302 + $0xd8] sm:$0xff]
      %v396 = vld [vmem:[%s302 + $0xe0] sm:$0xff]
      %v397 = vld [vmem:[%s302 + $0xe8] sm:$0xff]
      %v398 = vld [vmem:[%s302 + $0xf0] sm:$0xff]
      %v399 = vld [vmem:[%s302 + $0xf8] sm:$0xff]
      %s400 = scalar_lea.vmem %s1, 8
      %v401 = vld [vmem:[%s400] sm:$0xff]
      %v403 = vsel %vm296, %v368, 0
      %v406 = vsel %vm296, %v369, 0
      %v409 = vsel %vm296, %v370, 0
      %v412 = vsel %vm296, %v371, 0
      %v415 = vsel %vm296, %v372, 0
      %v418 = vsel %vm296, %v373, 0
      %v421 = vsel %vm296, %v374, 0
      %v424 = vsel %vm296, %v375, 0
      %v427 = vsel %vm296, %v376, 0
      %v430 = vsel %vm296, %v377, 0
      %v433 = vsel %vm296, %v378, 0
      %v436 = vsel %vm296, %v379, 0
      %v439 = vsel %vm296, %v380, 0
      %v442 = vsel %vm296, %v381, 0
      %v445 = vsel %vm296, %v382, 0
      %v448 = vsel %vm296, %v383, 0
      %v451 = vsel %vm296, %v384, 0
      %v454 = vsel %vm296, %v385, 0
      %v457 = vsel %vm296, %v386, 0
      %v460 = vsel %vm296, %v387, 0
      %v463 = vsel %vm296, %v388, 0
      %v466 = vsel %vm296, %v389, 0
      %v469 = vsel %vm296, %v390, 0
      %v472 = vsel %vm296, %v391, 0
      %v475 = vsel %vm296, %v392, 0
      %v478 = vsel %vm296, %v393, 0
      %v481 = vsel %vm296, %v394, 0
      %v484 = vsel %vm296, %v395, 0
      %v487 = vsel %vm296, %v396, 0
      %v490 = vsel %vm296, %v397, 0
      %v493 = vsel %vm296, %v398, 0
      %v496 = vsel %vm296, %v399, 0
      %498 = vmatpush.msra.mxu0 0.0
      %499 = vmatpush.msra.mxu0 0.0
      %500 = vmatpush.msra.mxu0 0.0
      %501 = vmatpush.msra.mxu0 0.0
      %502 = vmatpush.msra.mxu0 0.0
      %503 = vmatpush.msra.mxu0 0.0
      %504 = vmatpush.msra.mxu0 0.0
      %505 = vmatpush.msra.mxu0 0.0
      %506 = vmatpush.msra.mxu0 0.0
      %507 = vmatpush.msra.mxu0 0.0
      %508 = vmatpush.msra.mxu0 0.0
      %509 = vmatpush.msra.mxu0 0.0
      %510 = vmatpush.msra.mxu0 0.0
      %511 = vmatpush.msra.mxu0 0.0
      %512 = vmatpush.msra.mxu0 0.0
      %513 = vmatpush.msra.mxu0 %v401
      %514 = vmatmul.f32.gmra.mxu0 %v403
      %v515 = vpop.f32.mrf.mxu0
      %v516 = vadd.f32 0.0, %v515
      %517 = vmatmul.f32.gmra.mxu0 %v406
      %v518 = vpop.f32.mrf.mxu0
      %v519 = vadd.f32 0.0, %v518
      %520 = vmatmul.f32.gmra.mxu0 %v409
      %v521 = vpop.f32.mrf.mxu0
      %v522 = vadd.f32 0.0, %v521
      %523 = vmatmul.f32.gmra.mxu0 %v412
      %v524 = vpop.f32.mrf.mxu0
      %v525 = vadd.f32 0.0, %v524
      %526 = vmatmul.f32.gmra.mxu0 %v415
      %v527 = vpop.f32.mrf.mxu0
      %v528 = vadd.f32 0.0, %v527
      %529 = vmatmul.f32.gmra.mxu0 %v418
      %v530 = vpop.f32.mrf.mxu0
      %v531 = vadd.f32 0.0, %v530
      %532 = vmatmul.f32.gmra.mxu0 %v421
      %v533 = vpop.f32.mrf.mxu0
      %v534 = vadd.f32 0.0, %v533
      %535 = vmatmul.f32.gmra.mxu0 %v424
      %v536 = vpop.f32.mrf.mxu0
      %v537 = vadd.f32 0.0, %v536
      %538 = vmatmul.f32.gmra.mxu0 %v427
      %v539 = vpop.f32.mrf.mxu0
      %v540 = vadd.f32 0.0, %v539
      %541 = vmatmul.f32.gmra.mxu0 %v430
      %v542 = vpop.f32.mrf.mxu0
      %v543 = vadd.f32 0.0, %v542
      %544 = vmatmul.f32.gmra.mxu0 %v433
      %v545 = vpop.f32.mrf.mxu0
      %v546 = vadd.f32 0.0, %v545
      %547 = vmatmul.f32.gmra.mxu0 %v436
      %v548 = vpop.f32.mrf.mxu0
      %v549 = vadd.f32 0.0, %v548
      %550 = vmatmul.f32.gmra.mxu0 %v439
      %v551 = vpop.f32.mrf.mxu0
      %v552 = vadd.f32 0.0, %v551
      %553 = vmatmul.f32.gmra.mxu0 %v442
      %v554 = vpop.f32.mrf.mxu0
      %v555 = vadd.f32 0.0, %v554
      %556 = vmatmul.f32.gmra.mxu0 %v445
      %v557 = vpop.f32.mrf.mxu0
      %v558 = vadd.f32 0.0, %v557
      %559 = vmatmul.f32.gmra.mxu0 %v448
      %v560 = vpop.f32.mrf.mxu0
      %v561 = vadd.f32 0.0, %v560
      %562 = vmatmul.f32.gmra.mxu0 %v451
      %v563 = vpop.f32.mrf.mxu0
      %v564 = vadd.f32 0.0, %v563
      %565 = vmatmul.f32.gmra.mxu0 %v454
      %v566 = vpop.f32.mrf.mxu0
      %v567 = vadd.f32 0.0, %v566
      %568 = vmatmul.f32.gmra.mxu0 %v457
      %v569 = vpop.f32.mrf.mxu0
      %v570 = vadd.f32 0.0, %v569
      %571 = vmatmul.f32.gmra.mxu0 %v460
      %v572 = vpop.f32.mrf.mxu0
      %v573 = vadd.f32 0.0, %v572
      %574 = vmatmul.f32.gmra.mxu0 %v463
      %v575 = vpop.f32.mrf.mxu0
      %v576 = vadd.f32 0.0, %v575
      %577 = vmatmul.f32.gmra.mxu0 %v466
      %v578 = vpop.f32.mrf.mxu0
      %v579 = vadd.f32 0.0, %v578
      %580 = vmatmul.f32.gmra.mxu0 %v469
      %v581 = vpop.f32.mrf.mxu0
      %v582 = vadd.f32 0.0, %v581
      %583 = vmatmul.f32.gmra.mxu0 %v472
      %v584 = vpop.f32.mrf.mxu0
      %v585 = vadd.f32 0.0, %v584
      %586 = vmatmul.f32.gmra.mxu0 %v475
      %v587 = vpop.f32.mrf.mxu0
      %v588 = vadd.f32 0.0, %v587
      %589 = vmatmul.f32.gmra.mxu0 %v478
      %v590 = vpop.f32.mrf.mxu0
      %v591 = vadd.f32 0.0, %v590
      %592 = vmatmul.f32.gmra.mxu0 %v481
      %v593 = vpop.f32.mrf.mxu0
      %v594 = vadd.f32 0.0, %v593
      %595 = vmatmul.f32.gmra.mxu0 %v484
      %v596 = vpop.f32.mrf.mxu0
      %v597 = vadd.f32 0.0, %v596
      %598 = vmatmul.f32.gmra.mxu0 %v487
      %v599 = vpop.f32.mrf.mxu0
      %v600 = vadd.f32 0.0, %v599
      %601 = vmatmul.f32.gmra.mxu0 %v490
      %v602 = vpop.f32.mrf.mxu0
      %v603 = vadd.f32 0.0, %v602
      %604 = vmatmul.f32.gmra.mxu0 %v493
      %v605 = vpop.f32.mrf.mxu0
      %v606 = vadd.f32 0.0, %v605
      %607 = vmatmul.f32.gmra.mxu0 %v496
      %v608 = vpop.f32.mrf.mxu0
      %v609 = vadd.f32 0.0, %v608
      %610 = vdwg.mxu0
      %v612 = vsel %vm296, %v335, 0
      %v615 = vsel %vm296, %v336, 0
      %v618 = vsel %vm296, %v337, 0
      %v621 = vsel %vm296, %v338, 0
      %v624 = vsel %vm296, %v339, 0
      %v627 = vsel %vm296, %v340, 0
      %v630 = vsel %vm296, %v341, 0
      %v633 = vsel %vm296, %v342, 0
      %v636 = vsel %vm296, %v343, 0
      %v639 = vsel %vm296, %v344, 0
      %v642 = vsel %vm296, %v345, 0
      %v645 = vsel %vm296, %v346, 0
      %v648 = vsel %vm296, %v347, 0
      %v651 = vsel %vm296, %v348, 0
      %v654 = vsel %vm296, %v349, 0
      %v657 = vsel %vm296, %v350, 0
      %v660 = vsel %vm296, %v351, 0
      %v663 = vsel %vm296, %v352, 0
      %v666 = vsel %vm296, %v353, 0
      %v669 = vsel %vm296, %v354, 0
      %v672 = vsel %vm296, %v355, 0
      %v675 = vsel %vm296, %v356, 0
      %v678 = vsel %vm296, %v357, 0
      %v681 = vsel %vm296, %v358, 0
      %v684 = vsel %vm296, %v359, 0
      %v687 = vsel %vm296, %v360, 0
      %v690 = vsel %vm296, %v361, 0
      %v693 = vsel %vm296, %v362, 0
      %v696 = vsel %vm296, %v363, 0
      %v699 = vsel %vm296, %v364, 0
      %v702 = vsel %vm296, %v365, 0
      %v705 = vsel %vm296, %v366, 0
      %707 = vmatpush.msra.mxu0 0.0
      %708 = vmatpush.msra.mxu0 0.0
      %709 = vmatpush.msra.mxu0 0.0
      %710 = vmatpush.msra.mxu0 0.0
      %711 = vmatpush.msra.mxu0 0.0
      %712 = vmatpush.msra.mxu0 0.0
      %713 = vmatpush.msra.mxu0 0.0
      %714 = vmatpush.msra.mxu0 0.0
      %715 = vmatpush.msra.mxu0 0.0
      %716 = vmatpush.msra.mxu0 0.0
      %717 = vmatpush.msra.mxu0 0.0
      %718 = vmatpush.msra.mxu0 0.0
      %719 = vmatpush.msra.mxu0 0.0
      %720 = vmatpush.msra.mxu0 0.0
      %721 = vmatpush.msra.mxu0 0.0
      %722 = vmatpush.msra.mxu0 %v367
      %723 = vmatmul.f32.gmra.mxu0 %v612
      %v724 = vpop.f32.mrf.mxu0
      %v725 = vadd.f32 %v516, %v724
      %726 = vmatmul.f32.gmra.mxu0 %v615
      %v727 = vpop.f32.mrf.mxu0
      %v728 = vadd.f32 %v519, %v727
      %729 = vmatmul.f32.gmra.mxu0 %v618
      %v730 = vpop.f32.mrf.mxu0
      %v731 = vadd.f32 %v522, %v730
      %732 = vmatmul.f32.gmra.mxu0 %v621
      %v733 = vpop.f32.mrf.mxu0
      %v734 = vadd.f32 %v525, %v733
      %735 = vmatmul.f32.gmra.mxu0 %v624
      %v736 = vpop.f32.mrf.mxu0
      %v737 = vadd.f32 %v528, %v736
      %738 = vmatmul.f32.gmra.mxu0 %v627
      %v739 = vpop.f32.mrf.mxu0
      %v740 = vadd.f32 %v531, %v739
      %741 = vmatmul.f32.gmra.mxu0 %v630
      %v742 = vpop.f32.mrf.mxu0
      %v743 = vadd.f32 %v534, %v742
      %744 = vmatmul.f32.gmra.mxu0 %v633
      %v745 = vpop.f32.mrf.mxu0
      %v746 = vadd.f32 %v537, %v745
      %747 = vmatmul.f32.gmra.mxu0 %v636
      %v748 = vpop.f32.mrf.mxu0
      %v749 = vadd.f32 %v540, %v748
      %750 = vmatmul.f32.gmra.mxu0 %v639
      %v751 = vpop.f32.mrf.mxu0
      %v752 = vadd.f32 %v543, %v751
      %753 = vmatmul.f32.gmra.mxu0 %v642
      %v754 = vpop.f32.mrf.mxu0
      %v755 = vadd.f32 %v546, %v754
      %756 = vmatmul.f32.gmra.mxu0 %v645
      %v757 = vpop.f32.mrf.mxu0
      %v758 = vadd.f32 %v549, %v757
      %759 = vmatmul.f32.gmra.mxu0 %v648
      %v760 = vpop.f32.mrf.mxu0
      %v761 = vadd.f32 %v552, %v760
      %762 = vmatmul.f32.gmra.mxu0 %v651
      %v763 = vpop.f32.mrf.mxu0
      %v764 = vadd.f32 %v555, %v763
      %765 = vmatmul.f32.gmra.mxu0 %v654
      %v766 = vpop.f32.mrf.mxu0
      %v767 = vadd.f32 %v558, %v766
      %768 = vmatmul.f32.gmra.mxu0 %v657
      %v769 = vpop.f32.mrf.mxu0
      %v770 = vadd.f32 %v561, %v769
      %771 = vmatmul.f32.gmra.mxu0 %v660
      %v772 = vpop.f32.mrf.mxu0
      %v773 = vadd.f32 %v564, %v772
      %774 = vmatmul.f32.gmra.mxu0 %v663
      %v775 = vpop.f32.mrf.mxu0
      %v776 = vadd.f32 %v567, %v775
      %777 = vmatmul.f32.gmra.mxu0 %v666
      %v778 = vpop.f32.mrf.mxu0
      %v779 = vadd.f32 %v570, %v778
      %780 = vmatmul.f32.gmra.mxu0 %v669
      %v781 = vpop.f32.mrf.mxu0
      %v782 = vadd.f32 %v573, %v781
      %783 = vmatmul.f32.gmra.mxu0 %v672
      %v784 = vpop.f32.mrf.mxu0
      %v785 = vadd.f32 %v576, %v784
      %786 = vmatmul.f32.gmra.mxu0 %v675
      %v787 = vpop.f32.mrf.mxu0
      %v788 = vadd.f32 %v579, %v787
      %789 = vmatmul.f32.gmra.mxu0 %v678
      %v790 = vpop.f32.mrf.mxu0
      %v791 = vadd.f32 %v582, %v790
      %792 = vmatmul.f32.gmra.mxu0 %v681
      %v793 = vpop.f32.mrf.mxu0
      %v794 = vadd.f32 %v585, %v793
      %795 = vmatmul.f32.gmra.mxu0 %v684
      %v796 = vpop.f32.mrf.mxu0
      %v797 = vadd.f32 %v588, %v796
      %798 = vmatmul.f32.gmra.mxu0 %v687
      %v799 = vpop.f32.mrf.mxu0
      %v800 = vadd.f32 %v591, %v799
      %801 = vmatmul.f32.gmra.mxu0 %v690
      %v802 = vpop.f32.mrf.mxu0
      %v803 = vadd.f32 %v594, %v802
      %804 = vmatmul.f32.gmra.mxu0 %v693
      %v805 = vpop.f32.mrf.mxu0
      %v806 = vadd.f32 %v597, %v805
      %807 = vmatmul.f32.gmra.mxu0 %v696
      %v808 = vpop.f32.mrf.mxu0
      %v809 = vadd.f32 %v600, %v808
      %810 = vmatmul.f32.gmra.mxu0 %v699
      %v811 = vpop.f32.mrf.mxu0
      %v812 = vadd.f32 %v603, %v811
      %813 = vmatmul.f32.gmra.mxu0 %v702
      %v814 = vpop.f32.mrf.mxu0
      %v815 = vadd.f32 %v606, %v814
      %816 = vmatmul.f32.gmra.mxu0 %v705
      %v817 = vpop.f32.mrf.mxu0
      %v818 = vadd.f32 %v609, %v817
      %819 = vdwg.mxu0
      %s820 = scalar_lea.vmem [#allocation2], 32
      %v821 = vld [vmem:[%s820] sm:$0xff]
      %v822 = vld [vmem:[%s820 + $0x8] sm:$0xff]
      %v823 = vld [vmem:[%s820 + $0x10] sm:$0xff]
      %v824 = vld [vmem:[%s820 + $0x18] sm:$0xff]
      %v825 = vld [vmem:[%s820 + $0x20] sm:$0xff]
      %v826 = vld [vmem:[%s820 + $0x28] sm:$0xff]
      %v827 = vld [vmem:[%s820 + $0x30] sm:$0xff]
      %v828 = vld [vmem:[%s820 + $0x38] sm:$0xff]
      %v829 = vld [vmem:[%s820 + $0x40] sm:$0xff]
      %v830 = vld [vmem:[%s820 + $0x48] sm:$0xff]
      %v831 = vld [vmem:[%s820 + $0x50] sm:$0xff]
      %v832 = vld [vmem:[%s820 + $0x58] sm:$0xff]
      %v833 = vld [vmem:[%s820 + $0x60] sm:$0xff]
      %v834 = vld [vmem:[%s820 + $0x68] sm:$0xff]
      %v835 = vld [vmem:[%s820 + $0x70] sm:$0xff]
      %v836 = vld [vmem:[%s820 + $0x78] sm:$0xff]
      %v837 = vld [vmem:[%s820 + $0x80] sm:$0xff]
      %v838 = vld [vmem:[%s820 + $0x88] sm:$0xff]
      %v839 = vld [vmem:[%s820 + $0x90] sm:$0xff]
      %v840 = vld [vmem:[%s820 + $0x98] sm:$0xff]
      %v841 = vld [vmem:[%s820 + $0xa0] sm:$0xff]
      %v842 = vld [vmem:[%s820 + $0xa8] sm:$0xff]
      %v843 = vld [vmem:[%s820 + $0xb0] sm:$0xff]
      %v844 = vld [vmem:[%s820 + $0xb8] sm:$0xff]
      %v845 = vld [vmem:[%s820 + $0xc0] sm:$0xff]
      %v846 = vld [vmem:[%s820 + $0xc8] sm:$0xff]
      %v847 = vld [vmem:[%s820 + $0xd0] sm:$0xff]
      %v848 = vld [vmem:[%s820 + $0xd8] sm:$0xff]
      %v849 = vld [vmem:[%s820 + $0xe0] sm:$0xff]
      %v850 = vld [vmem:[%s820 + $0xe8] sm:$0xff]
      %v851 = vld [vmem:[%s820 + $0xf0] sm:$0xff]
      %v852 = vld [vmem:[%s820 + $0xf8] sm:$0xff]
      %s853 = scalar_lea.vmem %s1, 16
      %v854 = vld [vmem:[%s853] sm:$0xff]
      %v856 = vsel %vm296, %v821, 0
      %v859 = vsel %vm296, %v822, 0
      %v862 = vsel %vm296, %v823, 0
      %v865 = vsel %vm296, %v824, 0
      %v868 = vsel %vm296, %v825, 0
      %v871 = vsel %vm296, %v826, 0
      %v874 = vsel %vm296, %v827, 0
      %v877 = vsel %vm296, %v828, 0
      %v880 = vsel %vm296, %v829, 0
      %v883 = vsel %vm296, %v830, 0
      %v886 = vsel %vm296, %v831, 0
      %v889 = vsel %vm296, %v832, 0
      %v892 = vsel %vm296, %v833, 0
      %v895 = vsel %vm296, %v834, 0
      %v898 = vsel %vm296, %v835, 0
      %v901 = vsel %vm296, %v836, 0
      %v904 = vsel %vm296, %v837, 0
      %v907 = vsel %vm296, %v838, 0
      %v910 = vsel %vm296, %v839, 0
      %v913 = vsel %vm296, %v840, 0
      %v916 = vsel %vm296, %v841, 0
      %v919 = vsel %vm296, %v842, 0
      %v922 = vsel %vm296, %v843, 0
      %v925 = vsel %vm296, %v844, 0
      %v928 = vsel %vm296, %v845, 0
      %v931 = vsel %vm296, %v846, 0
      %v934 = vsel %vm296, %v847, 0
      %v937 = vsel %vm296, %v848, 0
      %v940 = vsel %vm296, %v849, 0
      %v943 = vsel %vm296, %v850, 0
      %v946 = vsel %vm296, %v851, 0
      %v949 = vsel %vm296, %v852, 0
      %951 = vmatpush.msra.mxu0 0.0
      %952 = vmatpush.msra.mxu0 0.0
      %953 = vmatpush.msra.mxu0 0.0
      %954 = vmatpush.msra.mxu0 0.0
      %955 = vmatpush.msra.mxu0 0.0
      %956 = vmatpush.msra.mxu0 0.0
      %957 = vmatpush.msra.mxu0 0.0
      %958 = vmatpush.msra.mxu0 0.0
      %959 = vmatpush.msra.mxu0 0.0
      %960 = vmatpush.msra.mxu0 0.0
      %961 = vmatpush.msra.mxu0 0.0
      %962 = vmatpush.msra.mxu0 0.0
      %963 = vmatpush.msra.mxu0 0.0
      %964 = vmatpush.msra.mxu0 0.0
      %965 = vmatpush.msra.mxu0 0.0
      %966 = vmatpush.msra.mxu0 %v854
      %967 = vmatmul.f32.gmra.mxu0 %v856
      %v968 = vpop.f32.mrf.mxu0
      %v969 = vadd.f32 0.0, %v968
      %970 = vmatmul.f32.gmra.mxu0 %v859
      %v971 = vpop.f32.mrf.mxu0
      %v972 = vadd.f32 0.0, %v971
      %973 = vmatmul.f32.gmra.mxu0 %v862
      %v974 = vpop.f32.mrf.mxu0
      %v975 = vadd.f32 0.0, %v974
      %976 = vmatmul.f32.gmra.mxu0 %v865
      %v977 = vpop.f32.mrf.mxu0
      %v978 = vadd.f32 0.0, %v977
      %979 = vmatmul.f32.gmra.mxu0 %v868
      %v980 = vpop.f32.mrf.mxu0
      %v981 = vadd.f32 0.0, %v980
      %982 = vmatmul.f32.gmra.mxu0 %v871
      %v983 = vpop.f32.mrf.mxu0
      %v984 = vadd.f32 0.0, %v983
      %985 = vmatmul.f32.gmra.mxu0 %v874
      %v986 = vpop.f32.mrf.mxu0
      %v987 = vadd.f32 0.0, %v986
      %988 = vmatmul.f32.gmra.mxu0 %v877
      %v989 = vpop.f32.mrf.mxu0
      %v990 = vadd.f32 0.0, %v989
      %991 = vmatmul.f32.gmra.mxu0 %v880
      %v992 = vpop.f32.mrf.mxu0
      %v993 = vadd.f32 0.0, %v992
      %994 = vmatmul.f32.gmra.mxu0 %v883
      %v995 = vpop.f32.mrf.mxu0
      %v996 = vadd.f32 0.0, %v995
      %997 = vmatmul.f32.gmra.mxu0 %v886
      %v998 = vpop.f32.mrf.mxu0
      %v999 = vadd.f32 0.0, %v998
      %1000 = vmatmul.f32.gmra.mxu0 %v889
      %v1001 = vpop.f32.mrf.mxu0
      %v1002 = vadd.f32 0.0, %v1001
      %1003 = vmatmul.f32.gmra.mxu0 %v892
      %v1004 = vpop.f32.mrf.mxu0
      %v1005 = vadd.f32 0.0, %v1004
      %1006 = vmatmul.f32.gmra.mxu0 %v895
      %v1007 = vpop.f32.mrf.mxu0
      %v1008 = vadd.f32 0.0, %v1007
      %1009 = vmatmul.f32.gmra.mxu0 %v898
      %v1010 = vpop.f32.mrf.mxu0
      %v1011 = vadd.f32 0.0, %v1010
      %1012 = vmatmul.f32.gmra.mxu0 %v901
      %v1013 = vpop.f32.mrf.mxu0
      %v1014 = vadd.f32 0.0, %v1013
      %1015 = vmatmul.f32.gmra.mxu0 %v904
      %v1016 = vpop.f32.mrf.mxu0
      %v1017 = vadd.f32 0.0, %v1016
      %1018 = vmatmul.f32.gmra.mxu0 %v907
      %v1019 = vpop.f32.mrf.mxu0
      %v1020 = vadd.f32 0.0, %v1019
      %1021 = vmatmul.f32.gmra.mxu0 %v910
      %v1022 = vpop.f32.mrf.mxu0
      %v1023 = vadd.f32 0.0, %v1022
      %1024 = vmatmul.f32.gmra.mxu0 %v913
      %v1025 = vpop.f32.mrf.mxu0
      %v1026 = vadd.f32 0.0, %v1025
      %1027 = vmatmul.f32.gmra.mxu0 %v916
      %v1028 = vpop.f32.mrf.mxu0
      %v1029 = vadd.f32 0.0, %v1028
      %1030 = vmatmul.f32.gmra.mxu0 %v919
      %v1031 = vpop.f32.mrf.mxu0
      %v1032 = vadd.f32 0.0, %v1031
      %1033 = vmatmul.f32.gmra.mxu0 %v922
      %v1034 = vpop.f32.mrf.mxu0
      %v1035 = vadd.f32 0.0, %v1034
      %1036 = vmatmul.f32.gmra.mxu0 %v925
      %v1037 = vpop.f32.mrf.mxu0
      %v1038 = vadd.f32 0.0, %v1037
      %1039 = vmatmul.f32.gmra.mxu0 %v928
      %v1040 = vpop.f32.mrf.mxu0
      %v1041 = vadd.f32 0.0, %v1040
      %1042 = vmatmul.f32.gmra.mxu0 %v931
      %v1043 = vpop.f32.mrf.mxu0
      %v1044 = vadd.f32 0.0, %v1043
      %1045 = vmatmul.f32.gmra.mxu0 %v934
      %v1046 = vpop.f32.mrf.mxu0
      %v1047 = vadd.f32 0.0, %v1046
      %1048 = vmatmul.f32.gmra.mxu0 %v937
      %v1049 = vpop.f32.mrf.mxu0
      %v1050 = vadd.f32 0.0, %v1049
      %1051 = vmatmul.f32.gmra.mxu0 %v940
      %v1052 = vpop.f32.mrf.mxu0
      %v1053 = vadd.f32 0.0, %v1052
      %1054 = vmatmul.f32.gmra.mxu0 %v943
      %v1055 = vpop.f32.mrf.mxu0
      %v1056 = vadd.f32 0.0, %v1055
      %1057 = vmatmul.f32.gmra.mxu0 %v946
      %v1058 = vpop.f32.mrf.mxu0
      %v1059 = vadd.f32 0.0, %v1058
      %1060 = vmatmul.f32.gmra.mxu0 %v949
      %v1061 = vpop.f32.mrf.mxu0
      %v1062 = vadd.f32 0.0, %v1061
      %1063 = vdwg.mxu0
      %v1064 = vadd.f32 %v725, %v969
      %v1065 = vadd.f32 %v728, %v972
      %v1066 = vadd.f32 %v731, %v975
      %v1067 = vadd.f32 %v734, %v978
      %v1068 = vadd.f32 %v737, %v981
      %v1069 = vadd.f32 %v740, %v984
      %v1070 = vadd.f32 %v743, %v987
      %v1071 = vadd.f32 %v746, %v990
      %v1072 = vadd.f32 %v749, %v993
      %v1073 = vadd.f32 %v752, %v996
      %v1074 = vadd.f32 %v755, %v999
      %v1075 = vadd.f32 %v758, %v1002
      %v1076 = vadd.f32 %v761, %v1005
      %v1077 = vadd.f32 %v764, %v1008
      %v1078 = vadd.f32 %v767, %v1011
      %v1079 = vadd.f32 %v770, %v1014
      %v1080 = vadd.f32 %v773, %v1017
      %v1081 = vadd.f32 %v776, %v1020
      %v1082 = vadd.f32 %v779, %v1023
      %v1083 = vadd.f32 %v782, %v1026
      %v1084 = vadd.f32 %v785, %v1029
      %v1085 = vadd.f32 %v788, %v1032
      %v1086 = vadd.f32 %v791, %v1035
      %v1087 = vadd.f32 %v794, %v1038
      %v1088 = vadd.f32 %v797, %v1041
      %v1089 = vadd.f32 %v800, %v1044
      %v1090 = vadd.f32 %v803, %v1047
      %v1091 = vadd.f32 %v806, %v1050
      %v1092 = vadd.f32 %v809, %v1053
      %v1093 = vadd.f32 %v812, %v1056
      %v1094 = vadd.f32 %v815, %v1059
      %v1095 = vadd.f32 %v818, %v1062
      %v1097 = vperm.slane %v295, 0
      %v1099 = vadd.f32 %v1064, %v1097
      %v1100 = vadd.f32 %v1065, %v1097
      %v1101 = vadd.f32 %v1066, %v1097
      %v1102 = vadd.f32 %v1067, %v1097
      %v1103 = vadd.f32 %v1068, %v1097
      %v1104 = vadd.f32 %v1069, %v1097
      %v1105 = vadd.f32 %v1070, %v1097
      %v1106 = vadd.f32 %v1071, %v1097
      %v1107 = vadd.f32 %v1072, %v1097
      %v1108 = vadd.f32 %v1073, %v1097
      %v1109 = vadd.f32 %v1074, %v1097
      %v1110 = vadd.f32 %v1075, %v1097
      %v1111 = vadd.f32 %v1076, %v1097
      %v1112 = vadd.f32 %v1077, %v1097
      %v1113 = vadd.f32 %v1078, %v1097
      %v1114 = vadd.f32 %v1079, %v1097
      %v1115 = vadd.f32 %v1080, %v1097
      %v1116 = vadd.f32 %v1081, %v1097
      %v1117 = vadd.f32 %v1082, %v1097
      %v1118 = vadd.f32 %v1083, %v1097
      %v1119 = vadd.f32 %v1084, %v1097
      %v1120 = vadd.f32 %v1085, %v1097
      %v1121 = vadd.f32 %v1086, %v1097
      %v1122 = vadd.f32 %v1087, %v1097
      %v1123 = vadd.f32 %v1088, %v1097
      %v1124 = vadd.f32 %v1089, %v1097
      %v1125 = vadd.f32 %v1090, %v1097
      %v1126 = vadd.f32 %v1091, %v1097
      %v1127 = vadd.f32 %v1092, %v1097
      %v1128 = vadd.f32 %v1093, %v1097
      %v1129 = vadd.f32 %v1094, %v1097
      %v1130 = vadd.f32 %v1095, %v1097
      %v1131 = vmax.f32 %v1099, 0.0
      %v1132 = vmax.f32 %v1100, 0.0
      %v1133 = vmax.f32 %v1101, 0.0
      %v1134 = vmax.f32 %v1102, 0.0
      %v1135 = vmax.f32 %v1103, 0.0
      %v1136 = vmax.f32 %v1104, 0.0
      %v1137 = vmax.f32 %v1105, 0.0
      %v1138 = vmax.f32 %v1106, 0.0
      %v1139 = vmax.f32 %v1107, 0.0
      %v1140 = vmax.f32 %v1108, 0.0
      %v1141 = vmax.f32 %v1109, 0.0
      %v1142 = vmax.f32 %v1110, 0.0
      %v1143 = vmax.f32 %v1111, 0.0
      %v1144 = vmax.f32 %v1112, 0.0
      %v1145 = vmax.f32 %v1113, 0.0
      %v1146 = vmax.f32 %v1114, 0.0
      %v1147 = vmax.f32 %v1115, 0.0
      %v1148 = vmax.f32 %v1116, 0.0
      %v1149 = vmax.f32 %v1117, 0.0
      %v1150 = vmax.f32 %v1118, 0.0
      %v1151 = vmax.f32 %v1119, 0.0
      %v1152 = vmax.f32 %v1120, 0.0
      %v1153 = vmax.f32 %v1121, 0.0
      %v1154 = vmax.f32 %v1122, 0.0
      %v1155 = vmax.f32 %v1123, 0.0
      %v1156 = vmax.f32 %v1124, 0.0
      %v1157 = vmax.f32 %v1125, 0.0
      %v1158 = vmax.f32 %v1126, 0.0
      %v1159 = vmax.f32 %v1127, 0.0
      %v1160 = vmax.f32 %v1128, 0.0
      %v1161 = vmax.f32 %v1129, 0.0
      %v1162 = vmax.f32 %v1130, 0.0
      %v1163 = vld [vmem:[%s4] sm:$0x1]
      %vm1164 = vcmask 57344
      %1165 = vst.msk [vmem:[#allocation3] sm:$0x1] %vm1164, 0.0
      %1166 = vst.msk [vmem:[#allocation3 + $0x18] sm:$0x1] %vm1164, 0.0
      %1167 = vst.msk [vmem:[#allocation3 + $0x30] sm:$0x1] %vm1164, 0.0
      %1168 = vst.msk [vmem:[#allocation3 + $0x48] sm:$0x1] %vm1164, 0.0
      %1169 = vst.msk [vmem:[#allocation3 + $0x60] sm:$0x1] %vm1164, 0.0
      %1170 = vst.msk [vmem:[#allocation3 + $0x78] sm:$0x1] %vm1164, 0.0
      %1171 = vst.msk [vmem:[#allocation3 + $0x90] sm:$0x1] %vm1164, 0.0
      %1172 = vst.msk [vmem:[#allocation3 + $0xa8] sm:$0x1] %vm1164, 0.0
      %1173 = vst.msk [vmem:[#allocation3 + $0xc0] sm:$0x1] %vm1164, 0.0
      %1174 = vst.msk [vmem:[#allocation3 + $0xd8] sm:$0x1] %vm1164, 0.0
      %1175 = vst.msk [vmem:[#allocation3 + $0xf0] sm:$0x1] %vm1164, 0.0
      %1176 = vst.msk [vmem:[#allocation3 + $0x108] sm:$0x1] %vm1164, 0.0
      %1177 = vst.msk [vmem:[#allocation3 + $0x120] sm:$0x1] %vm1164, 0.0
      %1178 = vst.msk [vmem:[#allocation3 + $0x138] sm:$0x1] %vm1164, 0.0
      %1179 = vst.msk [vmem:[#allocation3 + $0x150] sm:$0x1] %vm1164, 0.0
      %1180 = vst.msk [vmem:[#allocation3 + $0x168] sm:$0x1] %vm1164, 0.0
      %1181 = vst.msk [vmem:[#allocation3 + $0x11] sm:$0x1] %vm1164, 0.0
      %1182 = vst.msk [vmem:[#allocation3 + $0x29] sm:$0x1] %vm1164, 0.0
      %1183 = vst.msk [vmem:[#allocation3 + $0x41] sm:$0x1] %vm1164, 0.0
      %1184 = vst.msk [vmem:[#allocation3 + $0x59] sm:$0x1] %vm1164, 0.0
      %1185 = vst.msk [vmem:[#allocation3 + $0x71] sm:$0x1] %vm1164, 0.0
      %1186 = vst.msk [vmem:[#allocation3 + $0x89] sm:$0x1] %vm1164, 0.0
      %1187 = vst.msk [vmem:[#allocation3 + $0xa1] sm:$0x1] %vm1164, 0.0
      %1188 = vst.msk [vmem:[#allocation3 + $0xb9] sm:$0x1] %vm1164, 0.0
      %1189 = vst.msk [vmem:[#allocation3 + $0xd1] sm:$0x1] %vm1164, 0.0
      %1190 = vst.msk [vmem:[#allocation3 + $0xe9] sm:$0x1] %vm1164, 0.0
      %1191 = vst.msk [vmem:[#allocation3 + $0x101] sm:$0x1] %vm1164, 0.0
      %1192 = vst.msk [vmem:[#allocation3 + $0x119] sm:$0x1] %vm1164, 0.0
      %1193 = vst.msk [vmem:[#allocation3 + $0x131] sm:$0x1] %vm1164, 0.0
      %1194 = vst.msk [vmem:[#allocation3 + $0x149] sm:$0x1] %vm1164, 0.0
      %1195 = vst.msk [vmem:[#allocation3 + $0x161] sm:$0x1] %vm1164, 0.0
      %1196 = vst.msk [vmem:[#allocation3 + $0x179] sm:$0x1] %vm1164, 0.0
      %1197 = vst.msk [vmem:[#allocation3 + $0x1] sm:$0xff] %vm296, %v1131
      %1198 = vst.msk [vmem:[#allocation3 + $0x9] sm:$0xff] %vm296, %v1132
      %1199 = vst.msk [vmem:[#allocation3 + $0x19] sm:$0xff] %vm296, %v1133
      %1200 = vst.msk [vmem:[#allocation3 + $0x21] sm:$0xff] %vm296, %v1134
      %1201 = vst.msk [vmem:[#allocation3 + $0x31] sm:$0xff] %vm296, %v1135
      %1202 = vst.msk [vmem:[#allocation3 + $0x39] sm:$0xff] %vm296, %v1136
      %1203 = vst.msk [vmem:[#allocation3 + $0x49] sm:$0xff] %vm296, %v1137
      %1204 = vst.msk [vmem:[#allocation3 + $0x51] sm:$0xff] %vm296, %v1138
      %1205 = vst.msk [vmem:[#allocation3 + $0x61] sm:$0xff] %vm296, %v1139
      %1206 = vst.msk [vmem:[#allocation3 + $0x69] sm:$0xff] %vm296, %v1140
      %1207 = vst.msk [vmem:[#allocation3 + $0x79] sm:$0xff] %vm296, %v1141
      %1208 = vst.msk [vmem:[#allocation3 + $0x81] sm:$0xff] %vm296, %v1142
      %1209 = vst.msk [vmem:[#allocation3 + $0x91] sm:$0xff] %vm296, %v1143
      %1210 = vst.msk [vmem:[#allocation3 + $0x99] sm:$0xff] %vm296, %v1144
      %1211 = vst.msk [vmem:[#allocation3 + $0xa9] sm:$0xff] %vm296, %v1145
      %1212 = vst.msk [vmem:[#allocation3 + $0xb1] sm:$0xff] %vm296, %v1146
      %1213 = vst.msk [vmem:[#allocation3 + $0xc1] sm:$0xff] %vm296, %v1147
      %1214 = vst.msk [vmem:[#allocation3 + $0xc9] sm:$0xff] %vm296, %v1148
      %1215 = vst.msk [vmem:[#allocation3 + $0xd9] sm:$0xff] %vm296, %v1149
      %1216 = vst.msk [vmem:[#allocation3 + $0xe1] sm:$0xff] %vm296, %v1150
      %1217 = vst.msk [vmem:[#allocation3 + $0xf1] sm:$0xff] %vm296, %v1151
      %1218 = vst.msk [vmem:[#allocation3 + $0xf9] sm:$0xff] %vm296, %v1152
      %1219 = vst.msk [vmem:[#allocation3 + $0x109] sm:$0xff] %vm296, %v1153
      %1220 = vst.msk [vmem:[#allocation3 + $0x111] sm:$0xff] %vm296, %v1154
      %1221 = vst.msk [vmem:[#allocation3 + $0x121] sm:$0xff] %vm296, %v1155
      %1222 = vst.msk [vmem:[#allocation3 + $0x129] sm:$0xff] %vm296, %v1156
      %1223 = vst.msk [vmem:[#allocation3 + $0x139] sm:$0xff] %vm296, %v1157
      %1224 = vst.msk [vmem:[#allocation3 + $0x141] sm:$0xff] %vm296, %v1158
      %1225 = vst.msk [vmem:[#allocation3 + $0x151] sm:$0xff] %vm296, %v1159
      %1226 = vst.msk [vmem:[#allocation3 + $0x159] sm:$0xff] %vm296, %v1160
      %1227 = vst.msk [vmem:[#allocation3 + $0x169] sm:$0xff] %vm296, %v1161
      %1228 = vst.msk [vmem:[#allocation3 + $0x171] sm:$0xff] %vm296, %v1162
      %v1229 = vld [vmem:[#allocation3] sm:$0xff]
      %v1230 = vld [vmem:[#allocation3 + $0x8] sm:$0xff]
      %v1231 = vld [vmem:[#allocation3 + $0x18] sm:$0xff]
      %v1232 = vld [vmem:[#allocation3 + $0x20] sm:$0xff]
      %v1233 = vld [vmem:[#allocation3 + $0x30] sm:$0xff]
      %v1234 = vld [vmem:[#allocation3 + $0x38] sm:$0xff]
      %v1235 = vld [vmem:[#allocation3 + $0x48] sm:$0xff]
      %v1236 = vld [vmem:[#allocation3 + $0x50] sm:$0xff]
      %v1237 = vld [vmem:[#allocation3 + $0x60] sm:$0xff]
      %v1238 = vld [vmem:[#allocation3 + $0x68] sm:$0xff]
      %v1239 = vld [vmem:[#allocation3 + $0x78] sm:$0xff]
      %v1240 = vld [vmem:[#allocation3 + $0x80] sm:$0xff]
      %v1241 = vld [vmem:[#allocation3 + $0x90] sm:$0xff]
      %v1242 = vld [vmem:[#allocation3 + $0x98] sm:$0xff]
      %v1243 = vld [vmem:[#allocation3 + $0xa8] sm:$0xff]
      %v1244 = vld [vmem:[#allocation3 + $0xb0] sm:$0xff]
      %v1245 = vld [vmem:[#allocation3 + $0xc0] sm:$0xff]
      %v1246 = vld [vmem:[#allocation3 + $0xc8] sm:$0xff]
      %v1247 = vld [vmem:[#allocation3 + $0xd8] sm:$0xff]
      %v1248 = vld [vmem:[#allocation3 + $0xe0] sm:$0xff]
      %v1249 = vld [vmem:[#allocation3 + $0xf0] sm:$0xff]
      %v1250 = vld [vmem:[#allocation3 + $0xf8] sm:$0xff]
      %v1251 = vld [vmem:[#allocation3 + $0x108] sm:$0xff]
      %v1252 = vld [vmem:[#allocation3 + $0x110] sm:$0xff]
      %v1253 = vld [vmem:[#allocation3 + $0x120] sm:$0xff]
      %v1254 = vld [vmem:[#allocation3 + $0x128] sm:$0xff]
      %v1255 = vld [vmem:[#allocation3 + $0x138] sm:$0xff]
      %v1256 = vld [vmem:[#allocation3 + $0x140] sm:$0xff]
      %v1257 = vld [vmem:[#allocation3 + $0x150] sm:$0xff]
      %v1258 = vld [vmem:[#allocation3 + $0x158] sm:$0xff]
      %v1259 = vld [vmem:[#allocation3 + $0x168] sm:$0xff]
      %v1260 = vld [vmem:[#allocation3 + $0x170] sm:$0xff]
      %v1261 = vld [vmem:[%s3] sm:$0xff]
      %v1262 = vld [vmem:[#allocation3 + $0x1] sm:$0xff]
      %v1263 = vld [vmem:[#allocation3 + $0x9] sm:$0xff]
      %v1264 = vld [vmem:[#allocation3 + $0x19] sm:$0xff]
      %v1265 = vld [vmem:[#allocation3 + $0x21] sm:$0xff]
      %v1266 = vld [vmem:[#allocation3 + $0x31] sm:$0xff]
      %v1267 = vld [vmem:[#allocation3 + $0x39] sm:$0xff]
      %v1268 = vld [vmem:[#allocation3 + $0x49] sm:$0xff]
      %v1269 = vld [vmem:[#allocation3 + $0x51] sm:$0xff]
      %v1270 = vld [vmem:[#allocation3 + $0x61] sm:$0xff]
      %v1271 = vld [vmem:[#allocation3 + $0x69] sm:$0xff]
      %v1272 = vld [vmem:[#allocation3 + $0x79] sm:$0xff]
      %v1273 = vld [vmem:[#allocation3 + $0x81] sm:$0xff]
      %v1274 = vld [vmem:[#allocation3 + $0x91] sm:$0xff]
      %v1275 = vld [vmem:[#allocation3 + $0x99] sm:$0xff]
      %v1276 = vld [vmem:[#allocation3 + $0xa9] sm:$0xff]
      %v1277 = vld [vmem:[#allocation3 + $0xb1] sm:$0xff]
      %v1278 = vld [vmem:[#allocation3 + $0xc1] sm:$0xff]
      %v1279 = vld [vmem:[#allocation3 + $0xc9] sm:$0xff]
      %v1280 = vld [vmem:[#allocation3 + $0xd9] sm:$0xff]
      %v1281 = vld [vmem:[#allocation3 + $0xe1] sm:$0xff]
      %v1282 = vld [vmem:[#allocation3 + $0xf1] sm:$0xff]
      %v1283 = vld [vmem:[#allocation3 + $0xf9] sm:$0xff]
      %v1284 = vld [vmem:[#allocation3 + $0x109] sm:$0xff]
      %v1285 = vld [vmem:[#allocation3 + $0x111] sm:$0xff]
      %v1286 = vld [vmem:[#allocation3 + $0x121] sm:$0xff]
      %v1287 = vld [vmem:[#allocation3 + $0x129] sm:$0xff]
      %v1288 = vld [vmem:[#allocation3 + $0x139] sm:$0xff]
      %v1289 = vld [vmem:[#allocation3 + $0x141] sm:$0xff]
      %v1290 = vld [vmem:[#allocation3 + $0x151] sm:$0xff]
      %v1291 = vld [vmem:[#allocation3 + $0x159] sm:$0xff]
      %v1292 = vld [vmem:[#allocation3 + $0x169] sm:$0xff]
      %v1293 = vld [vmem:[#allocation3 + $0x171] sm:$0xff]
      %s1294 = scalar_lea.vmem %s3, 8
      %v1295 = vld [vmem:[%s1294] sm:$0xff]
      %v1297 = vsel %vm296, %v1262, 0
      %v1300 = vsel %vm296, %v1263, 0
      %v1303 = vsel %vm296, %v1264, 0
      %v1306 = vsel %vm296, %v1265, 0
      %v1309 = vsel %vm296, %v1266, 0
      %v1312 = vsel %vm296, %v1267, 0
      %v1315 = vsel %vm296, %v1268, 0
      %v1318 = vsel %vm296, %v1269, 0
      %v1321 = vsel %vm296, %v1270, 0
      %v1324 = vsel %vm296, %v1271, 0
      %v1327 = vsel %vm296, %v1272, 0
      %v1330 = vsel %vm296, %v1273, 0
      %v1333 = vsel %vm296, %v1274, 0
      %v1336 = vsel %vm296, %v1275, 0
      %v1339 = vsel %vm296, %v1276, 0
      %v1342 = vsel %vm296, %v1277, 0
      %v1345 = vsel %vm296, %v1278, 0
      %v1348 = vsel %vm296, %v1279, 0
      %v1351 = vsel %vm296, %v1280, 0
      %v1354 = vsel %vm296, %v1281, 0
      %v1357 = vsel %vm296, %v1282, 0
      %v1360 = vsel %vm296, %v1283, 0
      %v1363 = vsel %vm296, %v1284, 0
      %v1366 = vsel %vm296, %v1285, 0
      %v1369 = vsel %vm296, %v1286, 0
      %v1372 = vsel %vm296, %v1287, 0
      %v1375 = vsel %vm296, %v1288, 0
      %v1378 = vsel %vm296, %v1289, 0
      %v1381 = vsel %vm296, %v1290, 0
      %v1384 = vsel %vm296, %v1291, 0
      %v1387 = vsel %vm296, %v1292, 0
      %v1390 = vsel %vm296, %v1293, 0
      %1392 = vmatpush.msra.mxu0 0.0
      %1393 = vmatpush.msra.mxu0 0.0
      %1394 = vmatpush.msra.mxu0 0.0
      %1395 = vmatpush.msra.mxu0 0.0
      %1396 = vmatpush.msra.mxu0 0.0
      %1397 = vmatpush.msra.mxu0 0.0
      %1398 = vmatpush.msra.mxu0 0.0
      %1399 = vmatpush.msra.mxu0 0.0
      %1400 = vmatpush.msra.mxu0 0.0
      %1401 = vmatpush.msra.mxu0 0.0
      %1402 = vmatpush.msra.mxu0 0.0
      %1403 = vmatpush.msra.mxu0 0.0
      %1404 = vmatpush.msra.mxu0 0.0
      %1405 = vmatpush.msra.mxu0 0.0
      %1406 = vmatpush.msra.mxu0 0.0
      %1407 = vmatpush.msra.mxu0 %v1295
      %1408 = vmatmul.f32.gmra.mxu0 %v1297
      %v1409 = vpop.f32.mrf.mxu0
      %v1410 = vadd.f32 0.0, %v1409
      %1411 = vmatmul.f32.gmra.mxu0 %v1300
      %v1412 = vpop.f32.mrf.mxu0
      %v1413 = vadd.f32 0.0, %v1412
      %1414 = vmatmul.f32.gmra.mxu0 %v1303
      %v1415 = vpop.f32.mrf.mxu0
      %v1416 = vadd.f32 0.0, %v1415
      %1417 = vmatmul.f32.gmra.mxu0 %v1306
      %v1418 = vpop.f32.mrf.mxu0
      %v1419 = vadd.f32 0.0, %v1418
      %1420 = vmatmul.f32.gmra.mxu0 %v1309
      %v1421 = vpop.f32.mrf.mxu0
      %v1422 = vadd.f32 0.0, %v1421
      %1423 = vmatmul.f32.gmra.mxu0 %v1312
      %v1424 = vpop.f32.mrf.mxu0
      %v1425 = vadd.f32 0.0, %v1424
      %1426 = vmatmul.f32.gmra.mxu0 %v1315
      %v1427 = vpop.f32.mrf.mxu0
      %v1428 = vadd.f32 0.0, %v1427
      %1429 = vmatmul.f32.gmra.mxu0 %v1318
      %v1430 = vpop.f32.mrf.mxu0
      %v1431 = vadd.f32 0.0, %v1430
      %1432 = vmatmul.f32.gmra.mxu0 %v1321
      %v1433 = vpop.f32.mrf.mxu0
      %v1434 = vadd.f32 0.0, %v1433
      %1435 = vmatmul.f32.gmra.mxu0 %v1324
      %v1436 = vpop.f32.mrf.mxu0
      %v1437 = vadd.f32 0.0, %v1436
      %1438 = vmatmul.f32.gmra.mxu0 %v1327
      %v1439 = vpop.f32.mrf.mxu0
      %v1440 = vadd.f32 0.0, %v1439
      %1441 = vmatmul.f32.gmra.mxu0 %v1330
      %v1442 = vpop.f32.mrf.mxu0
      %v1443 = vadd.f32 0.0, %v1442
      %1444 = vmatmul.f32.gmra.mxu0 %v1333
      %v1445 = vpop.f32.mrf.mxu0
      %v1446 = vadd.f32 0.0, %v1445
      %1447 = vmatmul.f32.gmra.mxu0 %v1336
      %v1448 = vpop.f32.mrf.mxu0
      %v1449 = vadd.f32 0.0, %v1448
      %1450 = vmatmul.f32.gmra.mxu0 %v1339
      %v1451 = vpop.f32.mrf.mxu0
      %v1452 = vadd.f32 0.0, %v1451
      %1453 = vmatmul.f32.gmra.mxu0 %v1342
      %v1454 = vpop.f32.mrf.mxu0
      %v1455 = vadd.f32 0.0, %v1454
      %1456 = vmatmul.f32.gmra.mxu0 %v1345
      %v1457 = vpop.f32.mrf.mxu0
      %v1458 = vadd.f32 0.0, %v1457
      %1459 = vmatmul.f32.gmra.mxu0 %v1348
      %v1460 = vpop.f32.mrf.mxu0
      %v1461 = vadd.f32 0.0, %v1460
      %1462 = vmatmul.f32.gmra.mxu0 %v1351
      %v1463 = vpop.f32.mrf.mxu0
      %v1464 = vadd.f32 0.0, %v1463
      %1465 = vmatmul.f32.gmra.mxu0 %v1354
      %v1466 = vpop.f32.mrf.mxu0
      %v1467 = vadd.f32 0.0, %v1466
      %1468 = vmatmul.f32.gmra.mxu0 %v1357
      %v1469 = vpop.f32.mrf.mxu0
      %v1470 = vadd.f32 0.0, %v1469
      %1471 = vmatmul.f32.gmra.mxu0 %v1360
      %v1472 = vpop.f32.mrf.mxu0
      %v1473 = vadd.f32 0.0, %v1472
      %1474 = vmatmul.f32.gmra.mxu0 %v1363
      %v1475 = vpop.f32.mrf.mxu0
      %v1476 = vadd.f32 0.0, %v1475
      %1477 = vmatmul.f32.gmra.mxu0 %v1366
      %v1478 = vpop.f32.mrf.mxu0
      %v1479 = vadd.f32 0.0, %v1478
      %1480 = vmatmul.f32.gmra.mxu0 %v1369
      %v1481 = vpop.f32.mrf.mxu0
      %v1482 = vadd.f32 0.0, %v1481
      %1483 = vmatmul.f32.gmra.mxu0 %v1372
      %v1484 = vpop.f32.mrf.mxu0
      %v1485 = vadd.f32 0.0, %v1484
      %1486 = vmatmul.f32.gmra.mxu0 %v1375
      %v1487 = vpop.f32.mrf.mxu0
      %v1488 = vadd.f32 0.0, %v1487
      %1489 = vmatmul.f32.gmra.mxu0 %v1378
      %v1490 = vpop.f32.mrf.mxu0
      %v1491 = vadd.f32 0.0, %v1490
      %1492 = vmatmul.f32.gmra.mxu0 %v1381
      %v1493 = vpop.f32.mrf.mxu0
      %v1494 = vadd.f32 0.0, %v1493
      %1495 = vmatmul.f32.gmra.mxu0 %v1384
      %v1496 = vpop.f32.mrf.mxu0
      %v1497 = vadd.f32 0.0, %v1496
      %1498 = vmatmul.f32.gmra.mxu0 %v1387
      %v1499 = vpop.f32.mrf.mxu0
      %v1500 = vadd.f32 0.0, %v1499
      %1501 = vmatmul.f32.gmra.mxu0 %v1390
      %v1502 = vpop.f32.mrf.mxu0
      %v1503 = vadd.f32 0.0, %v1502
      %1504 = vdwg.mxu0
      %v1506 = vsel %vm296, %v1229, 0
      %v1509 = vsel %vm296, %v1230, 0
      %v1512 = vsel %vm296, %v1231, 0
      %v1515 = vsel %vm296, %v1232, 0
      %v1518 = vsel %vm296, %v1233, 0
      %v1521 = vsel %vm296, %v1234, 0
      %v1524 = vsel %vm296, %v1235, 0
      %v1527 = vsel %vm296, %v1236, 0
      %v1530 = vsel %vm296, %v1237, 0
      %v1533 = vsel %vm296, %v1238, 0
      %v1536 = vsel %vm296, %v1239, 0
      %v1539 = vsel %vm296, %v1240, 0
      %v1542 = vsel %vm296, %v1241, 0
      %v1545 = vsel %vm296, %v1242, 0
      %v1548 = vsel %vm296, %v1243, 0
      %v1551 = vsel %vm296, %v1244, 0
      %v1554 = vsel %vm296, %v1245, 0
      %v1557 = vsel %vm296, %v1246, 0
      %v1560 = vsel %vm296, %v1247, 0
      %v1563 = vsel %vm296, %v1248, 0
      %v1566 = vsel %vm296, %v1249, 0
      %v1569 = vsel %vm296, %v1250, 0
      %v1572 = vsel %vm296, %v1251, 0
      %v1575 = vsel %vm296, %v1252, 0
      %v1578 = vsel %vm296, %v1253, 0
      %v1581 = vsel %vm296, %v1254, 0
      %v1584 = vsel %vm296, %v1255, 0
      %v1587 = vsel %vm296, %v1256, 0
      %v1590 = vsel %vm296, %v1257, 0
      %v1593 = vsel %vm296, %v1258, 0
      %v1596 = vsel %vm296, %v1259, 0
      %v1599 = vsel %vm296, %v1260, 0
      %1601 = vmatpush.msra.mxu0 0.0
      %1602 = vmatpush.msra.mxu0 0.0
      %1603 = vmatpush.msra.mxu0 0.0
      %1604 = vmatpush.msra.mxu0 0.0
      %1605 = vmatpush.msra.mxu0 0.0
      %1606 = vmatpush.msra.mxu0 0.0
      %1607 = vmatpush.msra.mxu0 0.0
      %1608 = vmatpush.msra.mxu0 0.0
      %1609 = vmatpush.msra.mxu0 0.0
      %1610 = vmatpush.msra.mxu0 0.0
      %1611 = vmatpush.msra.mxu0 0.0
      %1612 = vmatpush.msra.mxu0 0.0
      %1613 = vmatpush.msra.mxu0 0.0
      %1614 = vmatpush.msra.mxu0 0.0
      %1615 = vmatpush.msra.mxu0 0.0
      %1616 = vmatpush.msra.mxu0 %v1261
      %1617 = vmatmul.f32.gmra.mxu0 %v1506
      %v1618 = vpop.f32.mrf.mxu0
      %v1619 = vadd.f32 %v1410, %v1618
      %1620 = vmatmul.f32.gmra.mxu0 %v1509
      %v1621 = vpop.f32.mrf.mxu0
      %v1622 = vadd.f32 %v1413, %v1621
      %1623 = vmatmul.f32.gmra.mxu0 %v1512
      %v1624 = vpop.f32.mrf.mxu0
      %v1625 = vadd.f32 %v1416, %v1624
      %1626 = vmatmul.f32.gmra.mxu0 %v1515
      %v1627 = vpop.f32.mrf.mxu0
      %v1628 = vadd.f32 %v1419, %v1627
      %1629 = vmatmul.f32.gmra.mxu0 %v1518
      %v1630 = vpop.f32.mrf.mxu0
      %v1631 = vadd.f32 %v1422, %v1630
      %1632 = vmatmul.f32.gmra.mxu0 %v1521
      %v1633 = vpop.f32.mrf.mxu0
      %v1634 = vadd.f32 %v1425, %v1633
      %1635 = vmatmul.f32.gmra.mxu0 %v1524
      %v1636 = vpop.f32.mrf.mxu0
      %v1637 = vadd.f32 %v1428, %v1636
      %1638 = vmatmul.f32.gmra.mxu0 %v1527
      %v1639 = vpop.f32.mrf.mxu0
      %v1640 = vadd.f32 %v1431, %v1639
      %1641 = vmatmul.f32.gmra.mxu0 %v1530
      %v1642 = vpop.f32.mrf.mxu0
      %v1643 = vadd.f32 %v1434, %v1642
      %1644 = vmatmul.f32.gmra.mxu0 %v1533
      %v1645 = vpop.f32.mrf.mxu0
      %v1646 = vadd.f32 %v1437, %v1645
      %1647 = vmatmul.f32.gmra.mxu0 %v1536
      %v1648 = vpop.f32.mrf.mxu0
      %v1649 = vadd.f32 %v1440, %v1648
      %1650 = vmatmul.f32.gmra.mxu0 %v1539
      %v1651 = vpop.f32.mrf.mxu0
      %v1652 = vadd.f32 %v1443, %v1651
      %1653 = vmatmul.f32.gmra.mxu0 %v1542
      %v1654 = vpop.f32.mrf.mxu0
      %v1655 = vadd.f32 %v1446, %v1654
      %1656 = vmatmul.f32.gmra.mxu0 %v1545
      %v1657 = vpop.f32.mrf.mxu0
      %v1658 = vadd.f32 %v1449, %v1657
      %1659 = vmatmul.f32.gmra.mxu0 %v1548
      %v1660 = vpop.f32.mrf.mxu0
      %v1661 = vadd.f32 %v1452, %v1660
      %1662 = vmatmul.f32.gmra.mxu0 %v1551
      %v1663 = vpop.f32.mrf.mxu0
      %v1664 = vadd.f32 %v1455, %v1663
      %1665 = vmatmul.f32.gmra.mxu0 %v1554
      %v1666 = vpop.f32.mrf.mxu0
      %v1667 = vadd.f32 %v1458, %v1666
      %1668 = vmatmul.f32.gmra.mxu0 %v1557
      %v1669 = vpop.f32.mrf.mxu0
      %v1670 = vadd.f32 %v1461, %v1669
      %1671 = vmatmul.f32.gmra.mxu0 %v1560
      %v1672 = vpop.f32.mrf.mxu0
      %v1673 = vadd.f32 %v1464, %v1672
      %1674 = vmatmul.f32.gmra.mxu0 %v1563
      %v1675 = vpop.f32.mrf.mxu0
      %v1676 = vadd.f32 %v1467, %v1675
      %1677 = vmatmul.f32.gmra.mxu0 %v1566
      %v1678 = vpop.f32.mrf.mxu0
      %v1679 = vadd.f32 %v1470, %v1678
      %1680 = vmatmul.f32.gmra.mxu0 %v1569
      %v1681 = vpop.f32.mrf.mxu0
      %v1682 = vadd.f32 %v1473, %v1681
      %1683 = vmatmul.f32.gmra.mxu0 %v1572
      %v1684 = vpop.f32.mrf.mxu0
      %v1685 = vadd.f32 %v1476, %v1684
      %1686 = vmatmul.f32.gmra.mxu0 %v1575
      %v1687 = vpop.f32.mrf.mxu0
      %v1688 = vadd.f32 %v1479, %v1687
      %1689 = vmatmul.f32.gmra.mxu0 %v1578
      %v1690 = vpop.f32.mrf.mxu0
      %v1691 = vadd.f32 %v1482, %v1690
      %1692 = vmatmul.f32.gmra.mxu0 %v1581
      %v1693 = vpop.f32.mrf.mxu0
      %v1694 = vadd.f32 %v1485, %v1693
      %1695 = vmatmul.f32.gmra.mxu0 %v1584
      %v1696 = vpop.f32.mrf.mxu0
      %v1697 = vadd.f32 %v1488, %v1696
      %1698 = vmatmul.f32.gmra.mxu0 %v1587
      %v1699 = vpop.f32.mrf.mxu0
      %v1700 = vadd.f32 %v1491, %v1699
      %1701 = vmatmul.f32.gmra.mxu0 %v1590
      %v1702 = vpop.f32.mrf.mxu0
      %v1703 = vadd.f32 %v1494, %v1702
      %1704 = vmatmul.f32.gmra.mxu0 %v1593
      %v1705 = vpop.f32.mrf.mxu0
      %v1706 = vadd.f32 %v1497, %v1705
      %1707 = vmatmul.f32.gmra.mxu0 %v1596
      %v1708 = vpop.f32.mrf.mxu0
      %v1709 = vadd.f32 %v1500, %v1708
      %1710 = vmatmul.f32.gmra.mxu0 %v1599
      %v1711 = vpop.f32.mrf.mxu0
      %v1712 = vadd.f32 %v1503, %v1711
      %1713 = vdwg.mxu0
      %v1714 = vld [vmem:[#allocation3 + $0x2] sm:$0xff]
      %v1715 = vld [vmem:[#allocation3 + $0xa] sm:$0xff]
      %v1716 = vld [vmem:[#allocation3 + $0x1a] sm:$0xff]
      %v1717 = vld [vmem:[#allocation3 + $0x22] sm:$0xff]
      %v1718 = vld [vmem:[#allocation3 + $0x32] sm:$0xff]
      %v1719 = vld [vmem:[#allocation3 + $0x3a] sm:$0xff]
      %v1720 = vld [vmem:[#allocation3 + $0x4a] sm:$0xff]
      %v1721 = vld [vmem:[#allocation3 + $0x52] sm:$0xff]
      %v1722 = vld [vmem:[#allocation3 + $0x62] sm:$0xff]
      %v1723 = vld [vmem:[#allocation3 + $0x6a] sm:$0xff]
      %v1724 = vld [vmem:[#allocation3 + $0x7a] sm:$0xff]
      %v1725 = vld [vmem:[#allocation3 + $0x82] sm:$0xff]
      %v1726 = vld [vmem:[#allocation3 + $0x92] sm:$0xff]
      %v1727 = vld [vmem:[#allocation3 + $0x9a] sm:$0xff]
      %v1728 = vld [vmem:[#allocation3 + $0xaa] sm:$0xff]
      %v1729 = vld [vmem:[#allocation3 + $0xb2] sm:$0xff]
      %v1730 = vld [vmem:[#allocation3 + $0xc2] sm:$0xff]
      %v1731 = vld [vmem:[#allocation3 + $0xca] sm:$0xff]
      %v1732 = vld [vmem:[#allocation3 + $0xda] sm:$0xff]
      %v1733 = vld [vmem:[#allocation3 + $0xe2] sm:$0xff]
      %v1734 = vld [vmem:[#allocation3 + $0xf2] sm:$0xff]
      %v1735 = vld [vmem:[#allocation3 + $0xfa] sm:$0xff]
      %v1736 = vld [vmem:[#allocation3 + $0x10a] sm:$0xff]
      %v1737 = vld [vmem:[#allocation3 + $0x112] sm:$0xff]
      %v1738 = vld [vmem:[#allocation3 + $0x122] sm:$0xff]
      %v1739 = vld [vmem:[#allocation3 + $0x12a] sm:$0xff]
      %v1740 = vld [vmem:[#allocation3 + $0x13a] sm:$0xff]
      %v1741 = vld [vmem:[#allocation3 + $0x142] sm:$0xff]
      %v1742 = vld [vmem:[#allocation3 + $0x152] sm:$0xff]
      %v1743 = vld [vmem:[#allocation3 + $0x15a] sm:$0xff]
      %v1744 = vld [vmem:[#allocation3 + $0x16a] sm:$0xff]
      %v1745 = vld [vmem:[#allocation3 + $0x172] sm:$0xff]
      %s1746 = scalar_lea.vmem %s3, 16
      %v1747 = vld [vmem:[%s1746] sm:$0xff]
      %v1749 = vsel %vm296, %v1714, 0
      %v1752 = vsel %vm296, %v1715, 0
      %v1755 = vsel %vm296, %v1716, 0
      %v1758 = vsel %vm296, %v1717, 0
      %v1761 = vsel %vm296, %v1718, 0
      %v1764 = vsel %vm296, %v1719, 0
      %v1767 = vsel %vm296, %v1720, 0
      %v1770 = vsel %vm296, %v1721, 0
      %v1773 = vsel %vm296, %v1722, 0
      %v1776 = vsel %vm296, %v1723, 0
      %v1779 = vsel %vm296, %v1724, 0
      %v1782 = vsel %vm296, %v1725, 0
      %v1785 = vsel %vm296, %v1726, 0
      %v1788 = vsel %vm296, %v1727, 0
      %v1791 = vsel %vm296, %v1728, 0
      %v1794 = vsel %vm296, %v1729, 0
      %v1797 = vsel %vm296, %v1730, 0
      %v1800 = vsel %vm296, %v1731, 0
      %v1803 = vsel %vm296, %v1732, 0
      %v1806 = vsel %vm296, %v1733, 0
      %v1809 = vsel %vm296, %v1734, 0
      %v1812 = vsel %vm296, %v1735, 0
      %v1815 = vsel %vm296, %v1736, 0
      %v1818 = vsel %vm296, %v1737, 0
      %v1821 = vsel %vm296, %v1738, 0
      %v1824 = vsel %vm296, %v1739, 0
      %v1827 = vsel %vm296, %v1740, 0
      %v1830 = vsel %vm296, %v1741, 0
      %v1833 = vsel %vm296, %v1742, 0
      %v1836 = vsel %vm296, %v1743, 0
      %v1839 = vsel %vm296, %v1744, 0
      %v1842 = vsel %vm296, %v1745, 0
      %1844 = vmatpush.msra.mxu0 0.0
      %1845 = vmatpush.msra.mxu0 0.0
      %1846 = vmatpush.msra.mxu0 0.0
      %1847 = vmatpush.msra.mxu0 0.0
      %1848 = vmatpush.msra.mxu0 0.0
      %1849 = vmatpush.msra.mxu0 0.0
      %1850 = vmatpush.msra.mxu0 0.0
      %1851 = vmatpush.msra.mxu0 0.0
      %1852 = vmatpush.msra.mxu0 0.0
      %1853 = vmatpush.msra.mxu0 0.0
      %1854 = vmatpush.msra.mxu0 0.0
      %1855 = vmatpush.msra.mxu0 0.0
      %1856 = vmatpush.msra.mxu0 0.0
      %1857 = vmatpush.msra.mxu0 0.0
      %1858 = vmatpush.msra.mxu0 0.0
      %1859 = vmatpush.msra.mxu0 %v1747
      %1860 = vmatmul.f32.gmra.mxu0 %v1749
      %v1861 = vpop.f32.mrf.mxu0
      %v1862 = vadd.f32 0.0, %v1861
      %1863 = vmatmul.f32.gmra.mxu0 %v1752
      %v1864 = vpop.f32.mrf.mxu0
      %v1865 = vadd.f32 0.0, %v1864
      %1866 = vmatmul.f32.gmra.mxu0 %v1755
      %v1867 = vpop.f32.mrf.mxu0
      %v1868 = vadd.f32 0.0, %v1867
      %1869 = vmatmul.f32.gmra.mxu0 %v1758
      %v1870 = vpop.f32.mrf.mxu0
      %v1871 = vadd.f32 0.0, %v1870
      %1872 = vmatmul.f32.gmra.mxu0 %v1761
      %v1873 = vpop.f32.mrf.mxu0
      %v1874 = vadd.f32 0.0, %v1873
      %1875 = vmatmul.f32.gmra.mxu0 %v1764
      %v1876 = vpop.f32.mrf.mxu0
      %v1877 = vadd.f32 0.0, %v1876
      %1878 = vmatmul.f32.gmra.mxu0 %v1767
      %v1879 = vpop.f32.mrf.mxu0
      %v1880 = vadd.f32 0.0, %v1879
      %1881 = vmatmul.f32.gmra.mxu0 %v1770
      %v1882 = vpop.f32.mrf.mxu0
      %v1883 = vadd.f32 0.0, %v1882
      %1884 = vmatmul.f32.gmra.mxu0 %v1773
      %v1885 = vpop.f32.mrf.mxu0
      %v1886 = vadd.f32 0.0, %v1885
      %1887 = vmatmul.f32.gmra.mxu0 %v1776
      %v1888 = vpop.f32.mrf.mxu0
      %v1889 = vadd.f32 0.0, %v1888
      %1890 = vmatmul.f32.gmra.mxu0 %v1779
      %v1891 = vpop.f32.mrf.mxu0
      %v1892 = vadd.f32 0.0, %v1891
      %1893 = vmatmul.f32.gmra.mxu0 %v1782
      %v1894 = vpop.f32.mrf.mxu0
      %v1895 = vadd.f32 0.0, %v1894
      %1896 = vmatmul.f32.gmra.mxu0 %v1785
      %v1897 = vpop.f32.mrf.mxu0
      %v1898 = vadd.f32 0.0, %v1897
      %1899 = vmatmul.f32.gmra.mxu0 %v1788
      %v1900 = vpop.f32.mrf.mxu0
      %v1901 = vadd.f32 0.0, %v1900
      %1902 = vmatmul.f32.gmra.mxu0 %v1791
      %v1903 = vpop.f32.mrf.mxu0
      %v1904 = vadd.f32 0.0, %v1903
      %1905 = vmatmul.f32.gmra.mxu0 %v1794
      %v1906 = vpop.f32.mrf.mxu0
      %v1907 = vadd.f32 0.0, %v1906
      %1908 = vmatmul.f32.gmra.mxu0 %v1797
      %v1909 = vpop.f32.mrf.mxu0
      %v1910 = vadd.f32 0.0, %v1909
      %1911 = vmatmul.f32.gmra.mxu0 %v1800
      %v1912 = vpop.f32.mrf.mxu0
      %v1913 = vadd.f32 0.0, %v1912
      %1914 = vmatmul.f32.gmra.mxu0 %v1803
      %v1915 = vpop.f32.mrf.mxu0
      %v1916 = vadd.f32 0.0, %v1915
      %1917 = vmatmul.f32.gmra.mxu0 %v1806
      %v1918 = vpop.f32.mrf.mxu0
      %v1919 = vadd.f32 0.0, %v1918
      %1920 = vmatmul.f32.gmra.mxu0 %v1809
      %v1921 = vpop.f32.mrf.mxu0
      %v1922 = vadd.f32 0.0, %v1921
      %1923 = vmatmul.f32.gmra.mxu0 %v1812
      %v1924 = vpop.f32.mrf.mxu0
      %v1925 = vadd.f32 0.0, %v1924
      %1926 = vmatmul.f32.gmra.mxu0 %v1815
      %v1927 = vpop.f32.mrf.mxu0
      %v1928 = vadd.f32 0.0, %v1927
      %1929 = vmatmul.f32.gmra.mxu0 %v1818
      %v1930 = vpop.f32.mrf.mxu0
      %v1931 = vadd.f32 0.0, %v1930
      %1932 = vmatmul.f32.gmra.mxu0 %v1821
      %v1933 = vpop.f32.mrf.mxu0
      %v1934 = vadd.f32 0.0, %v1933
      %1935 = vmatmul.f32.gmra.mxu0 %v1824
      %v1936 = vpop.f32.mrf.mxu0
      %v1937 = vadd.f32 0.0, %v1936
      %1938 = vmatmul.f32.gmra.mxu0 %v1827
      %v1939 = vpop.f32.mrf.mxu0
      %v1940 = vadd.f32 0.0, %v1939
      %1941 = vmatmul.f32.gmra.mxu0 %v1830
      %v1942 = vpop.f32.mrf.mxu0
      %v1943 = vadd.f32 0.0, %v1942
      %1944 = vmatmul.f32.gmra.mxu0 %v1833
      %v1945 = vpop.f32.mrf.mxu0
      %v1946 = vadd.f32 0.0, %v1945
      %1947 = vmatmul.f32.gmra.mxu0 %v1836
      %v1948 = vpop.f32.mrf.mxu0
      %v1949 = vadd.f32 0.0, %v1948
      %1950 = vmatmul.f32.gmra.mxu0 %v1839
      %v1951 = vpop.f32.mrf.mxu0
      %v1952 = vadd.f32 0.0, %v1951
      %1953 = vmatmul.f32.gmra.mxu0 %v1842
      %v1954 = vpop.f32.mrf.mxu0
      %v1955 = vadd.f32 0.0, %v1954
      %1956 = vdwg.mxu0
      %v1957 = vadd.f32 %v1619, %v1862
      %v1958 = vadd.f32 %v1622, %v1865
      %v1959 = vadd.f32 %v1625, %v1868
      %v1960 = vadd.f32 %v1628, %v1871
      %v1961 = vadd.f32 %v1631, %v1874
      %v1962 = vadd.f32 %v1634, %v1877
      %v1963 = vadd.f32 %v1637, %v1880
      %v1964 = vadd.f32 %v1640, %v1883
      %v1965 = vadd.f32 %v1643, %v1886
      %v1966 = vadd.f32 %v1646, %v1889
      %v1967 = vadd.f32 %v1649, %v1892
      %v1968 = vadd.f32 %v1652, %v1895
      %v1969 = vadd.f32 %v1655, %v1898
      %v1970 = vadd.f32 %v1658, %v1901
      %v1971 = vadd.f32 %v1661, %v1904
      %v1972 = vadd.f32 %v1664, %v1907
      %v1973 = vadd.f32 %v1667, %v1910
      %v1974 = vadd.f32 %v1670, %v1913
      %v1975 = vadd.f32 %v1673, %v1916
      %v1976 = vadd.f32 %v1676, %v1919
      %v1977 = vadd.f32 %v1679, %v1922
      %v1978 = vadd.f32 %v1682, %v1925
      %v1979 = vadd.f32 %v1685, %v1928
      %v1980 = vadd.f32 %v1688, %v1931
      %v1981 = vadd.f32 %v1691, %v1934
      %v1982 = vadd.f32 %v1694, %v1937
      %v1983 = vadd.f32 %v1697, %v1940
      %v1984 = vadd.f32 %v1700, %v1943
      %v1985 = vadd.f32 %v1703, %v1946
      %v1986 = vadd.f32 %v1706, %v1949
      %v1987 = vadd.f32 %v1709, %v1952
      %v1988 = vadd.f32 %v1712, %v1955
      %v1990 = vperm.slane %v1163, 0
      %v1992 = vadd.f32 %v1957, %v1990
      %v1993 = vadd.f32 %v1958, %v1990
      %v1994 = vadd.f32 %v1959, %v1990
      %v1995 = vadd.f32 %v1960, %v1990
      %v1996 = vadd.f32 %v1961, %v1990
      %v1997 = vadd.f32 %v1962, %v1990
      %v1998 = vadd.f32 %v1963, %v1990
      %v1999 = vadd.f32 %v1964, %v1990
      %v2000 = vadd.f32 %v1965, %v1990
      %v2001 = vadd.f32 %v1966, %v1990
      %v2002 = vadd.f32 %v1967, %v1990
      %v2003 = vadd.f32 %v1968, %v1990
      %v2004 = vadd.f32 %v1969, %v1990
      %v2005 = vadd.f32 %v1970, %v1990
      %v2006 = vadd.f32 %v1971, %v1990
      %v2007 = vadd.f32 %v1972, %v1990
      %v2008 = vadd.f32 %v1973, %v1990
      %v2009 = vadd.f32 %v1974, %v1990
      %v2010 = vadd.f32 %v1975, %v1990
      %v2011 = vadd.f32 %v1976, %v1990
      %v2012 = vadd.f32 %v1977, %v1990
      %v2013 = vadd.f32 %v1978, %v1990
      %v2014 = vadd.f32 %v1979, %v1990
      %v2015 = vadd.f32 %v1980, %v1990
      %v2016 = vadd.f32 %v1981, %v1990
      %v2017 = vadd.f32 %v1982, %v1990
      %v2018 = vadd.f32 %v1983, %v1990
      %v2019 = vadd.f32 %v1984, %v1990
      %v2020 = vadd.f32 %v1985, %v1990
      %v2021 = vadd.f32 %v1986, %v1990
      %v2022 = vadd.f32 %v1987, %v1990
      %v2023 = vadd.f32 %v1988, %v1990
      %2024 = vst.msk [vmem:[%s258] sm:$0xff] %vm296, %v1992
      %2025 = vst.msk [vmem:[%s258 + $0x8] sm:$0xff] %vm296, %v1993
      %2026 = vst.msk [vmem:[%s258 + $0x10] sm:$0xff] %vm296, %v1994
      %2027 = vst.msk [vmem:[%s258 + $0x18] sm:$0xff] %vm296, %v1995
      %2028 = vst.msk [vmem:[%s258 + $0x20] sm:$0xff] %vm296, %v1996
      %2029 = vst.msk [vmem:[%s258 + $0x28] sm:$0xff] %vm296, %v1997
      %2030 = vst.msk [vmem:[%s258 + $0x30] sm:$0xff] %vm296, %v1998
      %2031 = vst.msk [vmem:[%s258 + $0x38] sm:$0xff] %vm296, %v1999
      %2032 = vst.msk [vmem:[%s258 + $0x40] sm:$0xff] %vm296, %v2000
      %2033 = vst.msk [vmem:[%s258 + $0x48] sm:$0xff] %vm296, %v2001
      %2034 = vst.msk [vmem:[%s258 + $0x50] sm:$0xff] %vm296, %v2002
      %2035 = vst.msk [vmem:[%s258 + $0x58] sm:$0xff] %vm296, %v2003
      %2036 = vst.msk [vmem:[%s258 + $0x60] sm:$0xff] %vm296, %v2004
      %2037 = vst.msk [vmem:[%s258 + $0x68] sm:$0xff] %vm296, %v2005
      %2038 = vst.msk [vmem:[%s258 + $0x70] sm:$0xff] %vm296, %v2006
      %2039 = vst.msk [vmem:[%s258 + $0x78] sm:$0xff] %vm296, %v2007
      %2040 = vst.msk [vmem:[%s258 + $0x80] sm:$0xff] %vm296, %v2008
      %2041 = vst.msk [vmem:[%s258 + $0x88] sm:$0xff] %vm296, %v2009
      %2042 = vst.msk [vmem:[%s258 + $0x90] sm:$0xff] %vm296, %v2010
      %2043 = vst.msk [vmem:[%s258 + $0x98] sm:$0xff] %vm296, %v2011
      %2044 = vst.msk [vmem:[%s258 + $0xa0] sm:$0xff] %vm296, %v2012
      %2045 = vst.msk [vmem:[%s258 + $0xa8] sm:$0xff] %vm296, %v2013
      %2046 = vst.msk [vmem:[%s258 + $0xb0] sm:$0xff] %vm296, %v2014
      %2047 = vst.msk [vmem:[%s258 + $0xb8] sm:$0xff] %vm296, %v2015
      %2048 = vst.msk [vmem:[%s258 + $0xc0] sm:$0xff] %vm296, %v2016
      %2049 = vst.msk [vmem:[%s258 + $0xc8] sm:$0xff] %vm296, %v2017
      %2050 = vst.msk [vmem:[%s258 + $0xd0] sm:$0xff] %vm296, %v2018
      %2051 = vst.msk [vmem:[%s258 + $0xd8] sm:$0xff] %vm296, %v2019
      %2052 = vst.msk [vmem:[%s258 + $0xe0] sm:$0xff] %vm296, %v2020
      %2053 = vst.msk [vmem:[%s258 + $0xe8] sm:$0xff] %vm296, %v2021
      %2054 = vst.msk [vmem:[%s258 + $0xf0] sm:$0xff] %vm296, %v2022
      %2055 = vst.msk [vmem:[%s258 + $0xf8] sm:$0xff] %vm296, %v2023
      %v2056 = vsel %vm296, %v1992, 0.0
      %v2057 = vsel %vm296, %v1993, 0.0
      %v2058 = vadd.f32 %v2056, %v2057
      %v2059 = vsel %vm296, %v1994, 0.0
      %v2060 = vadd.f32 %v2058, %v2059
      %v2061 = vsel %vm296, %v1995, 0.0
      %v2062 = vadd.f32 %v2060, %v2061
      %v2063 = vsel %vm296, %v1996, 0.0
      %v2064 = vadd.f32 %v2062, %v2063
      %v2065 = vsel %vm296, %v1997, 0.0
      %v2066 = vadd.f32 %v2064, %v2065
      %v2067 = vsel %vm296, %v1998, 0.0
      %v2068 = vadd.f32 %v2066, %v2067
      %v2069 = vsel %vm296, %v1999, 0.0
      %v2070 = vadd.f32 %v2068, %v2069
      %v2071 = vsel %vm296, %v2000, 0.0
      %v2072 = vadd.f32 %v2070, %v2071
      %v2073 = vsel %vm296, %v2001, 0.0
      %v2074 = vadd.f32 %v2072, %v2073
      %v2075 = vsel %vm296, %v2002, 0.0
      %v2076 = vadd.f32 %v2074, %v2075
      %v2077 = vsel %vm296, %v2003, 0.0
      %v2078 = vadd.f32 %v2076, %v2077
      %v2079 = vsel %vm296, %v2004, 0.0
      %v2080 = vadd.f32 %v2078, %v2079
      %v2081 = vsel %vm296, %v2005, 0.0
      %v2082 = vadd.f32 %v2080, %v2081
      %v2083 = vsel %vm296, %v2006, 0.0
      %v2084 = vadd.f32 %v2082, %v2083
      %v2085 = vsel %vm296, %v2007, 0.0
      %v2086 = vadd.f32 %v2084, %v2085
      %v2087 = vsel %vm296, %v2008, 0.0
      %v2088 = vadd.f32 %v2086, %v2087
      %v2089 = vsel %vm296, %v2009, 0.0
      %v2090 = vadd.f32 %v2088, %v2089
      %v2091 = vsel %vm296, %v2010, 0.0
      %v2092 = vadd.f32 %v2090, %v2091
      %v2093 = vsel %vm296, %v2011, 0.0
      %v2094 = vadd.f32 %v2092, %v2093
      %v2095 = vsel %vm296, %v2012, 0.0
      %v2096 = vadd.f32 %v2094, %v2095
      %v2097 = vsel %vm296, %v2013, 0.0
      %v2098 = vadd.f32 %v2096, %v2097
      %v2099 = vsel %vm296, %v2014, 0.0
      %v2100 = vadd.f32 %v2098, %v2099
      %v2101 = vsel %vm296, %v2015, 0.0
      %v2102 = vadd.f32 %v2100, %v2101
      %v2103 = vsel %vm296, %v2016, 0.0
      %v2104 = vadd.f32 %v2102, %v2103
      %v2105 = vsel %vm296, %v2017, 0.0
      %v2106 = vadd.f32 %v2104, %v2105
      %v2107 = vsel %vm296, %v2018, 0.0
      %v2108 = vadd.f32 %v2106, %v2107
      %v2109 = vsel %vm296, %v2019, 0.0
      %v2110 = vadd.f32 %v2108, %v2109
      %v2111 = vsel %vm296, %v2020, 0.0
      %v2112 = vadd.f32 %v2110, %v2111
      %v2113 = vsel %vm296, %v2021, 0.0
      %v2114 = vadd.f32 %v2112, %v2113
      %v2115 = vsel %vm296, %v2022, 0.0
      %v2116 = vadd.f32 %v2114, %v2115
      %v2117 = vsel %vm296, %v2023, 0.0
      %v2118 = vadd.f32 %v2116, %v2117
      %v2119 = vrot.slane %v2118, 4
      %v2120 = vadd.f32 %v2118, %v2119
      %v2121 = vrot.slane %v2120, 2
      %v2122 = vadd.f32 %v2120, %v2121
      %v2123 = vrot.slane %v2122, 1
      %v2124 = vadd.f32 %v2122, %v2123
      %2125 = vst.msk [vmem:[%s262] sm:$0x1] %vm1164, %v2124
      %v2126 = vmul.f32 %v1992, %v1992
      %v2127 = vmul.f32 %v1993, %v1993
      %v2128 = vmul.f32 %v1994, %v1994
      %v2129 = vmul.f32 %v1995, %v1995
      %v2130 = vmul.f32 %v1996, %v1996
      %v2131 = vmul.f32 %v1997, %v1997
      %v2132 = vmul.f32 %v1998, %v1998
      %v2133 = vmul.f32 %v1999, %v1999
      %v2134 = vmul.f32 %v2000, %v2000
      %v2135 = vmul.f32 %v2001, %v2001
      %v2136 = vmul.f32 %v2002, %v2002
      %v2137 = vmul.f32 %v2003, %v2003
      %v2138 = vmul.f32 %v2004, %v2004
      %v2139 = vmul.f32 %v2005, %v2005
      %v2140 = vmul.f32 %v2006, %v2006
      %v2141 = vmul.f32 %v2007, %v2007
      %v2142 = vmul.f32 %v2008, %v2008
      %v2143 = vmul.f32 %v2009, %v2009
      %v2144 = vmul.f32 %v2010, %v2010
      %v2145 = vmul.f32 %v2011, %v2011
      %v2146 = vmul.f32 %v2012, %v2012
      %v2147 = vmul.f32 %v2013, %v2013
      %v2148 = vmul.f32 %v2014, %v2014
      %v2149 = vmul.f32 %v2015, %v2015
      %v2150 = vmul.f32 %v2016, %v2016
      %v2151 = vmul.f32 %v2017, %v2017
      %v2152 = vmul.f32 %v2018, %v2018
      %v2153 = vmul.f32 %v2019, %v2019
      %v2154 = vmul.f32 %v2020, %v2020
      %v2155 = vmul.f32 %v2021, %v2021
      %v2156 = vmul.f32 %v2022, %v2022
      %v2157 = vmul.f32 %v2023, %v2023
      %v2158 = vsel %vm296, %v2126, 0.0
      %v2159 = vsel %vm296, %v2127, 0.0
      %v2160 = vadd.f32 %v2158, %v2159
      %v2161 = vsel %vm296, %v2128, 0.0
      %v2162 = vadd.f32 %v2160, %v2161
      %v2163 = vsel %vm296, %v2129, 0.0
      %v2164 = vadd.f32 %v2162, %v2163
      %v2165 = vsel %vm296, %v2130, 0.0
      %v2166 = vadd.f32 %v2164, %v2165
      %v2167 = vsel %vm296, %v2131, 0.0
      %v2168 = vadd.f32 %v2166, %v2167
      %v2169 = vsel %vm296, %v2132, 0.0
      %v2170 = vadd.f32 %v2168, %v2169
      %v2171 = vsel %vm296, %v2133, 0.0
      %v2172 = vadd.f32 %v2170, %v2171
      %v2173 = vsel %vm296, %v2134, 0.0
      %v2174 = vadd.f32 %v2172, %v2173
      %v2175 = vsel %vm296, %v2135, 0.0
      %v2176 = vadd.f32 %v2174, %v2175
      %v2177 = vsel %vm296, %v2136, 0.0
      %v2178 = vadd.f32 %v2176, %v2177
      %v2179 = vsel %vm296, %v2137, 0.0
      %v2180 = vadd.f32 %v2178, %v2179
      %v2181 = vsel %vm296, %v2138, 0.0
      %v2182 = vadd.f32 %v2180, %v2181
      %v2183 = vsel %vm296, %v2139, 0.0
      %v2184 = vadd.f32 %v2182, %v2183
      %v2185 = vsel %vm296, %v2140, 0.0
      %v2186 = vadd.f32 %v2184, %v2185
      %v2187 = vsel %vm296, %v2141, 0.0
      %v2188 = vadd.f32 %v2186, %v2187
      %v2189 = vsel %vm296, %v2142, 0.0
      %v2190 = vadd.f32 %v2188, %v2189
      %v2191 = vsel %vm296, %v2143, 0.0
      %v2192 = vadd.f32 %v2190, %v2191
      %v2193 = vsel %vm296, %v2144, 0.0
      %v2194 = vadd.f32 %v2192, %v2193
      %v2195 = vsel %vm296, %v2145, 0.0
      %v2196 = vadd.f32 %v2194, %v2195
      %v2197 = vsel %vm296, %v2146, 0.0
      %v2198 = vadd.f32 %v2196, %v2197
      %v2199 = vsel %vm296, %v2147, 0.0
      %v2200 = vadd.f32 %v2198, %v2199
      %v2201 = vsel %vm296, %v2148, 0.0
      %v2202 = vadd.f32 %v2200, %v2201
      %v2203 = vsel %vm296, %v2149, 0.0
      %v2204 = vadd.f32 %v2202, %v2203
      %v2205 = vsel %vm296, %v2150, 0.0
      %v2206 = vadd.f32 %v2204, %v2205
      %v2207 = vsel %vm296, %v2151, 0.0
      %v2208 = vadd.f32 %v2206, %v2207
      %v2209 = vsel %vm296, %v2152, 0.0
      %v2210 = vadd.f32 %v2208, %v2209
      %v2211 = vsel %vm296, %v2153, 0.0
      %v2212 = vadd.f32 %v2210, %v2211
      %v2213 = vsel %vm296, %v2154, 0.0
      %v2214 = vadd.f32 %v2212, %v2213
      %v2215 = vsel %vm296, %v2155, 0.0
      %v2216 = vadd.f32 %v2214, %v2215
      %v2217 = vsel %vm296, %v2156, 0.0
      %v2218 = vadd.f32 %v2216, %v2217
      %v2219 = vsel %vm296, %v2157, 0.0
      %v2220 = vadd.f32 %v2218, %v2219
      %v2221 = vrot.slane %v2220, 4
      %v2222 = vadd.f32 %v2220, %v2221
      %v2223 = vrot.slane %v2222, 2
      %v2224 = vadd.f32 %v2222, %v2223
      %v2225 = vrot.slane %v2224, 1
      %v2226 = vadd.f32 %v2224, %v2225
      %2227 = vst.msk [vmem:[%s262 + $0x1] sm:$0x1] %vm1164, %v2226
      %p2228 = scmp.lt.s32.totalorder %s18, 1
      %s2229 = scalar_select %p2228, %s18, 1
      %s2230 = smul.addr %s2229, 32
      %s2231 = smul.addr %s2230, 8
      %s2232 = scalar_lea.vmem %s5, %s2231
      %p2233 = scmp.lt.s32.totalorder %s18, 1
      %s2234 = scalar_select %p2233, %s18, 1
      %s2235 = smul.addr %s2234, 2
      %s2236 = scalar_lea.vmem %s6, %s2235
      // Predicated region
      $region41: #{non_bottleneck_1d_inst_forward.2} parent=39 // pred_check
        %p2237 = pneg %p146
      $region42: #{non_bottleneck_1d_inst_forward.2} parent=39 // pred_check_branch
        %2239 = sbr.rel (%p2237) target = $region44
      $region43: #{non_bottleneck_1d_inst_forward.2} parent=39 // pred_region
        _
      $region44: #{non_bottleneck_1d_inst_forward.2} parent=39 // pred_fallthru
        _
      // Predicated region
      $region45: #{non_bottleneck_1d_inst_forward.2} parent=39 // pred_check
        %p2240 = pneg %p172
      $region46: #{non_bottleneck_1d_inst_forward.2} parent=39 // pred_check_branch
        %2242 = sbr.rel (%p2240) target = $region48
      $region47: #{non_bottleneck_1d_inst_forward.2} parent=39 // pred_region
        _
      $region48: #{non_bottleneck_1d_inst_forward.2} parent=39 // pred_fallthru
        _
    $region40: #{non_bottleneck_1d_inst_forward.2} parent=5 // pred_fallthru
      _
    %p2243 = scmp.le.s32.totalorder 2, %s13
    // Predicated region
    $region49: #{non_bottleneck_1d_inst_forward.2} parent=5 // pred_check
      %p2244 = pneg %p2243
    $region50: #{non_bottleneck_1d_inst_forward.2} parent=5 // pred_check_branch
      %2246 = sbr.rel (%p2244) target = $region52
    $region51: #{non_bottleneck_1d_inst_forward.2} parent=5 // pred_region
      %s2247 = ssub.s32 %s13, 2
      // Predicated region
      $region53: #{non_bottleneck_1d_inst_forward.2} parent=51 // pred_check
        %p2248 = pneg %p152
      $region54: #{non_bottleneck_1d_inst_forward.2} parent=51 // pred_check_branch
        %2250 = sbr.rel (%p2248) target = $region56
      $region55: #{non_bottleneck_1d_inst_forward.2} parent=51 // pred_region
        %p2251 = scmp.lt.s32.totalorder %s19, 1
        %s2252 = scalar_select %p2251, %s19, 1
        %s2253 = smul.addr %s2252, 32
        %s2254 = smul.addr %s2253, 8
        %s2255 = scalar_lea.vmem %s5, %s2254
      $region56: #{non_bottleneck_1d_inst_forward.2} parent=51 // pred_fallthru
        _
      // Predicated region
      $region57: #{non_bottleneck_1d_inst_forward.2} parent=51 // pred_check
        %p2256 = pneg %p178
      $region58: #{non_bottleneck_1d_inst_forward.2} parent=51 // pred_check_branch
        %2258 = sbr.rel (%p2256) target = $region60
      $region59: #{non_bottleneck_1d_inst_forward.2} parent=51 // pred_region
        %p2259 = scmp.lt.s32.totalorder %s19, 1
        %s2260 = scalar_select %p2259, %s19, 1
        %s2261 = smul.addr %s2260, 2
        %s2262 = scalar_lea.vmem %s6, %s2261
      $region60: #{non_bottleneck_1d_inst_forward.2} parent=51 // pred_fallthru
        _
    $region52: #{non_bottleneck_1d_inst_forward.2} parent=5 // pred_fallthru
      _
  $region6: #{non_bottleneck_1d_inst_forward.2} parent=0 // loop_footer
    %s17 = sadd.s32 1, %s13
  $region7: #{non_bottleneck_1d_inst_forward.2} parent=0 // loop_footer_branch
    %12 = sbr.rel target = $region3
  $region8: #{non_bottleneck_1d_inst_forward.2} parent=0 // loop_exit
    _

// kernel: non_bottleneck_1d_inst_forward.3
$region0: #{non_bottleneck_1d_inst_forward.3}
  #allocation0 [shape = 'u32[]', space=smem, size = 0x4, offset = 0x4, fixed_abs, tag = 'smem constant byte address 0x4 - core index']
  #allocation1 [shape = 'u32[72,128]{1,0:T(1,128)}', space=vmem, size = 0x9000, scoped, tag = 'internal scratch']
  #allocation2 [shape = 'f32[20,16,8]{2,1,0:T(8,128)}', space=vmem, size = 0x28000, scoped, tag = 'scratch operand']
  #allocation3 [shape = 'f32[16,20,8]{2,1,0:T(8,128)}', space=vmem, size = 0x30000, scoped, tag = 'scratch operand']
  %s0 = inlined_call_operand.vmem [shape: f32[2,16,16,8], index: 0, kind: input, shape index: {}]
  %s1 = inlined_call_operand.vmem [shape: f32[2,16,16,8], index: 1, kind: input, shape index: {}]
  %s2 = inlined_call_operand.vmem [shape: f32[1,8], index: 2, kind: input, shape index: {}]
  %s3 = inlined_call_operand.vmem [shape: f32[1,8], index: 3, kind: input, shape index: {}]
  %s4 = inlined_call_operand.vmem [shape: f32[3,8,8], index: 4, kind: input, shape index: {}]
  %s5 = inlined_call_operand.vmem [shape: f32[1,8], index: 5, kind: input, shape index: {}]
  %s6 = inlined_call_operand.vmem [shape: f32[3,8,8], index: 6, kind: input, shape index: {}]
  %s7 = inlined_call_operand.vmem [shape: f32[1,8], index: 7, kind: input, shape index: {}]
  %s8 = inlined_call_operand.vmem [shape: f32[2,16,16,8], index: 8, kind: output, shape index: {}]
  %s9 = sld [smem:[#allocation0]]
  $region65: #{non_bottleneck_1d_inst_forward.3} parent=0
    _
  %s11 = ssub.s32 1, %s9
  %s12 = scalar_select 0, %s11, %s9
  loop: start=0, step=1, limit=4
  $region2: #{non_bottleneck_1d_inst_forward.3} parent=0 // loop_pre_header
    _
  $region3: #{non_bottleneck_1d_inst_forward.3} parent=0 // loop_header
    %s14 = sphi 0, %s18
    %p15 = scmp.ge.s32.totalorder %s14, 4
    %s24 = sphi 0, %s26
    %s27 = sphi 0, %s24
    %s28 = sphi 0, %s27
    %s44 = sphi 0, %s28
    %s50 = sphi 0, %s52
    %s53 = sphi 0, %s50
    %s54 = sphi 0, %s53
    %s70 = sphi 0, %s54
    %s74 = sphi 0, %s74
    %s76 = sphi 0, %s74
    %s77 = sphi 0, %s76
    %s91 = sphi 0, %s77
    %s95 = sphi 0, %s95
    %s97 = sphi 0, %s95
    %s98 = sphi 0, %s97
    %s112 = sphi 0, %s98
    %s116 = sphi 0, %s116
    %s118 = sphi 0, %s116
    %s119 = sphi 0, %s118
    %s133 = sphi 0, %s119
    %s137 = sphi 0, %s137
    %s139 = sphi 0, %s137
    %s140 = sphi 0, %s139
    %s154 = sphi 0, %s140
    %s158 = sphi 0, %s158
    %s160 = sphi 0, %s158
    %s161 = sphi 0, %s160
    %s175 = sphi 0, %s161
    %s179 = sphi 0, %s179
    %s181 = sphi 0, %s179
    %s182 = sphi 0, %s181
    %s196 = sphi 0, %s182
    %s202 = sphi 0, %s204
    %s205 = sphi 0, %s202
    %s206 = sphi 0, %s205
    %s222 = sphi 0, %s206
  $region4: #{non_bottleneck_1d_inst_forward.3} parent=0 // loop_header_branch
    %17 = sbr.rel (%p15) target = $region8
  $region5: #{non_bottleneck_1d_inst_forward.3} parent=0 // loop_body
    %s19 = ssub.s32 %s14, 1
    %s20 = ssub.s32 %s14, 2
    %s21 = sadd.s32 %s14, 1
    %s22 = ssub.s32 %s14, %s21
    %p23 = scmp.eq.s32.totalorder %s22, 0
    %s25 = sadd.s32 %s24, 1
    %s26 = scalar_select %p23, %s24, %s25
    %p29 = pneg %p23
    %p30 = scmp.eq.s32.totalorder %s14, 1
    %p31 = por %p29, %p30
    %p32 = scmp.ne.s32.totalorder %s24, %s27
    %p33 = scmp.eq.s32.totalorder %s14, 0
    %p34 = por %p32, %p33
    %p35 = scmp.ne.s32.totalorder %s24, %s27
    %p36 = scmp.eq.s32.totalorder %s19, 1
    %p37 = por %p35, %p36
    %p38 = scmp.ne.s32.totalorder %s27, %s28
    %p39 = scmp.eq.s32.totalorder %s19, 0
    %p40 = por %p38, %p39
    %p41 = scmp.ne.s32.totalorder %s27, %s28
    %p42 = scmp.eq.s32.totalorder %s20, 1
    %p43 = por %p41, %p42
    %p45 = scmp.ne.s32.totalorder %s28, %s44
    %p46 = scmp.eq.s32.totalorder %s20, 0
    %p47 = por %p45, %p46
    %s48 = ssub.s32 %s14, %s21
    %p49 = scmp.eq.s32.totalorder %s48, 0
    %s51 = sadd.s32 %s50, 1
    %s52 = scalar_select %p49, %s50, %s51
    %p55 = pneg %p49
    %p56 = scmp.eq.s32.totalorder %s14, 1
    %p57 = por %p55, %p56
    %p58 = scmp.ne.s32.totalorder %s50, %s53
    %p59 = scmp.eq.s32.totalorder %s14, 0
    %p60 = por %p58, %p59
    %p61 = scmp.ne.s32.totalorder %s50, %s53
    %p62 = scmp.eq.s32.totalorder %s19, 1
    %p63 = por %p61, %p62
    %p64 = scmp.ne.s32.totalorder %s53, %s54
    %p65 = scmp.eq.s32.totalorder %s19, 0
    %p66 = por %p64, %p65
    %p67 = scmp.ne.s32.totalorder %s53, %s54
    %p68 = scmp.eq.s32.totalorder %s20, 1
    %p69 = por %p67, %p68
    %p71 = scmp.ne.s32.totalorder %s54, %s70
    %p72 = scmp.eq.s32.totalorder %s20, 0
    %p73 = por %p71, %p72
    %s75 = sadd.s32 %s74, 1
    %p78 = scmp.eq.s32.totalorder %s14, 1
    %p79 = scmp.ne.s32.totalorder %s74, %s76
    %p80 = scmp.eq.s32.totalorder %s14, 0
    %p81 = por %p79, %p80
    %p82 = scmp.ne.s32.totalorder %s74, %s76
    %p83 = scmp.eq.s32.totalorder %s19, 1
    %p84 = por %p82, %p83
    %p85 = scmp.ne.s32.totalorder %s76, %s77
    %p86 = scmp.eq.s32.totalorder %s19, 0
    %p87 = por %p85, %p86
    %p88 = scmp.ne.s32.totalorder %s76, %s77
    %p89 = scmp.eq.s32.totalorder %s20, 1
    %p90 = por %p88, %p89
    %p92 = scmp.ne.s32.totalorder %s77, %s91
    %p93 = scmp.eq.s32.totalorder %s20, 0
    %p94 = por %p92, %p93
    %s96 = sadd.s32 %s95, 1
    %p99 = scmp.eq.s32.totalorder %s14, 1
    %p100 = scmp.ne.s32.totalorder %s95, %s97
    %p101 = scmp.eq.s32.totalorder %s14, 0
    %p102 = por %p100, %p101
    %p103 = scmp.ne.s32.totalorder %s95, %s97
    %p104 = scmp.eq.s32.totalorder %s19, 1
    %p105 = por %p103, %p104
    %p106 = scmp.ne.s32.totalorder %s97, %s98
    %p107 = scmp.eq.s32.totalorder %s19, 0
    %p108 = por %p106, %p107
    %p109 = scmp.ne.s32.totalorder %s97, %s98
    %p110 = scmp.eq.s32.totalorder %s20, 1
    %p111 = por %p109, %p110
    %p113 = scmp.ne.s32.totalorder %s98, %s112
    %p114 = scmp.eq.s32.totalorder %s20, 0
    %p115 = por %p113, %p114
    %s117 = sadd.s32 %s116, 1
    %p120 = scmp.eq.s32.totalorder %s14, 1
    %p121 = scmp.ne.s32.totalorder %s116, %s118
    %p122 = scmp.eq.s32.totalorder %s14, 0
    %p123 = por %p121, %p122
    %p124 = scmp.ne.s32.totalorder %s116, %s118
    %p125 = scmp.eq.s32.totalorder %s19, 1
    %p126 = por %p124, %p125
    %p127 = scmp.ne.s32.totalorder %s118, %s119
    %p128 = scmp.eq.s32.totalorder %s19, 0
    %p129 = por %p127, %p128
    %p130 = scmp.ne.s32.totalorder %s118, %s119
    %p131 = scmp.eq.s32.totalorder %s20, 1
    %p132 = por %p130, %p131
    %p134 = scmp.ne.s32.totalorder %s119, %s133
    %p135 = scmp.eq.s32.totalorder %s20, 0
    %p136 = por %p134, %p135
    %s138 = sadd.s32 %s137, 1
    %p141 = scmp.eq.s32.totalorder %s14, 1
    %p142 = scmp.ne.s32.totalorder %s137, %s139
    %p143 = scmp.eq.s32.totalorder %s14, 0
    %p144 = por %p142, %p143
    %p145 = scmp.ne.s32.totalorder %s137, %s139
    %p146 = scmp.eq.s32.totalorder %s19, 1
    %p147 = por %p145, %p146
    %p148 = scmp.ne.s32.totalorder %s139, %s140
    %p149 = scmp.eq.s32.totalorder %s19, 0
    %p150 = por %p148, %p149
    %p151 = scmp.ne.s32.totalorder %s139, %s140
    %p152 = scmp.eq.s32.totalorder %s20, 1
    %p153 = por %p151, %p152
    %p155 = scmp.ne.s32.totalorder %s140, %s154
    %p156 = scmp.eq.s32.totalorder %s20, 0
    %p157 = por %p155, %p156
    %s159 = sadd.s32 %s158, 1
    %p162 = scmp.eq.s32.totalorder %s14, 1
    %p163 = scmp.ne.s32.totalorder %s158, %s160
    %p164 = scmp.eq.s32.totalorder %s14, 0
    %p165 = por %p163, %p164
    %p166 = scmp.ne.s32.totalorder %s158, %s160
    %p167 = scmp.eq.s32.totalorder %s19, 1
    %p168 = por %p166, %p167
    %p169 = scmp.ne.s32.totalorder %s160, %s161
    %p170 = scmp.eq.s32.totalorder %s19, 0
    %p171 = por %p169, %p170
    %p172 = scmp.ne.s32.totalorder %s160, %s161
    %p173 = scmp.eq.s32.totalorder %s20, 1
    %p174 = por %p172, %p173
    %p176 = scmp.ne.s32.totalorder %s161, %s175
    %p177 = scmp.eq.s32.totalorder %s20, 0
    %p178 = por %p176, %p177
    %s180 = sadd.s32 %s179, 1
    %p183 = scmp.eq.s32.totalorder %s14, 1
    %p184 = scmp.ne.s32.totalorder %s179, %s181
    %p185 = scmp.eq.s32.totalorder %s14, 0
    %p186 = por %p184, %p185
    %p187 = scmp.ne.s32.totalorder %s179, %s181
    %p188 = scmp.eq.s32.totalorder %s19, 1
    %p189 = por %p187, %p188
    %p190 = scmp.ne.s32.totalorder %s181, %s182
    %p191 = scmp.eq.s32.totalorder %s19, 0
    %p192 = por %p190, %p191
    %p193 = scmp.ne.s32.totalorder %s181, %s182
    %p194 = scmp.eq.s32.totalorder %s20, 1
    %p195 = por %p193, %p194
    %p197 = scmp.ne.s32.totalorder %s182, %s196
    %p198 = scmp.eq.s32.totalorder %s20, 0
    %p199 = por %p197, %p198
    %s200 = ssub.s32 %s14, %s21
    %p201 = scmp.eq.s32.totalorder %s200, 0
    %s203 = sadd.s32 %s202, 1
    %s204 = scalar_select %p201, %s202, %s203
    %p207 = pneg %p201
    %p208 = scmp.eq.s32.totalorder %s14, 1
    %p209 = por %p207, %p208
    %p210 = scmp.ne.s32.totalorder %s202, %s205
    %p211 = scmp.eq.s32.totalorder %s14, 0
    %p212 = por %p210, %p211
    %p213 = scmp.ne.s32.totalorder %s202, %s205
    %p214 = scmp.eq.s32.totalorder %s19, 1
    %p215 = por %p213, %p214
    %p216 = scmp.ne.s32.totalorder %s205, %s206
    %p217 = scmp.eq.s32.totalorder %s19, 0
    %p218 = por %p216, %p217
    %p219 = scmp.ne.s32.totalorder %s205, %s206
    %p220 = scmp.eq.s32.totalorder %s20, 1
    %p221 = por %p219, %p220
    %p223 = scmp.ne.s32.totalorder %s206, %s222
    %p224 = scmp.eq.s32.totalorder %s20, 0
    %p225 = por %p223, %p224
    %p226 = scmp.le.s32.totalorder 1, %s14
    %p227 = scmp.lt.s32.totalorder %s14, 3
    %p228 = pnand %p226, %p227
    %p229 = pneg %p228
    // Predicated region
    $region9: #{non_bottleneck_1d_inst_forward.3} parent=5 // pred_check
      _
    $region10: #{non_bottleneck_1d_inst_forward.3} parent=5 // pred_check_branch
      %231 = sbr.rel (%p228) target = $region12
    $region11: #{non_bottleneck_1d_inst_forward.3} parent=5 // pred_region
      %s232 = ssub.s32 %s14, 1
      // Predicated region
      $region13: #{non_bottleneck_1d_inst_forward.3} parent=11 // pred_check
        %p233 = pneg %p87
      $region14: #{non_bottleneck_1d_inst_forward.3} parent=11 // pred_check_branch
        %235 = sbr.rel (%p233) target = $region16
      $region15: #{non_bottleneck_1d_inst_forward.3} parent=11 // pred_region
        _
      $region16: #{non_bottleneck_1d_inst_forward.3} parent=11 // pred_fallthru
        _
      // Predicated region
      $region17: #{non_bottleneck_1d_inst_forward.3} parent=11 // pred_check
        %p236 = pneg %p108
      $region18: #{non_bottleneck_1d_inst_forward.3} parent=11 // pred_check_branch
        %238 = sbr.rel (%p236) target = $region20
      $region19: #{non_bottleneck_1d_inst_forward.3} parent=11 // pred_region
        _
      $region20: #{non_bottleneck_1d_inst_forward.3} parent=11 // pred_fallthru
        _
      // Predicated region
      $region21: #{non_bottleneck_1d_inst_forward.3} parent=11 // pred_check
        %p239 = pneg %p129
      $region22: #{non_bottleneck_1d_inst_forward.3} parent=11 // pred_check_branch
        %241 = sbr.rel (%p239) target = $region24
      $region23: #{non_bottleneck_1d_inst_forward.3} parent=11 // pred_region
        _
      $region24: #{non_bottleneck_1d_inst_forward.3} parent=11 // pred_fallthru
        _
      // Predicated region
      $region25: #{non_bottleneck_1d_inst_forward.3} parent=11 // pred_check
        %p242 = pneg %p150
      $region26: #{non_bottleneck_1d_inst_forward.3} parent=11 // pred_check_branch
        %244 = sbr.rel (%p242) target = $region28
      $region27: #{non_bottleneck_1d_inst_forward.3} parent=11 // pred_region
        _
      $region28: #{non_bottleneck_1d_inst_forward.3} parent=11 // pred_fallthru
        _
      // Predicated region
      $region29: #{non_bottleneck_1d_inst_forward.3} parent=11 // pred_check
        %p245 = pneg %p171
      $region30: #{non_bottleneck_1d_inst_forward.3} parent=11 // pred_check_branch
        %247 = sbr.rel (%p245) target = $region32
      $region31: #{non_bottleneck_1d_inst_forward.3} parent=11 // pred_region
        _
      $region32: #{non_bottleneck_1d_inst_forward.3} parent=11 // pred_fallthru
        _
      // Predicated region
      $region33: #{non_bottleneck_1d_inst_forward.3} parent=11 // pred_check
        %p248 = pneg %p192
      $region34: #{non_bottleneck_1d_inst_forward.3} parent=11 // pred_check_branch
        %250 = sbr.rel (%p248) target = $region36
      $region35: #{non_bottleneck_1d_inst_forward.3} parent=11 // pred_region
        _
      $region36: #{non_bottleneck_1d_inst_forward.3} parent=11 // pred_fallthru
        _
    $region12: #{non_bottleneck_1d_inst_forward.3} parent=5 // pred_fallthru
      _
    %p251 = scmp.lt.s32.totalorder %s14, 2
    // Predicated region
    $region37: #{non_bottleneck_1d_inst_forward.3} parent=5 // pred_check
      %p252 = pneg %p251
    $region38: #{non_bottleneck_1d_inst_forward.3} parent=5 // pred_check_branch
      %254 = sbr.rel (%p252) target = $region40
    $region39: #{non_bottleneck_1d_inst_forward.3} parent=5 // pred_region
      // Predicated region
      $region41: #{non_bottleneck_1d_inst_forward.3} parent=39 // pred_check
        %p255 = pneg %p34
      $region42: #{non_bottleneck_1d_inst_forward.3} parent=39 // pred_check_branch
        %257 = sbr.rel (%p255) target = $region44
      $region43: #{non_bottleneck_1d_inst_forward.3} parent=39 // pred_region
        %p258 = scmp.lt.s32.totalorder %s14, 1
        %s259 = scalar_select %p258, %s14, 1
        %s260 = smul.addr %s259, 32
        %s261 = smul.addr %s260, 8
        %s262 = scalar_lea.vmem %s0, %s261
      $region44: #{non_bottleneck_1d_inst_forward.3} parent=39 // pred_fallthru
        _
      // Predicated region
      $region45: #{non_bottleneck_1d_inst_forward.3} parent=39 // pred_check
        %p263 = pneg %p60
      $region46: #{non_bottleneck_1d_inst_forward.3} parent=39 // pred_check_branch
        %265 = sbr.rel (%p263) target = $region48
      $region47: #{non_bottleneck_1d_inst_forward.3} parent=39 // pred_region
        %p266 = scmp.lt.s32.totalorder %s14, 1
        %s267 = scalar_select %p266, %s14, 1
        %s268 = smul.addr %s267, 32
        %s269 = smul.addr %s268, 8
        %s270 = scalar_lea.vmem %s1, %s269
      $region48: #{non_bottleneck_1d_inst_forward.3} parent=39 // pred_fallthru
        _
    $region40: #{non_bottleneck_1d_inst_forward.3} parent=5 // pred_fallthru
      _
    %p271 = scmp.le.s32.totalorder 1, %s14
    %p272 = scmp.lt.s32.totalorder %s14, 3
    %p273 = pnand %p271, %p272
    %p274 = pneg %p273
    // Predicated region
    $region49: #{non_bottleneck_1d_inst_forward.3} parent=5 // pred_check
      _
    $region50: #{non_bottleneck_1d_inst_forward.3} parent=5 // pred_check_branch
      %276 = sbr.rel (%p273) target = $region52
    $region51: #{non_bottleneck_1d_inst_forward.3} parent=5 // pred_region
      %s277 = ssub.s32 %s14, 1
      %p278 = scmp.lt.s32.totalorder %s19, 1
      %s279 = scalar_select %p278, %s19, 1
      %s280 = smul.addr %s279, 32
      %s281 = smul.addr %s280, 8
      %s282 = scalar_lea.vmem %s0, %s281
      %p283 = pneg %p40
      %p284 = pneg %p37
      %p285 = scmp.lt.s32.totalorder %s19, 1
      %s286 = scalar_select %p285, %s19, 1
      %s287 = smul.addr %s286, 32
      %s288 = smul.addr %s287, 8
      %s289 = scalar_lea.vmem %s1, %s288
      %p290 = pneg %p66
      %p291 = pneg %p63
      %p292 = pneg %p87
      %p293 = pneg %p84
      %p294 = pneg %p108
      %p295 = pneg %p105
      %p296 = pneg %p129
      %p297 = pneg %p126
      %p298 = pneg %p150
      %p299 = pneg %p147
      %p300 = pneg %p171
      %p301 = pneg %p168
      %p302 = pneg %p192
      %p303 = pneg %p189
      %p304 = pneg %p218
      %p305 = pneg %p215
      %p306 = scmp.lt.s32.totalorder %s19, 1
      %s307 = scalar_select %p306, %s19, 1
      %s308 = smul.addr %s307, 32
      %s309 = smul.addr %s308, 8
      %s310 = scalar_lea.vmem %s8, %s309
      %p311 = scmp.lt.s32.totalorder %s19, 1
      %s312 = scalar_select %p311, %s19, 1
      %s313 = smul.addr %s312, 32
      %s314 = smul.addr %s313, 8
      %s315 = scalar_lea.vmem %s0, %s314
      %p316 = scmp.lt.s32.totalorder %s19, 1
      %s317 = scalar_select %p316, %s19, 1
      %s318 = smul.addr %s317, 32
      %s319 = smul.addr %s318, 8
      %s320 = scalar_lea.vmem %s1, %s319
      %p321 = scmp.lt.s32.totalorder %s19, 1
      %s322 = scalar_select %p321, %s19, 1
      %s323 = smul.addr %s322, 32
      %s324 = smul.addr %s323, 8
      %s325 = scalar_lea.vmem %s8, %s324
      %v326 = vld [vmem:[%s315] sm:$0xff]
      %v327 = vld [vmem:[%s315 + $0x8] sm:$0xff]
      %v328 = vld [vmem:[%s315 + $0x10] sm:$0xff]
      %v329 = vld [vmem:[%s315 + $0x18] sm:$0xff]
      %v330 = vld [vmem:[%s315 + $0x20] sm:$0xff]
      %v331 = vld [vmem:[%s315 + $0x28] sm:$0xff]
      %v332 = vld [vmem:[%s315 + $0x30] sm:$0xff]
      %v333 = vld [vmem:[%s315 + $0x38] sm:$0xff]
      %v334 = vld [vmem:[%s315 + $0x40] sm:$0xff]
      %v335 = vld [vmem:[%s315 + $0x48] sm:$0xff]
      %v336 = vld [vmem:[%s315 + $0x50] sm:$0xff]
      %v337 = vld [vmem:[%s315 + $0x58] sm:$0xff]
      %v338 = vld [vmem:[%s315 + $0x60] sm:$0xff]
      %v339 = vld [vmem:[%s315 + $0x68] sm:$0xff]
      %v340 = vld [vmem:[%s315 + $0x70] sm:$0xff]
      %v341 = vld [vmem:[%s315 + $0x78] sm:$0xff]
      %v342 = vld [vmem:[%s315 + $0x80] sm:$0xff]
      %v343 = vld [vmem:[%s315 + $0x88] sm:$0xff]
      %v344 = vld [vmem:[%s315 + $0x90] sm:$0xff]
      %v345 = vld [vmem:[%s315 + $0x98] sm:$0xff]
      %v346 = vld [vmem:[%s315 + $0xa0] sm:$0xff]
      %v347 = vld [vmem:[%s315 + $0xa8] sm:$0xff]
      %v348 = vld [vmem:[%s315 + $0xb0] sm:$0xff]
      %v349 = vld [vmem:[%s315 + $0xb8] sm:$0xff]
      %v350 = vld [vmem:[%s315 + $0xc0] sm:$0xff]
      %v351 = vld [vmem:[%s315 + $0xc8] sm:$0xff]
      %v352 = vld [vmem:[%s315 + $0xd0] sm:$0xff]
      %v353 = vld [vmem:[%s315 + $0xd8] sm:$0xff]
      %v354 = vld [vmem:[%s315 + $0xe0] sm:$0xff]
      %v355 = vld [vmem:[%s315 + $0xe8] sm:$0xff]
      %v356 = vld [vmem:[%s315 + $0xf0] sm:$0xff]
      %v357 = vld [vmem:[%s315 + $0xf8] sm:$0xff]
      %v358 = vld [vmem:[%s320] sm:$0xff]
      %v359 = vld [vmem:[%s320 + $0x8] sm:$0xff]
      %v360 = vld [vmem:[%s320 + $0x10] sm:$0xff]
      %v361 = vld [vmem:[%s320 + $0x18] sm:$0xff]
      %v362 = vld [vmem:[%s320 + $0x20] sm:$0xff]
      %v363 = vld [vmem:[%s320 + $0x28] sm:$0xff]
      %v364 = vld [vmem:[%s320 + $0x30] sm:$0xff]
      %v365 = vld [vmem:[%s320 + $0x38] sm:$0xff]
      %v366 = vld [vmem:[%s320 + $0x40] sm:$0xff]
      %v367 = vld [vmem:[%s320 + $0x48] sm:$0xff]
      %v368 = vld [vmem:[%s320 + $0x50] sm:$0xff]
      %v369 = vld [vmem:[%s320 + $0x58] sm:$0xff]
      %v370 = vld [vmem:[%s320 + $0x60] sm:$0xff]
      %v371 = vld [vmem:[%s320 + $0x68] sm:$0xff]
      %v372 = vld [vmem:[%s320 + $0x70] sm:$0xff]
      %v373 = vld [vmem:[%s320 + $0x78] sm:$0xff]
      %v374 = vld [vmem:[%s320 + $0x80] sm:$0xff]
      %v375 = vld [vmem:[%s320 + $0x88] sm:$0xff]
      %v376 = vld [vmem:[%s320 + $0x90] sm:$0xff]
      %v377 = vld [vmem:[%s320 + $0x98] sm:$0xff]
      %v378 = vld [vmem:[%s320 + $0xa0] sm:$0xff]
      %v379 = vld [vmem:[%s320 + $0xa8] sm:$0xff]
      %v380 = vld [vmem:[%s320 + $0xb0] sm:$0xff]
      %v381 = vld [vmem:[%s320 + $0xb8] sm:$0xff]
      %v382 = vld [vmem:[%s320 + $0xc0] sm:$0xff]
      %v383 = vld [vmem:[%s320 + $0xc8] sm:$0xff]
      %v384 = vld [vmem:[%s320 + $0xd0] sm:$0xff]
      %v385 = vld [vmem:[%s320 + $0xd8] sm:$0xff]
      %v386 = vld [vmem:[%s320 + $0xe0] sm:$0xff]
      %v387 = vld [vmem:[%s320 + $0xe8] sm:$0xff]
      %v388 = vld [vmem:[%s320 + $0xf0] sm:$0xff]
      %v389 = vld [vmem:[%s320 + $0xf8] sm:$0xff]
      %v390 = vld [vmem:[%s2] sm:$0x1]
      %v392 = vperm.slane %v390, 0
      %v394 = vmul.f32 %v358, %v392
      %v395 = vmul.f32 %v359, %v392
      %v396 = vmul.f32 %v360, %v392
      %v397 = vmul.f32 %v361, %v392
      %v398 = vmul.f32 %v362, %v392
      %v399 = vmul.f32 %v363, %v392
      %v400 = vmul.f32 %v364, %v392
      %v401 = vmul.f32 %v365, %v392
      %v402 = vmul.f32 %v366, %v392
      %v403 = vmul.f32 %v367, %v392
      %v404 = vmul.f32 %v368, %v392
      %v405 = vmul.f32 %v369, %v392
      %v406 = vmul.f32 %v370, %v392
      %v407 = vmul.f32 %v371, %v392
      %v408 = vmul.f32 %v372, %v392
      %v409 = vmul.f32 %v373, %v392
      %v410 = vmul.f32 %v374, %v392
      %v411 = vmul.f32 %v375, %v392
      %v412 = vmul.f32 %v376, %v392
      %v413 = vmul.f32 %v377, %v392
      %v414 = vmul.f32 %v378, %v392
      %v415 = vmul.f32 %v379, %v392
      %v416 = vmul.f32 %v380, %v392
      %v417 = vmul.f32 %v381, %v392
      %v418 = vmul.f32 %v382, %v392
      %v419 = vmul.f32 %v383, %v392
      %v420 = vmul.f32 %v384, %v392
      %v421 = vmul.f32 %v385, %v392
      %v422 = vmul.f32 %v386, %v392
      %v423 = vmul.f32 %v387, %v392
      %v424 = vmul.f32 %v388, %v392
      %v425 = vmul.f32 %v389, %v392
      %v426 = vld [vmem:[%s3] sm:$0x1]
      %v428 = vperm.slane %v426, 0
      %v430 = vadd.f32 %v394, %v428
      %v431 = vadd.f32 %v395, %v428
      %v432 = vadd.f32 %v396, %v428
      %v433 = vadd.f32 %v397, %v428
      %v434 = vadd.f32 %v398, %v428
      %v435 = vadd.f32 %v399, %v428
      %v436 = vadd.f32 %v400, %v428
      %v437 = vadd.f32 %v401, %v428
      %v438 = vadd.f32 %v402, %v428
      %v439 = vadd.f32 %v403, %v428
      %v440 = vadd.f32 %v404, %v428
      %v441 = vadd.f32 %v405, %v428
      %v442 = vadd.f32 %v406, %v428
      %v443 = vadd.f32 %v407, %v428
      %v444 = vadd.f32 %v408, %v428
      %v445 = vadd.f32 %v409, %v428
      %v446 = vadd.f32 %v410, %v428
      %v447 = vadd.f32 %v411, %v428
      %v448 = vadd.f32 %v412, %v428
      %v449 = vadd.f32 %v413, %v428
      %v450 = vadd.f32 %v414, %v428
      %v451 = vadd.f32 %v415, %v428
      %v452 = vadd.f32 %v416, %v428
      %v453 = vadd.f32 %v417, %v428
      %v454 = vadd.f32 %v418, %v428
      %v455 = vadd.f32 %v419, %v428
      %v456 = vadd.f32 %v420, %v428
      %v457 = vadd.f32 %v421, %v428
      %v458 = vadd.f32 %v422, %v428
      %v459 = vadd.f32 %v423, %v428
      %v460 = vadd.f32 %v424, %v428
      %v461 = vadd.f32 %v425, %v428
      %v462 = vmax.f32 %v430, 0.0
      %v463 = vmax.f32 %v431, 0.0
      %v464 = vmax.f32 %v432, 0.0
      %v465 = vmax.f32 %v433, 0.0
      %v466 = vmax.f32 %v434, 0.0
      %v467 = vmax.f32 %v435, 0.0
      %v468 = vmax.f32 %v436, 0.0
      %v469 = vmax.f32 %v437, 0.0
      %v470 = vmax.f32 %v438, 0.0
      %v471 = vmax.f32 %v439, 0.0
      %v472 = vmax.f32 %v440, 0.0
      %v473 = vmax.f32 %v441, 0.0
      %v474 = vmax.f32 %v442, 0.0
      %v475 = vmax.f32 %v443, 0.0
      %v476 = vmax.f32 %v444, 0.0
      %v477 = vmax.f32 %v445, 0.0
      %v478 = vmax.f32 %v446, 0.0
      %v479 = vmax.f32 %v447, 0.0
      %v480 = vmax.f32 %v448, 0.0
      %v481 = vmax.f32 %v449, 0.0
      %v482 = vmax.f32 %v450, 0.0
      %v483 = vmax.f32 %v451, 0.0
      %v484 = vmax.f32 %v452, 0.0
      %v485 = vmax.f32 %v453, 0.0
      %v486 = vmax.f32 %v454, 0.0
      %v487 = vmax.f32 %v455, 0.0
      %v488 = vmax.f32 %v456, 0.0
      %v489 = vmax.f32 %v457, 0.0
      %v490 = vmax.f32 %v458, 0.0
      %v491 = vmax.f32 %v459, 0.0
      %v492 = vmax.f32 %v460, 0.0
      %v493 = vmax.f32 %v461, 0.0
      %v494 = vld [vmem:[%s5] sm:$0x1]
      %vm495 = vcmask 64512
      %496 = vst.msk [vmem:[#allocation2] sm:$0xff] %vm495, 0.0
      %497 = vst.msk [vmem:[#allocation2 + $0x8] sm:$0xff] %vm495, 0.0
      %498 = vst.msk [vmem:[#allocation2 + $0x10] sm:$0xff] %vm495, 0.0
      %499 = vst.msk [vmem:[#allocation2 + $0x18] sm:$0xff] %vm495, 0.0
      %s500 = scalar_lea.vmem [#allocation2], 288
      %501 = vst.msk [vmem:[%s500] sm:$0xff] %vm495, 0.0
      %502 = vst.msk [vmem:[%s500 + $0x8] sm:$0xff] %vm495, 0.0
      %503 = vst.msk [vmem:[%s500 + $0x10] sm:$0xff] %vm495, 0.0
      %504 = vst.msk [vmem:[%s500 + $0x18] sm:$0xff] %vm495, 0.0
      %s505 = scalar_lea.vmem [#allocation2], 32
      %506 = vst.msk [vmem:[%s505] sm:$0xff] %vm495, %v462
      %507 = vst.msk [vmem:[%s505 + $0x8] sm:$0xff] %vm495, %v463
      %508 = vst.msk [vmem:[%s505 + $0x10] sm:$0xff] %vm495, %v464
      %509 = vst.msk [vmem:[%s505 + $0x18] sm:$0xff] %vm495, %v465
      %510 = vst.msk [vmem:[%s505 + $0x20] sm:$0xff] %vm495, %v466
      %511 = vst.msk [vmem:[%s505 + $0x28] sm:$0xff] %vm495, %v467
      %512 = vst.msk [vmem:[%s505 + $0x30] sm:$0xff] %vm495, %v468
      %513 = vst.msk [vmem:[%s505 + $0x38] sm:$0xff] %vm495, %v469
      %514 = vst.msk [vmem:[%s505 + $0x40] sm:$0xff] %vm495, %v470
      %515 = vst.msk [vmem:[%s505 + $0x48] sm:$0xff] %vm495, %v471
      %516 = vst.msk [vmem:[%s505 + $0x50] sm:$0xff] %vm495, %v472
      %517 = vst.msk [vmem:[%s505 + $0x58] sm:$0xff] %vm495, %v473
      %518 = vst.msk [vmem:[%s505 + $0x60] sm:$0xff] %vm495, %v474
      %519 = vst.msk [vmem:[%s505 + $0x68] sm:$0xff] %vm495, %v475
      %520 = vst.msk [vmem:[%s505 + $0x70] sm:$0xff] %vm495, %v476
      %521 = vst.msk [vmem:[%s505 + $0x78] sm:$0xff] %vm495, %v477
      %522 = vst.msk [vmem:[%s505 + $0x80] sm:$0xff] %vm495, %v478
      %523 = vst.msk [vmem:[%s505 + $0x88] sm:$0xff] %vm495, %v479
      %524 = vst.msk [vmem:[%s505 + $0x90] sm:$0xff] %vm495, %v480
      %525 = vst.msk [vmem:[%s505 + $0x98] sm:$0xff] %vm495, %v481
      %526 = vst.msk [vmem:[%s505 + $0xa0] sm:$0xff] %vm495, %v482
      %527 = vst.msk [vmem:[%s505 + $0xa8] sm:$0xff] %vm495, %v483
      %528 = vst.msk [vmem:[%s505 + $0xb0] sm:$0xff] %vm495, %v484
      %529 = vst.msk [vmem:[%s505 + $0xb8] sm:$0xff] %vm495, %v485
      %530 = vst.msk [vmem:[%s505 + $0xc0] sm:$0xff] %vm495, %v486
      %531 = vst.msk [vmem:[%s505 + $0xc8] sm:$0xff] %vm495, %v487
      %532 = vst.msk [vmem:[%s505 + $0xd0] sm:$0xff] %vm495, %v488
      %533 = vst.msk [vmem:[%s505 + $0xd8] sm:$0xff] %vm495, %v489
      %534 = vst.msk [vmem:[%s505 + $0xe0] sm:$0xff] %vm495, %v490
      %535 = vst.msk [vmem:[%s505 + $0xe8] sm:$0xff] %vm495, %v491
      %536 = vst.msk [vmem:[%s505 + $0xf0] sm:$0xff] %vm495, %v492
      %537 = vst.msk [vmem:[%s505 + $0xf8] sm:$0xff] %vm495, %v493
      %v538 = vld [vmem:[#allocation2] sm:$0xff]
      %v539 = vld [vmem:[#allocation2 + $0x8] sm:$0xff]
      %v540 = vld [vmem:[#allocation2 + $0x10] sm:$0xff]
      %v541 = vld [vmem:[#allocation2 + $0x18] sm:$0xff]
      %v542 = vld [vmem:[#allocation2 + $0x20] sm:$0xff]
      %v543 = vld [vmem:[#allocation2 + $0x28] sm:$0xff]
      %v544 = vld [vmem:[#allocation2 + $0x30] sm:$0xff]
      %v545 = vld [vmem:[#allocation2 + $0x38] sm:$0xff]
      %v546 = vld [vmem:[#allocation2 + $0x40] sm:$0xff]
      %v547 = vld [vmem:[#allocation2 + $0x48] sm:$0xff]
      %v548 = vld [vmem:[#allocation2 + $0x50] sm:$0xff]
      %v549 = vld [vmem:[#allocation2 + $0x58] sm:$0xff]
      %v550 = vld [vmem:[#allocation2 + $0x60] sm:$0xff]
      %v551 = vld [vmem:[#allocation2 + $0x68] sm:$0xff]
      %v552 = vld [vmem:[#allocation2 + $0x70] sm:$0xff]
      %v553 = vld [vmem:[#allocation2 + $0x78] sm:$0xff]
      %v554 = vld [vmem:[#allocation2 + $0x80] sm:$0xff]
      %v555 = vld [vmem:[#allocation2 + $0x88] sm:$0xff]
      %v556 = vld [vmem:[#allocation2 + $0x90] sm:$0xff]
      %v557 = vld [vmem:[#allocation2 + $0x98] sm:$0xff]
      %v558 = vld [vmem:[#allocation2 + $0xa0] sm:$0xff]
      %v559 = vld [vmem:[#allocation2 + $0xa8] sm:$0xff]
      %v560 = vld [vmem:[#allocation2 + $0xb0] sm:$0xff]
      %v561 = vld [vmem:[#allocation2 + $0xb8] sm:$0xff]
      %v562 = vld [vmem:[#allocation2 + $0xc0] sm:$0xff]
      %v563 = vld [vmem:[#allocation2 + $0xc8] sm:$0xff]
      %v564 = vld [vmem:[#allocation2 + $0xd0] sm:$0xff]
      %v565 = vld [vmem:[#allocation2 + $0xd8] sm:$0xff]
      %v566 = vld [vmem:[#allocation2 + $0xe0] sm:$0xff]
      %v567 = vld [vmem:[#allocation2 + $0xe8] sm:$0xff]
      %v568 = vld [vmem:[#allocation2 + $0xf0] sm:$0xff]
      %v569 = vld [vmem:[#allocation2 + $0xf8] sm:$0xff]
      %v570 = vld [vmem:[%s4] sm:$0xff]
      %v571 = vld [vmem:[%s505] sm:$0xff]
      %v572 = vld [vmem:[%s505 + $0x8] sm:$0xff]
      %v573 = vld [vmem:[%s505 + $0x10] sm:$0xff]
      %v574 = vld [vmem:[%s505 + $0x18] sm:$0xff]
      %v575 = vld [vmem:[%s505 + $0x20] sm:$0xff]
      %v576 = vld [vmem:[%s505 + $0x28] sm:$0xff]
      %v577 = vld [vmem:[%s505 + $0x30] sm:$0xff]
      %v578 = vld [vmem:[%s505 + $0x38] sm:$0xff]
      %v579 = vld [vmem:[%s505 + $0x40] sm:$0xff]
      %v580 = vld [vmem:[%s505 + $0x48] sm:$0xff]
      %v581 = vld [vmem:[%s505 + $0x50] sm:$0xff]
      %v582 = vld [vmem:[%s505 + $0x58] sm:$0xff]
      %v583 = vld [vmem:[%s505 + $0x60] sm:$0xff]
      %v584 = vld [vmem:[%s505 + $0x68] sm:$0xff]
      %v585 = vld [vmem:[%s505 + $0x70] sm:$0xff]
      %v586 = vld [vmem:[%s505 + $0x78] sm:$0xff]
      %v587 = vld [vmem:[%s505 + $0x80] sm:$0xff]
      %v588 = vld [vmem:[%s505 + $0x88] sm:$0xff]
      %v589 = vld [vmem:[%s505 + $0x90] sm:$0xff]
      %v590 = vld [vmem:[%s505 + $0x98] sm:$0xff]
      %v591 = vld [vmem:[%s505 + $0xa0] sm:$0xff]
      %v592 = vld [vmem:[%s505 + $0xa8] sm:$0xff]
      %v593 = vld [vmem:[%s505 + $0xb0] sm:$0xff]
      %v594 = vld [vmem:[%s505 + $0xb8] sm:$0xff]
      %v595 = vld [vmem:[%s505 + $0xc0] sm:$0xff]
      %v596 = vld [vmem:[%s505 + $0xc8] sm:$0xff]
      %v597 = vld [vmem:[%s505 + $0xd0] sm:$0xff]
      %v598 = vld [vmem:[%s505 + $0xd8] sm:$0xff]
      %v599 = vld [vmem:[%s505 + $0xe0] sm:$0xff]
      %v600 = vld [vmem:[%s505 + $0xe8] sm:$0xff]
      %v601 = vld [vmem:[%s505 + $0xf0] sm:$0xff]
      %v602 = vld [vmem:[%s505 + $0xf8] sm:$0xff]
      %s603 = scalar_lea.vmem %s4, 8
      %v604 = vld [vmem:[%s603] sm:$0xff]
      %v606 = vsel %vm495, %v571, 0
      %v609 = vsel %vm495, %v572, 0
      %v612 = vsel %vm495, %v573, 0
      %v615 = vsel %vm495, %v574, 0
      %v618 = vsel %vm495, %v575, 0
      %v621 = vsel %vm495, %v576, 0
      %v624 = vsel %vm495, %v577, 0
      %v627 = vsel %vm495, %v578, 0
      %v630 = vsel %vm495, %v579, 0
      %v633 = vsel %vm495, %v580, 0
      %v636 = vsel %vm495, %v581, 0
      %v639 = vsel %vm495, %v582, 0
      %v642 = vsel %vm495, %v583, 0
      %v645 = vsel %vm495, %v584, 0
      %v648 = vsel %vm495, %v585, 0
      %v651 = vsel %vm495, %v586, 0
      %v654 = vsel %vm495, %v587, 0
      %v657 = vsel %vm495, %v588, 0
      %v660 = vsel %vm495, %v589, 0
      %v663 = vsel %vm495, %v590, 0
      %v666 = vsel %vm495, %v591, 0
      %v669 = vsel %vm495, %v592, 0
      %v672 = vsel %vm495, %v593, 0
      %v675 = vsel %vm495, %v594, 0
      %v678 = vsel %vm495, %v595, 0
      %v681 = vsel %vm495, %v596, 0
      %v684 = vsel %vm495, %v597, 0
      %v687 = vsel %vm495, %v598, 0
      %v690 = vsel %vm495, %v599, 0
      %v693 = vsel %vm495, %v600, 0
      %v696 = vsel %vm495, %v601, 0
      %v699 = vsel %vm495, %v602, 0
      %701 = vmatpush.msra.mxu0 0.0
      %702 = vmatpush.msra.mxu0 0.0
      %703 = vmatpush.msra.mxu0 0.0
      %704 = vmatpush.msra.mxu0 0.0
      %705 = vmatpush.msra.mxu0 0.0
      %706 = vmatpush.msra.mxu0 0.0
      %707 = vmatpush.msra.mxu0 0.0
      %708 = vmatpush.msra.mxu0 0.0
      %709 = vmatpush.msra.mxu0 0.0
      %710 = vmatpush.msra.mxu0 0.0
      %711 = vmatpush.msra.mxu0 0.0
      %712 = vmatpush.msra.mxu0 0.0
      %713 = vmatpush.msra.mxu0 0.0
      %714 = vmatpush.msra.mxu0 0.0
      %715 = vmatpush.msra.mxu0 0.0
      %716 = vmatpush.msra.mxu0 %v604
      %717 = vmatmul.f32.gmra.mxu0 %v606
      %v718 = vpop.f32.mrf.mxu0
      %v719 = vadd.f32 0.0, %v718
      %720 = vmatmul.f32.gmra.mxu0 %v609
      %v721 = vpop.f32.mrf.mxu0
      %v722 = vadd.f32 0.0, %v721
      %723 = vmatmul.f32.gmra.mxu0 %v612
      %v724 = vpop.f32.mrf.mxu0
      %v725 = vadd.f32 0.0, %v724
      %726 = vmatmul.f32.gmra.mxu0 %v615
      %v727 = vpop.f32.mrf.mxu0
      %v728 = vadd.f32 0.0, %v727
      %729 = vmatmul.f32.gmra.mxu0 %v618
      %v730 = vpop.f32.mrf.mxu0
      %v731 = vadd.f32 0.0, %v730
      %732 = vmatmul.f32.gmra.mxu0 %v621
      %v733 = vpop.f32.mrf.mxu0
      %v734 = vadd.f32 0.0, %v733
      %735 = vmatmul.f32.gmra.mxu0 %v624
      %v736 = vpop.f32.mrf.mxu0
      %v737 = vadd.f32 0.0, %v736
      %738 = vmatmul.f32.gmra.mxu0 %v627
      %v739 = vpop.f32.mrf.mxu0
      %v740 = vadd.f32 0.0, %v739
      %741 = vmatmul.f32.gmra.mxu0 %v630
      %v742 = vpop.f32.mrf.mxu0
      %v743 = vadd.f32 0.0, %v742
      %744 = vmatmul.f32.gmra.mxu0 %v633
      %v745 = vpop.f32.mrf.mxu0
      %v746 = vadd.f32 0.0, %v745
      %747 = vmatmul.f32.gmra.mxu0 %v636
      %v748 = vpop.f32.mrf.mxu0
      %v749 = vadd.f32 0.0, %v748
      %750 = vmatmul.f32.gmra.mxu0 %v639
      %v751 = vpop.f32.mrf.mxu0
      %v752 = vadd.f32 0.0, %v751
      %753 = vmatmul.f32.gmra.mxu0 %v642
      %v754 = vpop.f32.mrf.mxu0
      %v755 = vadd.f32 0.0, %v754
      %756 = vmatmul.f32.gmra.mxu0 %v645
      %v757 = vpop.f32.mrf.mxu0
      %v758 = vadd.f32 0.0, %v757
      %759 = vmatmul.f32.gmra.mxu0 %v648
      %v760 = vpop.f32.mrf.mxu0
      %v761 = vadd.f32 0.0, %v760
      %762 = vmatmul.f32.gmra.mxu0 %v651
      %v763 = vpop.f32.mrf.mxu0
      %v764 = vadd.f32 0.0, %v763
      %765 = vmatmul.f32.gmra.mxu0 %v654
      %v766 = vpop.f32.mrf.mxu0
      %v767 = vadd.f32 0.0, %v766
      %768 = vmatmul.f32.gmra.mxu0 %v657
      %v769 = vpop.f32.mrf.mxu0
      %v770 = vadd.f32 0.0, %v769
      %771 = vmatmul.f32.gmra.mxu0 %v660
      %v772 = vpop.f32.mrf.mxu0
      %v773 = vadd.f32 0.0, %v772
      %774 = vmatmul.f32.gmra.mxu0 %v663
      %v775 = vpop.f32.mrf.mxu0
      %v776 = vadd.f32 0.0, %v775
      %777 = vmatmul.f32.gmra.mxu0 %v666
      %v778 = vpop.f32.mrf.mxu0
      %v779 = vadd.f32 0.0, %v778
      %780 = vmatmul.f32.gmra.mxu0 %v669
      %v781 = vpop.f32.mrf.mxu0
      %v782 = vadd.f32 0.0, %v781
      %783 = vmatmul.f32.gmra.mxu0 %v672
      %v784 = vpop.f32.mrf.mxu0
      %v785 = vadd.f32 0.0, %v784
      %786 = vmatmul.f32.gmra.mxu0 %v675
      %v787 = vpop.f32.mrf.mxu0
      %v788 = vadd.f32 0.0, %v787
      %789 = vmatmul.f32.gmra.mxu0 %v678
      %v790 = vpop.f32.mrf.mxu0
      %v791 = vadd.f32 0.0, %v790
      %792 = vmatmul.f32.gmra.mxu0 %v681
      %v793 = vpop.f32.mrf.mxu0
      %v794 = vadd.f32 0.0, %v793
      %795 = vmatmul.f32.gmra.mxu0 %v684
      %v796 = vpop.f32.mrf.mxu0
      %v797 = vadd.f32 0.0, %v796
      %798 = vmatmul.f32.gmra.mxu0 %v687
      %v799 = vpop.f32.mrf.mxu0
      %v800 = vadd.f32 0.0, %v799
      %801 = vmatmul.f32.gmra.mxu0 %v690
      %v802 = vpop.f32.mrf.mxu0
      %v803 = vadd.f32 0.0, %v802
      %804 = vmatmul.f32.gmra.mxu0 %v693
      %v805 = vpop.f32.mrf.mxu0
      %v806 = vadd.f32 0.0, %v805
      %807 = vmatmul.f32.gmra.mxu0 %v696
      %v808 = vpop.f32.mrf.mxu0
      %v809 = vadd.f32 0.0, %v808
      %810 = vmatmul.f32.gmra.mxu0 %v699
      %v811 = vpop.f32.mrf.mxu0
      %v812 = vadd.f32 0.0, %v811
      %813 = vdwg.mxu0
      %v815 = vsel %vm495, %v538, 0
      %v818 = vsel %vm495, %v539, 0
      %v821 = vsel %vm495, %v540, 0
      %v824 = vsel %vm495, %v541, 0
      %v827 = vsel %vm495, %v542, 0
      %v830 = vsel %vm495, %v543, 0
      %v833 = vsel %vm495, %v544, 0
      %v836 = vsel %vm495, %v545, 0
      %v839 = vsel %vm495, %v546, 0
      %v842 = vsel %vm495, %v547, 0
      %v845 = vsel %vm495, %v548, 0
      %v848 = vsel %vm495, %v549, 0
      %v851 = vsel %vm495, %v550, 0
      %v854 = vsel %vm495, %v551, 0
      %v857 = vsel %vm495, %v552, 0
      %v860 = vsel %vm495, %v553, 0
      %v863 = vsel %vm495, %v554, 0
      %v866 = vsel %vm495, %v555, 0
      %v869 = vsel %vm495, %v556, 0
      %v872 = vsel %vm495, %v557, 0
      %v875 = vsel %vm495, %v558, 0
      %v878 = vsel %vm495, %v559, 0
      %v881 = vsel %vm495, %v560, 0
      %v884 = vsel %vm495, %v561, 0
      %v887 = vsel %vm495, %v562, 0
      %v890 = vsel %vm495, %v563, 0
      %v893 = vsel %vm495, %v564, 0
      %v896 = vsel %vm495, %v565, 0
      %v899 = vsel %vm495, %v566, 0
      %v902 = vsel %vm495, %v567, 0
      %v905 = vsel %vm495, %v568, 0
      %v908 = vsel %vm495, %v569, 0
      %910 = vmatpush.msra.mxu0 0.0
      %911 = vmatpush.msra.mxu0 0.0
      %912 = vmatpush.msra.mxu0 0.0
      %913 = vmatpush.msra.mxu0 0.0
      %914 = vmatpush.msra.mxu0 0.0
      %915 = vmatpush.msra.mxu0 0.0
      %916 = vmatpush.msra.mxu0 0.0
      %917 = vmatpush.msra.mxu0 0.0
      %918 = vmatpush.msra.mxu0 0.0
      %919 = vmatpush.msra.mxu0 0.0
      %920 = vmatpush.msra.mxu0 0.0
      %921 = vmatpush.msra.mxu0 0.0
      %922 = vmatpush.msra.mxu0 0.0
      %923 = vmatpush.msra.mxu0 0.0
      %924 = vmatpush.msra.mxu0 0.0
      %925 = vmatpush.msra.mxu0 %v570
      %926 = vmatmul.f32.gmra.mxu0 %v815
      %v927 = vpop.f32.mrf.mxu0
      %v928 = vadd.f32 %v719, %v927
      %929 = vmatmul.f32.gmra.mxu0 %v818
      %v930 = vpop.f32.mrf.mxu0
      %v931 = vadd.f32 %v722, %v930
      %932 = vmatmul.f32.gmra.mxu0 %v821
      %v933 = vpop.f32.mrf.mxu0
      %v934 = vadd.f32 %v725, %v933
      %935 = vmatmul.f32.gmra.mxu0 %v824
      %v936 = vpop.f32.mrf.mxu0
      %v937 = vadd.f32 %v728, %v936
      %938 = vmatmul.f32.gmra.mxu0 %v827
      %v939 = vpop.f32.mrf.mxu0
      %v940 = vadd.f32 %v731, %v939
      %941 = vmatmul.f32.gmra.mxu0 %v830
      %v942 = vpop.f32.mrf.mxu0
      %v943 = vadd.f32 %v734, %v942
      %944 = vmatmul.f32.gmra.mxu0 %v833
      %v945 = vpop.f32.mrf.mxu0
      %v946 = vadd.f32 %v737, %v945
      %947 = vmatmul.f32.gmra.mxu0 %v836
      %v948 = vpop.f32.mrf.mxu0
      %v949 = vadd.f32 %v740, %v948
      %950 = vmatmul.f32.gmra.mxu0 %v839
      %v951 = vpop.f32.mrf.mxu0
      %v952 = vadd.f32 %v743, %v951
      %953 = vmatmul.f32.gmra.mxu0 %v842
      %v954 = vpop.f32.mrf.mxu0
      %v955 = vadd.f32 %v746, %v954
      %956 = vmatmul.f32.gmra.mxu0 %v845
      %v957 = vpop.f32.mrf.mxu0
      %v958 = vadd.f32 %v749, %v957
      %959 = vmatmul.f32.gmra.mxu0 %v848
      %v960 = vpop.f32.mrf.mxu0
      %v961 = vadd.f32 %v752, %v960
      %962 = vmatmul.f32.gmra.mxu0 %v851
      %v963 = vpop.f32.mrf.mxu0
      %v964 = vadd.f32 %v755, %v963
      %965 = vmatmul.f32.gmra.mxu0 %v854
      %v966 = vpop.f32.mrf.mxu0
      %v967 = vadd.f32 %v758, %v966
      %968 = vmatmul.f32.gmra.mxu0 %v857
      %v969 = vpop.f32.mrf.mxu0
      %v970 = vadd.f32 %v761, %v969
      %971 = vmatmul.f32.gmra.mxu0 %v860
      %v972 = vpop.f32.mrf.mxu0
      %v973 = vadd.f32 %v764, %v972
      %974 = vmatmul.f32.gmra.mxu0 %v863
      %v975 = vpop.f32.mrf.mxu0
      %v976 = vadd.f32 %v767, %v975
      %977 = vmatmul.f32.gmra.mxu0 %v866
      %v978 = vpop.f32.mrf.mxu0
      %v979 = vadd.f32 %v770, %v978
      %980 = vmatmul.f32.gmra.mxu0 %v869
      %v981 = vpop.f32.mrf.mxu0
      %v982 = vadd.f32 %v773, %v981
      %983 = vmatmul.f32.gmra.mxu0 %v872
      %v984 = vpop.f32.mrf.mxu0
      %v985 = vadd.f32 %v776, %v984
      %986 = vmatmul.f32.gmra.mxu0 %v875
      %v987 = vpop.f32.mrf.mxu0
      %v988 = vadd.f32 %v779, %v987
      %989 = vmatmul.f32.gmra.mxu0 %v878
      %v990 = vpop.f32.mrf.mxu0
      %v991 = vadd.f32 %v782, %v990
      %992 = vmatmul.f32.gmra.mxu0 %v881
      %v993 = vpop.f32.mrf.mxu0
      %v994 = vadd.f32 %v785, %v993
      %995 = vmatmul.f32.gmra.mxu0 %v884
      %v996 = vpop.f32.mrf.mxu0
      %v997 = vadd.f32 %v788, %v996
      %998 = vmatmul.f32.gmra.mxu0 %v887
      %v999 = vpop.f32.mrf.mxu0
      %v1000 = vadd.f32 %v791, %v999
      %1001 = vmatmul.f32.gmra.mxu0 %v890
      %v1002 = vpop.f32.mrf.mxu0
      %v1003 = vadd.f32 %v794, %v1002
      %1004 = vmatmul.f32.gmra.mxu0 %v893
      %v1005 = vpop.f32.mrf.mxu0
      %v1006 = vadd.f32 %v797, %v1005
      %1007 = vmatmul.f32.gmra.mxu0 %v896
      %v1008 = vpop.f32.mrf.mxu0
      %v1009 = vadd.f32 %v800, %v1008
      %1010 = vmatmul.f32.gmra.mxu0 %v899
      %v1011 = vpop.f32.mrf.mxu0
      %v1012 = vadd.f32 %v803, %v1011
      %1013 = vmatmul.f32.gmra.mxu0 %v902
      %v1014 = vpop.f32.mrf.mxu0
      %v1015 = vadd.f32 %v806, %v1014
      %1016 = vmatmul.f32.gmra.mxu0 %v905
      %v1017 = vpop.f32.mrf.mxu0
      %v1018 = vadd.f32 %v809, %v1017
      %1019 = vmatmul.f32.gmra.mxu0 %v908
      %v1020 = vpop.f32.mrf.mxu0
      %v1021 = vadd.f32 %v812, %v1020
      %1022 = vdwg.mxu0
      %s1023 = scalar_lea.vmem [#allocation2], 64
      %v1024 = vld [vmem:[%s1023] sm:$0xff]
      %v1025 = vld [vmem:[%s1023 + $0x8] sm:$0xff]
      %v1026 = vld [vmem:[%s1023 + $0x10] sm:$0xff]
      %v1027 = vld [vmem:[%s1023 + $0x18] sm:$0xff]
      %v1028 = vld [vmem:[%s1023 + $0x20] sm:$0xff]
      %v1029 = vld [vmem:[%s1023 + $0x28] sm:$0xff]
      %v1030 = vld [vmem:[%s1023 + $0x30] sm:$0xff]
      %v1031 = vld [vmem:[%s1023 + $0x38] sm:$0xff]
      %v1032 = vld [vmem:[%s1023 + $0x40] sm:$0xff]
      %v1033 = vld [vmem:[%s1023 + $0x48] sm:$0xff]
      %v1034 = vld [vmem:[%s1023 + $0x50] sm:$0xff]
      %v1035 = vld [vmem:[%s1023 + $0x58] sm:$0xff]
      %v1036 = vld [vmem:[%s1023 + $0x60] sm:$0xff]
      %v1037 = vld [vmem:[%s1023 + $0x68] sm:$0xff]
      %v1038 = vld [vmem:[%s1023 + $0x70] sm:$0xff]
      %v1039 = vld [vmem:[%s1023 + $0x78] sm:$0xff]
      %v1040 = vld [vmem:[%s1023 + $0x80] sm:$0xff]
      %v1041 = vld [vmem:[%s1023 + $0x88] sm:$0xff]
      %v1042 = vld [vmem:[%s1023 + $0x90] sm:$0xff]
      %v1043 = vld [vmem:[%s1023 + $0x98] sm:$0xff]
      %v1044 = vld [vmem:[%s1023 + $0xa0] sm:$0xff]
      %v1045 = vld [vmem:[%s1023 + $0xa8] sm:$0xff]
      %v1046 = vld [vmem:[%s1023 + $0xb0] sm:$0xff]
      %v1047 = vld [vmem:[%s1023 + $0xb8] sm:$0xff]
      %v1048 = vld [vmem:[%s1023 + $0xc0] sm:$0xff]
      %v1049 = vld [vmem:[%s1023 + $0xc8] sm:$0xff]
      %v1050 = vld [vmem:[%s1023 + $0xd0] sm:$0xff]
      %v1051 = vld [vmem:[%s1023 + $0xd8] sm:$0xff]
      %v1052 = vld [vmem:[%s1023 + $0xe0] sm:$0xff]
      %v1053 = vld [vmem:[%s1023 + $0xe8] sm:$0xff]
      %v1054 = vld [vmem:[%s1023 + $0xf0] sm:$0xff]
      %v1055 = vld [vmem:[%s1023 + $0xf8] sm:$0xff]
      %s1056 = scalar_lea.vmem %s4, 16
      %v1057 = vld [vmem:[%s1056] sm:$0xff]
      %v1059 = vsel %vm495, %v1024, 0
      %v1062 = vsel %vm495, %v1025, 0
      %v1065 = vsel %vm495, %v1026, 0
      %v1068 = vsel %vm495, %v1027, 0
      %v1071 = vsel %vm495, %v1028, 0
      %v1074 = vsel %vm495, %v1029, 0
      %v1077 = vsel %vm495, %v1030, 0
      %v1080 = vsel %vm495, %v1031, 0
      %v1083 = vsel %vm495, %v1032, 0
      %v1086 = vsel %vm495, %v1033, 0
      %v1089 = vsel %vm495, %v1034, 0
      %v1092 = vsel %vm495, %v1035, 0
      %v1095 = vsel %vm495, %v1036, 0
      %v1098 = vsel %vm495, %v1037, 0
      %v1101 = vsel %vm495, %v1038, 0
      %v1104 = vsel %vm495, %v1039, 0
      %v1107 = vsel %vm495, %v1040, 0
      %v1110 = vsel %vm495, %v1041, 0
      %v1113 = vsel %vm495, %v1042, 0
      %v1116 = vsel %vm495, %v1043, 0
      %v1119 = vsel %vm495, %v1044, 0
      %v1122 = vsel %vm495, %v1045, 0
      %v1125 = vsel %vm495, %v1046, 0
      %v1128 = vsel %vm495, %v1047, 0
      %v1131 = vsel %vm495, %v1048, 0
      %v1134 = vsel %vm495, %v1049, 0
      %v1137 = vsel %vm495, %v1050, 0
      %v1140 = vsel %vm495, %v1051, 0
      %v1143 = vsel %vm495, %v1052, 0
      %v1146 = vsel %vm495, %v1053, 0
      %v1149 = vsel %vm495, %v1054, 0
      %v1152 = vsel %vm495, %v1055, 0
      %1154 = vmatpush.msra.mxu0 0.0
      %1155 = vmatpush.msra.mxu0 0.0
      %1156 = vmatpush.msra.mxu0 0.0
      %1157 = vmatpush.msra.mxu0 0.0
      %1158 = vmatpush.msra.mxu0 0.0
      %1159 = vmatpush.msra.mxu0 0.0
      %1160 = vmatpush.msra.mxu0 0.0
      %1161 = vmatpush.msra.mxu0 0.0
      %1162 = vmatpush.msra.mxu0 0.0
      %1163 = vmatpush.msra.mxu0 0.0
      %1164 = vmatpush.msra.mxu0 0.0
      %1165 = vmatpush.msra.mxu0 0.0
      %1166 = vmatpush.msra.mxu0 0.0
      %1167 = vmatpush.msra.mxu0 0.0
      %1168 = vmatpush.msra.mxu0 0.0
      %1169 = vmatpush.msra.mxu0 %v1057
      %1170 = vmatmul.f32.gmra.mxu0 %v1059
      %v1171 = vpop.f32.mrf.mxu0
      %v1172 = vadd.f32 0.0, %v1171
      %1173 = vmatmul.f32.gmra.mxu0 %v1062
      %v1174 = vpop.f32.mrf.mxu0
      %v1175 = vadd.f32 0.0, %v1174
      %1176 = vmatmul.f32.gmra.mxu0 %v1065
      %v1177 = vpop.f32.mrf.mxu0
      %v1178 = vadd.f32 0.0, %v1177
      %1179 = vmatmul.f32.gmra.mxu0 %v1068
      %v1180 = vpop.f32.mrf.mxu0
      %v1181 = vadd.f32 0.0, %v1180
      %1182 = vmatmul.f32.gmra.mxu0 %v1071
      %v1183 = vpop.f32.mrf.mxu0
      %v1184 = vadd.f32 0.0, %v1183
      %1185 = vmatmul.f32.gmra.mxu0 %v1074
      %v1186 = vpop.f32.mrf.mxu0
      %v1187 = vadd.f32 0.0, %v1186
      %1188 = vmatmul.f32.gmra.mxu0 %v1077
      %v1189 = vpop.f32.mrf.mxu0
      %v1190 = vadd.f32 0.0, %v1189
      %1191 = vmatmul.f32.gmra.mxu0 %v1080
      %v1192 = vpop.f32.mrf.mxu0
      %v1193 = vadd.f32 0.0, %v1192
      %1194 = vmatmul.f32.gmra.mxu0 %v1083
      %v1195 = vpop.f32.mrf.mxu0
      %v1196 = vadd.f32 0.0, %v1195
      %1197 = vmatmul.f32.gmra.mxu0 %v1086
      %v1198 = vpop.f32.mrf.mxu0
      %v1199 = vadd.f32 0.0, %v1198
      %1200 = vmatmul.f32.gmra.mxu0 %v1089
      %v1201 = vpop.f32.mrf.mxu0
      %v1202 = vadd.f32 0.0, %v1201
      %1203 = vmatmul.f32.gmra.mxu0 %v1092
      %v1204 = vpop.f32.mrf.mxu0
      %v1205 = vadd.f32 0.0, %v1204
      %1206 = vmatmul.f32.gmra.mxu0 %v1095
      %v1207 = vpop.f32.mrf.mxu0
      %v1208 = vadd.f32 0.0, %v1207
      %1209 = vmatmul.f32.gmra.mxu0 %v1098
      %v1210 = vpop.f32.mrf.mxu0
      %v1211 = vadd.f32 0.0, %v1210
      %1212 = vmatmul.f32.gmra.mxu0 %v1101
      %v1213 = vpop.f32.mrf.mxu0
      %v1214 = vadd.f32 0.0, %v1213
      %1215 = vmatmul.f32.gmra.mxu0 %v1104
      %v1216 = vpop.f32.mrf.mxu0
      %v1217 = vadd.f32 0.0, %v1216
      %1218 = vmatmul.f32.gmra.mxu0 %v1107
      %v1219 = vpop.f32.mrf.mxu0
      %v1220 = vadd.f32 0.0, %v1219
      %1221 = vmatmul.f32.gmra.mxu0 %v1110
      %v1222 = vpop.f32.mrf.mxu0
      %v1223 = vadd.f32 0.0, %v1222
      %1224 = vmatmul.f32.gmra.mxu0 %v1113
      %v1225 = vpop.f32.mrf.mxu0
      %v1226 = vadd.f32 0.0, %v1225
      %1227 = vmatmul.f32.gmra.mxu0 %v1116
      %v1228 = vpop.f32.mrf.mxu0
      %v1229 = vadd.f32 0.0, %v1228
      %1230 = vmatmul.f32.gmra.mxu0 %v1119
      %v1231 = vpop.f32.mrf.mxu0
      %v1232 = vadd.f32 0.0, %v1231
      %1233 = vmatmul.f32.gmra.mxu0 %v1122
      %v1234 = vpop.f32.mrf.mxu0
      %v1235 = vadd.f32 0.0, %v1234
      %1236 = vmatmul.f32.gmra.mxu0 %v1125
      %v1237 = vpop.f32.mrf.mxu0
      %v1238 = vadd.f32 0.0, %v1237
      %1239 = vmatmul.f32.gmra.mxu0 %v1128
      %v1240 = vpop.f32.mrf.mxu0
      %v1241 = vadd.f32 0.0, %v1240
      %1242 = vmatmul.f32.gmra.mxu0 %v1131
      %v1243 = vpop.f32.mrf.mxu0
      %v1244 = vadd.f32 0.0, %v1243
      %1245 = vmatmul.f32.gmra.mxu0 %v1134
      %v1246 = vpop.f32.mrf.mxu0
      %v1247 = vadd.f32 0.0, %v1246
      %1248 = vmatmul.f32.gmra.mxu0 %v1137
      %v1249 = vpop.f32.mrf.mxu0
      %v1250 = vadd.f32 0.0, %v1249
      %1251 = vmatmul.f32.gmra.mxu0 %v1140
      %v1252 = vpop.f32.mrf.mxu0
      %v1253 = vadd.f32 0.0, %v1252
      %1254 = vmatmul.f32.gmra.mxu0 %v1143
      %v1255 = vpop.f32.mrf.mxu0
      %v1256 = vadd.f32 0.0, %v1255
      %1257 = vmatmul.f32.gmra.mxu0 %v1146
      %v1258 = vpop.f32.mrf.mxu0
      %v1259 = vadd.f32 0.0, %v1258
      %1260 = vmatmul.f32.gmra.mxu0 %v1149
      %v1261 = vpop.f32.mrf.mxu0
      %v1262 = vadd.f32 0.0, %v1261
      %1263 = vmatmul.f32.gmra.mxu0 %v1152
      %v1264 = vpop.f32.mrf.mxu0
      %v1265 = vadd.f32 0.0, %v1264
      %1266 = vdwg.mxu0
      %v1267 = vadd.f32 %v928, %v1172
      %v1268 = vadd.f32 %v931, %v1175
      %v1269 = vadd.f32 %v934, %v1178
      %v1270 = vadd.f32 %v937, %v1181
      %v1271 = vadd.f32 %v940, %v1184
      %v1272 = vadd.f32 %v943, %v1187
      %v1273 = vadd.f32 %v946, %v1190
      %v1274 = vadd.f32 %v949, %v1193
      %v1275 = vadd.f32 %v952, %v1196
      %v1276 = vadd.f32 %v955, %v1199
      %v1277 = vadd.f32 %v958, %v1202
      %v1278 = vadd.f32 %v961, %v1205
      %v1279 = vadd.f32 %v964, %v1208
      %v1280 = vadd.f32 %v967, %v1211
      %v1281 = vadd.f32 %v970, %v1214
      %v1282 = vadd.f32 %v973, %v1217
      %v1283 = vadd.f32 %v976, %v1220
      %v1284 = vadd.f32 %v979, %v1223
      %v1285 = vadd.f32 %v982, %v1226
      %v1286 = vadd.f32 %v985, %v1229
      %v1287 = vadd.f32 %v988, %v1232
      %v1288 = vadd.f32 %v991, %v1235
      %v1289 = vadd.f32 %v994, %v1238
      %v1290 = vadd.f32 %v997, %v1241
      %v1291 = vadd.f32 %v1000, %v1244
      %v1292 = vadd.f32 %v1003, %v1247
      %v1293 = vadd.f32 %v1006, %v1250
      %v1294 = vadd.f32 %v1009, %v1253
      %v1295 = vadd.f32 %v1012, %v1256
      %v1296 = vadd.f32 %v1015, %v1259
      %v1297 = vadd.f32 %v1018, %v1262
      %v1298 = vadd.f32 %v1021, %v1265
      %v1300 = vperm.slane %v494, 0
      %v1302 = vadd.f32 %v1267, %v1300
      %v1303 = vadd.f32 %v1268, %v1300
      %v1304 = vadd.f32 %v1269, %v1300
      %v1305 = vadd.f32 %v1270, %v1300
      %v1306 = vadd.f32 %v1271, %v1300
      %v1307 = vadd.f32 %v1272, %v1300
      %v1308 = vadd.f32 %v1273, %v1300
      %v1309 = vadd.f32 %v1274, %v1300
      %v1310 = vadd.f32 %v1275, %v1300
      %v1311 = vadd.f32 %v1276, %v1300
      %v1312 = vadd.f32 %v1277, %v1300
      %v1313 = vadd.f32 %v1278, %v1300
      %v1314 = vadd.f32 %v1279, %v1300
      %v1315 = vadd.f32 %v1280, %v1300
      %v1316 = vadd.f32 %v1281, %v1300
      %v1317 = vadd.f32 %v1282, %v1300
      %v1318 = vadd.f32 %v1283, %v1300
      %v1319 = vadd.f32 %v1284, %v1300
      %v1320 = vadd.f32 %v1285, %v1300
      %v1321 = vadd.f32 %v1286, %v1300
      %v1322 = vadd.f32 %v1287, %v1300
      %v1323 = vadd.f32 %v1288, %v1300
      %v1324 = vadd.f32 %v1289, %v1300
      %v1325 = vadd.f32 %v1290, %v1300
      %v1326 = vadd.f32 %v1291, %v1300
      %v1327 = vadd.f32 %v1292, %v1300
      %v1328 = vadd.f32 %v1293, %v1300
      %v1329 = vadd.f32 %v1294, %v1300
      %v1330 = vadd.f32 %v1295, %v1300
      %v1331 = vadd.f32 %v1296, %v1300
      %v1332 = vadd.f32 %v1297, %v1300
      %v1333 = vadd.f32 %v1298, %v1300
      %v1334 = vmax.f32 %v1302, 0.0
      %v1335 = vmax.f32 %v1303, 0.0
      %v1336 = vmax.f32 %v1304, 0.0
      %v1337 = vmax.f32 %v1305, 0.0
      %v1338 = vmax.f32 %v1306, 0.0
      %v1339 = vmax.f32 %v1307, 0.0
      %v1340 = vmax.f32 %v1308, 0.0
      %v1341 = vmax.f32 %v1309, 0.0
      %v1342 = vmax.f32 %v1310, 0.0
      %v1343 = vmax.f32 %v1311, 0.0
      %v1344 = vmax.f32 %v1312, 0.0
      %v1345 = vmax.f32 %v1313, 0.0
      %v1346 = vmax.f32 %v1314, 0.0
      %v1347 = vmax.f32 %v1315, 0.0
      %v1348 = vmax.f32 %v1316, 0.0
      %v1349 = vmax.f32 %v1317, 0.0
      %v1350 = vmax.f32 %v1318, 0.0
      %v1351 = vmax.f32 %v1319, 0.0
      %v1352 = vmax.f32 %v1320, 0.0
      %v1353 = vmax.f32 %v1321, 0.0
      %v1354 = vmax.f32 %v1322, 0.0
      %v1355 = vmax.f32 %v1323, 0.0
      %v1356 = vmax.f32 %v1324, 0.0
      %v1357 = vmax.f32 %v1325, 0.0
      %v1358 = vmax.f32 %v1326, 0.0
      %v1359 = vmax.f32 %v1327, 0.0
      %v1360 = vmax.f32 %v1328, 0.0
      %v1361 = vmax.f32 %v1329, 0.0
      %v1362 = vmax.f32 %v1330, 0.0
      %v1363 = vmax.f32 %v1331, 0.0
      %v1364 = vmax.f32 %v1332, 0.0
      %v1365 = vmax.f32 %v1333, 0.0
      %v1366 = vld [vmem:[%s7] sm:$0x1]
      %vm1367 = vcmask 58368
      %1368 = vst.msk [vmem:[#allocation3] sm:$0x3] %vm1367, 0.0
      %1369 = vst.msk [vmem:[#allocation3 + $0x18] sm:$0x3] %vm1367, 0.0
      %1370 = vst.msk [vmem:[#allocation3 + $0x30] sm:$0x3] %vm1367, 0.0
      %1371 = vst.msk [vmem:[#allocation3 + $0x48] sm:$0x3] %vm1367, 0.0
      %1372 = vst.msk [vmem:[#allocation3 + $0x60] sm:$0x3] %vm1367, 0.0
      %1373 = vst.msk [vmem:[#allocation3 + $0x78] sm:$0x3] %vm1367, 0.0
      %1374 = vst.msk [vmem:[#allocation3 + $0x90] sm:$0x3] %vm1367, 0.0
      %1375 = vst.msk [vmem:[#allocation3 + $0xa8] sm:$0x3] %vm1367, 0.0
      %1376 = vst.msk [vmem:[#allocation3 + $0xc0] sm:$0x3] %vm1367, 0.0
      %1377 = vst.msk [vmem:[#allocation3 + $0xd8] sm:$0x3] %vm1367, 0.0
      %1378 = vst.msk [vmem:[#allocation3 + $0xf0] sm:$0x3] %vm1367, 0.0
      %1379 = vst.msk [vmem:[#allocation3 + $0x108] sm:$0x3] %vm1367, 0.0
      %1380 = vst.msk [vmem:[#allocation3 + $0x120] sm:$0x3] %vm1367, 0.0
      %1381 = vst.msk [vmem:[#allocation3 + $0x138] sm:$0x3] %vm1367, 0.0
      %1382 = vst.msk [vmem:[#allocation3 + $0x150] sm:$0x3] %vm1367, 0.0
      %1383 = vst.msk [vmem:[#allocation3 + $0x168] sm:$0x3] %vm1367, 0.0
      %1384 = vst.msk [vmem:[#allocation3 + $0x12] sm:$0x3] %vm1367, 0.0
      %1385 = vst.msk [vmem:[#allocation3 + $0x2a] sm:$0x3] %vm1367, 0.0
      %1386 = vst.msk [vmem:[#allocation3 + $0x42] sm:$0x3] %vm1367, 0.0
      %1387 = vst.msk [vmem:[#allocation3 + $0x5a] sm:$0x3] %vm1367, 0.0
      %1388 = vst.msk [vmem:[#allocation3 + $0x72] sm:$0x3] %vm1367, 0.0
      %1389 = vst.msk [vmem:[#allocation3 + $0x8a] sm:$0x3] %vm1367, 0.0
      %1390 = vst.msk [vmem:[#allocation3 + $0xa2] sm:$0x3] %vm1367, 0.0
      %1391 = vst.msk [vmem:[#allocation3 + $0xba] sm:$0x3] %vm1367, 0.0
      %1392 = vst.msk [vmem:[#allocation3 + $0xd2] sm:$0x3] %vm1367, 0.0
      %1393 = vst.msk [vmem:[#allocation3 + $0xea] sm:$0x3] %vm1367, 0.0
      %1394 = vst.msk [vmem:[#allocation3 + $0x102] sm:$0x3] %vm1367, 0.0
      %1395 = vst.msk [vmem:[#allocation3 + $0x11a] sm:$0x3] %vm1367, 0.0
      %1396 = vst.msk [vmem:[#allocation3 + $0x132] sm:$0x3] %vm1367, 0.0
      %1397 = vst.msk [vmem:[#allocation3 + $0x14a] sm:$0x3] %vm1367, 0.0
      %1398 = vst.msk [vmem:[#allocation3 + $0x162] sm:$0x3] %vm1367, 0.0
      %1399 = vst.msk [vmem:[#allocation3 + $0x17a] sm:$0x3] %vm1367, 0.0
      %1400 = vst.msk [vmem:[#allocation3 + $0x2] sm:$0xff] %vm495, %v1334
      %1401 = vst.msk [vmem:[#allocation3 + $0xa] sm:$0xff] %vm495, %v1335
      %1402 = vst.msk [vmem:[#allocation3 + $0x1a] sm:$0xff] %vm495, %v1336
      %1403 = vst.msk [vmem:[#allocation3 + $0x22] sm:$0xff] %vm495, %v1337
      %1404 = vst.msk [vmem:[#allocation3 + $0x32] sm:$0xff] %vm495, %v1338
      %1405 = vst.msk [vmem:[#allocation3 + $0x3a] sm:$0xff] %vm495, %v1339
      %1406 = vst.msk [vmem:[#allocation3 + $0x4a] sm:$0xff] %vm495, %v1340
      %1407 = vst.msk [vmem:[#allocation3 + $0x52] sm:$0xff] %vm495, %v1341
      %1408 = vst.msk [vmem:[#allocation3 + $0x62] sm:$0xff] %vm495, %v1342
      %1409 = vst.msk [vmem:[#allocation3 + $0x6a] sm:$0xff] %vm495, %v1343
      %1410 = vst.msk [vmem:[#allocation3 + $0x7a] sm:$0xff] %vm495, %v1344
      %1411 = vst.msk [vmem:[#allocation3 + $0x82] sm:$0xff] %vm495, %v1345
      %1412 = vst.msk [vmem:[#allocation3 + $0x92] sm:$0xff] %vm495, %v1346
      %1413 = vst.msk [vmem:[#allocation3 + $0x9a] sm:$0xff] %vm495, %v1347
      %1414 = vst.msk [vmem:[#allocation3 + $0xaa] sm:$0xff] %vm495, %v1348
      %1415 = vst.msk [vmem:[#allocation3 + $0xb2] sm:$0xff] %vm495, %v1349
      %1416 = vst.msk [vmem:[#allocation3 + $0xc2] sm:$0xff] %vm495, %v1350
      %1417 = vst.msk [vmem:[#allocation3 + $0xca] sm:$0xff] %vm495, %v1351
      %1418 = vst.msk [vmem:[#allocation3 + $0xda] sm:$0xff] %vm495, %v1352
      %1419 = vst.msk [vmem:[#allocation3 + $0xe2] sm:$0xff] %vm495, %v1353
      %1420 = vst.msk [vmem:[#allocation3 + $0xf2] sm:$0xff] %vm495, %v1354
      %1421 = vst.msk [vmem:[#allocation3 + $0xfa] sm:$0xff] %vm495, %v1355
      %1422 = vst.msk [vmem:[#allocation3 + $0x10a] sm:$0xff] %vm495, %v1356
      %1423 = vst.msk [vmem:[#allocation3 + $0x112] sm:$0xff] %vm495, %v1357
      %1424 = vst.msk [vmem:[#allocation3 + $0x122] sm:$0xff] %vm495, %v1358
      %1425 = vst.msk [vmem:[#allocation3 + $0x12a] sm:$0xff] %vm495, %v1359
      %1426 = vst.msk [vmem:[#allocation3 + $0x13a] sm:$0xff] %vm495, %v1360
      %1427 = vst.msk [vmem:[#allocation3 + $0x142] sm:$0xff] %vm495, %v1361
      %1428 = vst.msk [vmem:[#allocation3 + $0x152] sm:$0xff] %vm495, %v1362
      %1429 = vst.msk [vmem:[#allocation3 + $0x15a] sm:$0xff] %vm495, %v1363
      %1430 = vst.msk [vmem:[#allocation3 + $0x16a] sm:$0xff] %vm495, %v1364
      %1431 = vst.msk [vmem:[#allocation3 + $0x172] sm:$0xff] %vm495, %v1365
      %v1432 = vld [vmem:[#allocation3] sm:$0xff]
      %v1433 = vld [vmem:[#allocation3 + $0x8] sm:$0xff]
      %v1434 = vld [vmem:[#allocation3 + $0x18] sm:$0xff]
      %v1435 = vld [vmem:[#allocation3 + $0x20] sm:$0xff]
      %v1436 = vld [vmem:[#allocation3 + $0x30] sm:$0xff]
      %v1437 = vld [vmem:[#allocation3 + $0x38] sm:$0xff]
      %v1438 = vld [vmem:[#allocation3 + $0x48] sm:$0xff]
      %v1439 = vld [vmem:[#allocation3 + $0x50] sm:$0xff]
      %v1440 = vld [vmem:[#allocation3 + $0x60] sm:$0xff]
      %v1441 = vld [vmem:[#allocation3 + $0x68] sm:$0xff]
      %v1442 = vld [vmem:[#allocation3 + $0x78] sm:$0xff]
      %v1443 = vld [vmem:[#allocation3 + $0x80] sm:$0xff]
      %v1444 = vld [vmem:[#allocation3 + $0x90] sm:$0xff]
      %v1445 = vld [vmem:[#allocation3 + $0x98] sm:$0xff]
      %v1446 = vld [vmem:[#allocation3 + $0xa8] sm:$0xff]
      %v1447 = vld [vmem:[#allocation3 + $0xb0] sm:$0xff]
      %v1448 = vld [vmem:[#allocation3 + $0xc0] sm:$0xff]
      %v1449 = vld [vmem:[#allocation3 + $0xc8] sm:$0xff]
      %v1450 = vld [vmem:[#allocation3 + $0xd8] sm:$0xff]
      %v1451 = vld [vmem:[#allocation3 + $0xe0] sm:$0xff]
      %v1452 = vld [vmem:[#allocation3 + $0xf0] sm:$0xff]
      %v1453 = vld [vmem:[#allocation3 + $0xf8] sm:$0xff]
      %v1454 = vld [vmem:[#allocation3 + $0x108] sm:$0xff]
      %v1455 = vld [vmem:[#allocation3 + $0x110] sm:$0xff]
      %v1456 = vld [vmem:[#allocation3 + $0x120] sm:$0xff]
      %v1457 = vld [vmem:[#allocation3 + $0x128] sm:$0xff]
      %v1458 = vld [vmem:[#allocation3 + $0x138] sm:$0xff]
      %v1459 = vld [vmem:[#allocation3 + $0x140] sm:$0xff]
      %v1460 = vld [vmem:[#allocation3 + $0x150] sm:$0xff]
      %v1461 = vld [vmem:[#allocation3 + $0x158] sm:$0xff]
      %v1462 = vld [vmem:[#allocation3 + $0x168] sm:$0xff]
      %v1463 = vld [vmem:[#allocation3 + $0x170] sm:$0xff]
      %v1464 = vld [vmem:[%s6] sm:$0xff]
      %v1465 = vld [vmem:[#allocation3 + $0x2] sm:$0xff]
      %v1466 = vld [vmem:[#allocation3 + $0xa] sm:$0xff]
      %v1467 = vld [vmem:[#allocation3 + $0x1a] sm:$0xff]
      %v1468 = vld [vmem:[#allocation3 + $0x22] sm:$0xff]
      %v1469 = vld [vmem:[#allocation3 + $0x32] sm:$0xff]
      %v1470 = vld [vmem:[#allocation3 + $0x3a] sm:$0xff]
      %v1471 = vld [vmem:[#allocation3 + $0x4a] sm:$0xff]
      %v1472 = vld [vmem:[#allocation3 + $0x52] sm:$0xff]
      %v1473 = vld [vmem:[#allocation3 + $0x62] sm:$0xff]
      %v1474 = vld [vmem:[#allocation3 + $0x6a] sm:$0xff]
      %v1475 = vld [vmem:[#allocation3 + $0x7a] sm:$0xff]
      %v1476 = vld [vmem:[#allocation3 + $0x82] sm:$0xff]
      %v1477 = vld [vmem:[#allocation3 + $0x92] sm:$0xff]
      %v1478 = vld [vmem:[#allocation3 + $0x9a] sm:$0xff]
      %v1479 = vld [vmem:[#allocation3 + $0xaa] sm:$0xff]
      %v1480 = vld [vmem:[#allocation3 + $0xb2] sm:$0xff]
      %v1481 = vld [vmem:[#allocation3 + $0xc2] sm:$0xff]
      %v1482 = vld [vmem:[#allocation3 + $0xca] sm:$0xff]
      %v1483 = vld [vmem:[#allocation3 + $0xda] sm:$0xff]
      %v1484 = vld [vmem:[#allocation3 + $0xe2] sm:$0xff]
      %v1485 = vld [vmem:[#allocation3 + $0xf2] sm:$0xff]
      %v1486 = vld [vmem:[#allocation3 + $0xfa] sm:$0xff]
      %v1487 = vld [vmem:[#allocation3 + $0x10a] sm:$0xff]
      %v1488 = vld [vmem:[#allocation3 + $0x112] sm:$0xff]
      %v1489 = vld [vmem:[#allocation3 + $0x122] sm:$0xff]
      %v1490 = vld [vmem:[#allocation3 + $0x12a] sm:$0xff]
      %v1491 = vld [vmem:[#allocation3 + $0x13a] sm:$0xff]
      %v1492 = vld [vmem:[#allocation3 + $0x142] sm:$0xff]
      %v1493 = vld [vmem:[#allocation3 + $0x152] sm:$0xff]
      %v1494 = vld [vmem:[#allocation3 + $0x15a] sm:$0xff]
      %v1495 = vld [vmem:[#allocation3 + $0x16a] sm:$0xff]
      %v1496 = vld [vmem:[#allocation3 + $0x172] sm:$0xff]
      %s1497 = scalar_lea.vmem %s6, 8
      %v1498 = vld [vmem:[%s1497] sm:$0xff]
      %v1500 = vsel %vm495, %v1465, 0
      %v1503 = vsel %vm495, %v1466, 0
      %v1506 = vsel %vm495, %v1467, 0
      %v1509 = vsel %vm495, %v1468, 0
      %v1512 = vsel %vm495, %v1469, 0
      %v1515 = vsel %vm495, %v1470, 0
      %v1518 = vsel %vm495, %v1471, 0
      %v1521 = vsel %vm495, %v1472, 0
      %v1524 = vsel %vm495, %v1473, 0
      %v1527 = vsel %vm495, %v1474, 0
      %v1530 = vsel %vm495, %v1475, 0
      %v1533 = vsel %vm495, %v1476, 0
      %v1536 = vsel %vm495, %v1477, 0
      %v1539 = vsel %vm495, %v1478, 0
      %v1542 = vsel %vm495, %v1479, 0
      %v1545 = vsel %vm495, %v1480, 0
      %v1548 = vsel %vm495, %v1481, 0
      %v1551 = vsel %vm495, %v1482, 0
      %v1554 = vsel %vm495, %v1483, 0
      %v1557 = vsel %vm495, %v1484, 0
      %v1560 = vsel %vm495, %v1485, 0
      %v1563 = vsel %vm495, %v1486, 0
      %v1566 = vsel %vm495, %v1487, 0
      %v1569 = vsel %vm495, %v1488, 0
      %v1572 = vsel %vm495, %v1489, 0
      %v1575 = vsel %vm495, %v1490, 0
      %v1578 = vsel %vm495, %v1491, 0
      %v1581 = vsel %vm495, %v1492, 0
      %v1584 = vsel %vm495, %v1493, 0
      %v1587 = vsel %vm495, %v1494, 0
      %v1590 = vsel %vm495, %v1495, 0
      %v1593 = vsel %vm495, %v1496, 0
      %1595 = vmatpush.msra.mxu0 0.0
      %1596 = vmatpush.msra.mxu0 0.0
      %1597 = vmatpush.msra.mxu0 0.0
      %1598 = vmatpush.msra.mxu0 0.0
      %1599 = vmatpush.msra.mxu0 0.0
      %1600 = vmatpush.msra.mxu0 0.0
      %1601 = vmatpush.msra.mxu0 0.0
      %1602 = vmatpush.msra.mxu0 0.0
      %1603 = vmatpush.msra.mxu0 0.0
      %1604 = vmatpush.msra.mxu0 0.0
      %1605 = vmatpush.msra.mxu0 0.0
      %1606 = vmatpush.msra.mxu0 0.0
      %1607 = vmatpush.msra.mxu0 0.0
      %1608 = vmatpush.msra.mxu0 0.0
      %1609 = vmatpush.msra.mxu0 0.0
      %1610 = vmatpush.msra.mxu0 %v1498
      %1611 = vmatmul.f32.gmra.mxu0 %v1500
      %v1612 = vpop.f32.mrf.mxu0
      %v1613 = vadd.f32 0.0, %v1612
      %1614 = vmatmul.f32.gmra.mxu0 %v1503
      %v1615 = vpop.f32.mrf.mxu0
      %v1616 = vadd.f32 0.0, %v1615
      %1617 = vmatmul.f32.gmra.mxu0 %v1506
      %v1618 = vpop.f32.mrf.mxu0
      %v1619 = vadd.f32 0.0, %v1618
      %1620 = vmatmul.f32.gmra.mxu0 %v1509
      %v1621 = vpop.f32.mrf.mxu0
      %v1622 = vadd.f32 0.0, %v1621
      %1623 = vmatmul.f32.gmra.mxu0 %v1512
      %v1624 = vpop.f32.mrf.mxu0
      %v1625 = vadd.f32 0.0, %v1624
      %1626 = vmatmul.f32.gmra.mxu0 %v1515
      %v1627 = vpop.f32.mrf.mxu0
      %v1628 = vadd.f32 0.0, %v1627
      %1629 = vmatmul.f32.gmra.mxu0 %v1518
      %v1630 = vpop.f32.mrf.mxu0
      %v1631 = vadd.f32 0.0, %v1630
      %1632 = vmatmul.f32.gmra.mxu0 %v1521
      %v1633 = vpop.f32.mrf.mxu0
      %v1634 = vadd.f32 0.0, %v1633
      %1635 = vmatmul.f32.gmra.mxu0 %v1524
      %v1636 = vpop.f32.mrf.mxu0
      %v1637 = vadd.f32 0.0, %v1636
      %1638 = vmatmul.f32.gmra.mxu0 %v1527
      %v1639 = vpop.f32.mrf.mxu0
      %v1640 = vadd.f32 0.0, %v1639
      %1641 = vmatmul.f32.gmra.mxu0 %v1530
      %v1642 = vpop.f32.mrf.mxu0
      %v1643 = vadd.f32 0.0, %v1642
      %1644 = vmatmul.f32.gmra.mxu0 %v1533
      %v1645 = vpop.f32.mrf.mxu0
      %v1646 = vadd.f32 0.0, %v1645
      %1647 = vmatmul.f32.gmra.mxu0 %v1536
      %v1648 = vpop.f32.mrf.mxu0
      %v1649 = vadd.f32 0.0, %v1648
      %1650 = vmatmul.f32.gmra.mxu0 %v1539
      %v1651 = vpop.f32.mrf.mxu0
      %v1652 = vadd.f32 0.0, %v1651
      %1653 = vmatmul.f32.gmra.mxu0 %v1542
      %v1654 = vpop.f32.mrf.mxu0
      %v1655 = vadd.f32 0.0, %v1654
      %1656 = vmatmul.f32.gmra.mxu0 %v1545
      %v1657 = vpop.f32.mrf.mxu0
      %v1658 = vadd.f32 0.0, %v1657
      %1659 = vmatmul.f32.gmra.mxu0 %v1548
      %v1660 = vpop.f32.mrf.mxu0
      %v1661 = vadd.f32 0.0, %v1660
      %1662 = vmatmul.f32.gmra.mxu0 %v1551
      %v1663 = vpop.f32.mrf.mxu0
      %v1664 = vadd.f32 0.0, %v1663
      %1665 = vmatmul.f32.gmra.mxu0 %v1554
      %v1666 = vpop.f32.mrf.mxu0
      %v1667 = vadd.f32 0.0, %v1666
      %1668 = vmatmul.f32.gmra.mxu0 %v1557
      %v1669 = vpop.f32.mrf.mxu0
      %v1670 = vadd.f32 0.0, %v1669
      %1671 = vmatmul.f32.gmra.mxu0 %v1560
      %v1672 = vpop.f32.mrf.mxu0
      %v1673 = vadd.f32 0.0, %v1672
      %1674 = vmatmul.f32.gmra.mxu0 %v1563
      %v1675 = vpop.f32.mrf.mxu0
      %v1676 = vadd.f32 0.0, %v1675
      %1677 = vmatmul.f32.gmra.mxu0 %v1566
      %v1678 = vpop.f32.mrf.mxu0
      %v1679 = vadd.f32 0.0, %v1678
      %1680 = vmatmul.f32.gmra.mxu0 %v1569
      %v1681 = vpop.f32.mrf.mxu0
      %v1682 = vadd.f32 0.0, %v1681
      %1683 = vmatmul.f32.gmra.mxu0 %v1572
      %v1684 = vpop.f32.mrf.mxu0
      %v1685 = vadd.f32 0.0, %v1684
      %1686 = vmatmul.f32.gmra.mxu0 %v1575
      %v1687 = vpop.f32.mrf.mxu0
      %v1688 = vadd.f32 0.0, %v1687
      %1689 = vmatmul.f32.gmra.mxu0 %v1578
      %v1690 = vpop.f32.mrf.mxu0
      %v1691 = vadd.f32 0.0, %v1690
      %1692 = vmatmul.f32.gmra.mxu0 %v1581
      %v1693 = vpop.f32.mrf.mxu0
      %v1694 = vadd.f32 0.0, %v1693
      %1695 = vmatmul.f32.gmra.mxu0 %v1584
      %v1696 = vpop.f32.mrf.mxu0
      %v1697 = vadd.f32 0.0, %v1696
      %1698 = vmatmul.f32.gmra.mxu0 %v1587
      %v1699 = vpop.f32.mrf.mxu0
      %v1700 = vadd.f32 0.0, %v1699
      %1701 = vmatmul.f32.gmra.mxu0 %v1590
      %v1702 = vpop.f32.mrf.mxu0
      %v1703 = vadd.f32 0.0, %v1702
      %1704 = vmatmul.f32.gmra.mxu0 %v1593
      %v1705 = vpop.f32.mrf.mxu0
      %v1706 = vadd.f32 0.0, %v1705
      %1707 = vdwg.mxu0
      %v1709 = vsel %vm495, %v1432, 0
      %v1712 = vsel %vm495, %v1433, 0
      %v1715 = vsel %vm495, %v1434, 0
      %v1718 = vsel %vm495, %v1435, 0
      %v1721 = vsel %vm495, %v1436, 0
      %v1724 = vsel %vm495, %v1437, 0
      %v1727 = vsel %vm495, %v1438, 0
      %v1730 = vsel %vm495, %v1439, 0
      %v1733 = vsel %vm495, %v1440, 0
      %v1736 = vsel %vm495, %v1441, 0
      %v1739 = vsel %vm495, %v1442, 0
      %v1742 = vsel %vm495, %v1443, 0
      %v1745 = vsel %vm495, %v1444, 0
      %v1748 = vsel %vm495, %v1445, 0
      %v1751 = vsel %vm495, %v1446, 0
      %v1754 = vsel %vm495, %v1447, 0
      %v1757 = vsel %vm495, %v1448, 0
      %v1760 = vsel %vm495, %v1449, 0
      %v1763 = vsel %vm495, %v1450, 0
      %v1766 = vsel %vm495, %v1451, 0
      %v1769 = vsel %vm495, %v1452, 0
      %v1772 = vsel %vm495, %v1453, 0
      %v1775 = vsel %vm495, %v1454, 0
      %v1778 = vsel %vm495, %v1455, 0
      %v1781 = vsel %vm495, %v1456, 0
      %v1784 = vsel %vm495, %v1457, 0
      %v1787 = vsel %vm495, %v1458, 0
      %v1790 = vsel %vm495, %v1459, 0
      %v1793 = vsel %vm495, %v1460, 0
      %v1796 = vsel %vm495, %v1461, 0
      %v1799 = vsel %vm495, %v1462, 0
      %v1802 = vsel %vm495, %v1463, 0
      %1804 = vmatpush.msra.mxu0 0.0
      %1805 = vmatpush.msra.mxu0 0.0
      %1806 = vmatpush.msra.mxu0 0.0
      %1807 = vmatpush.msra.mxu0 0.0
      %1808 = vmatpush.msra.mxu0 0.0
      %1809 = vmatpush.msra.mxu0 0.0
      %1810 = vmatpush.msra.mxu0 0.0
      %1811 = vmatpush.msra.mxu0 0.0
      %1812 = vmatpush.msra.mxu0 0.0
      %1813 = vmatpush.msra.mxu0 0.0
      %1814 = vmatpush.msra.mxu0 0.0
      %1815 = vmatpush.msra.mxu0 0.0
      %1816 = vmatpush.msra.mxu0 0.0
      %1817 = vmatpush.msra.mxu0 0.0
      %1818 = vmatpush.msra.mxu0 0.0
      %1819 = vmatpush.msra.mxu0 %v1464
      %1820 = vmatmul.f32.gmra.mxu0 %v1709
      %v1821 = vpop.f32.mrf.mxu0
      %v1822 = vadd.f32 %v1613, %v1821
      %1823 = vmatmul.f32.gmra.mxu0 %v1712
      %v1824 = vpop.f32.mrf.mxu0
      %v1825 = vadd.f32 %v1616, %v1824
      %1826 = vmatmul.f32.gmra.mxu0 %v1715
      %v1827 = vpop.f32.mrf.mxu0
      %v1828 = vadd.f32 %v1619, %v1827
      %1829 = vmatmul.f32.gmra.mxu0 %v1718
      %v1830 = vpop.f32.mrf.mxu0
      %v1831 = vadd.f32 %v1622, %v1830
      %1832 = vmatmul.f32.gmra.mxu0 %v1721
      %v1833 = vpop.f32.mrf.mxu0
      %v1834 = vadd.f32 %v1625, %v1833
      %1835 = vmatmul.f32.gmra.mxu0 %v1724
      %v1836 = vpop.f32.mrf.mxu0
      %v1837 = vadd.f32 %v1628, %v1836
      %1838 = vmatmul.f32.gmra.mxu0 %v1727
      %v1839 = vpop.f32.mrf.mxu0
      %v1840 = vadd.f32 %v1631, %v1839
      %1841 = vmatmul.f32.gmra.mxu0 %v1730
      %v1842 = vpop.f32.mrf.mxu0
      %v1843 = vadd.f32 %v1634, %v1842
      %1844 = vmatmul.f32.gmra.mxu0 %v1733
      %v1845 = vpop.f32.mrf.mxu0
      %v1846 = vadd.f32 %v1637, %v1845
      %1847 = vmatmul.f32.gmra.mxu0 %v1736
      %v1848 = vpop.f32.mrf.mxu0
      %v1849 = vadd.f32 %v1640, %v1848
      %1850 = vmatmul.f32.gmra.mxu0 %v1739
      %v1851 = vpop.f32.mrf.mxu0
      %v1852 = vadd.f32 %v1643, %v1851
      %1853 = vmatmul.f32.gmra.mxu0 %v1742
      %v1854 = vpop.f32.mrf.mxu0
      %v1855 = vadd.f32 %v1646, %v1854
      %1856 = vmatmul.f32.gmra.mxu0 %v1745
      %v1857 = vpop.f32.mrf.mxu0
      %v1858 = vadd.f32 %v1649, %v1857
      %1859 = vmatmul.f32.gmra.mxu0 %v1748
      %v1860 = vpop.f32.mrf.mxu0
      %v1861 = vadd.f32 %v1652, %v1860
      %1862 = vmatmul.f32.gmra.mxu0 %v1751
      %v1863 = vpop.f32.mrf.mxu0
      %v1864 = vadd.f32 %v1655, %v1863
      %1865 = vmatmul.f32.gmra.mxu0 %v1754
      %v1866 = vpop.f32.mrf.mxu0
      %v1867 = vadd.f32 %v1658, %v1866
      %1868 = vmatmul.f32.gmra.mxu0 %v1757
      %v1869 = vpop.f32.mrf.mxu0
      %v1870 = vadd.f32 %v1661, %v1869
      %1871 = vmatmul.f32.gmra.mxu0 %v1760
      %v1872 = vpop.f32.mrf.mxu0
      %v1873 = vadd.f32 %v1664, %v1872
      %1874 = vmatmul.f32.gmra.mxu0 %v1763
      %v1875 = vpop.f32.mrf.mxu0
      %v1876 = vadd.f32 %v1667, %v1875
      %1877 = vmatmul.f32.gmra.mxu0 %v1766
      %v1878 = vpop.f32.mrf.mxu0
      %v1879 = vadd.f32 %v1670, %v1878
      %1880 = vmatmul.f32.gmra.mxu0 %v1769
      %v1881 = vpop.f32.mrf.mxu0
      %v1882 = vadd.f32 %v1673, %v1881
      %1883 = vmatmul.f32.gmra.mxu0 %v1772
      %v1884 = vpop.f32.mrf.mxu0
      %v1885 = vadd.f32 %v1676, %v1884
      %1886 = vmatmul.f32.gmra.mxu0 %v1775
      %v1887 = vpop.f32.mrf.mxu0
      %v1888 = vadd.f32 %v1679, %v1887
      %1889 = vmatmul.f32.gmra.mxu0 %v1778
      %v1890 = vpop.f32.mrf.mxu0
      %v1891 = vadd.f32 %v1682, %v1890
      %1892 = vmatmul.f32.gmra.mxu0 %v1781
      %v1893 = vpop.f32.mrf.mxu0
      %v1894 = vadd.f32 %v1685, %v1893
      %1895 = vmatmul.f32.gmra.mxu0 %v1784
      %v1896 = vpop.f32.mrf.mxu0
      %v1897 = vadd.f32 %v1688, %v1896
      %1898 = vmatmul.f32.gmra.mxu0 %v1787
      %v1899 = vpop.f32.mrf.mxu0
      %v1900 = vadd.f32 %v1691, %v1899
      %1901 = vmatmul.f32.gmra.mxu0 %v1790
      %v1902 = vpop.f32.mrf.mxu0
      %v1903 = vadd.f32 %v1694, %v1902
      %1904 = vmatmul.f32.gmra.mxu0 %v1793
      %v1905 = vpop.f32.mrf.mxu0
      %v1906 = vadd.f32 %v1697, %v1905
      %1907 = vmatmul.f32.gmra.mxu0 %v1796
      %v1908 = vpop.f32.mrf.mxu0
      %v1909 = vadd.f32 %v1700, %v1908
      %1910 = vmatmul.f32.gmra.mxu0 %v1799
      %v1911 = vpop.f32.mrf.mxu0
      %v1912 = vadd.f32 %v1703, %v1911
      %1913 = vmatmul.f32.gmra.mxu0 %v1802
      %v1914 = vpop.f32.mrf.mxu0
      %v1915 = vadd.f32 %v1706, %v1914
      %1916 = vdwg.mxu0
      %v1917 = vld [vmem:[#allocation3 + $0x4] sm:$0xff]
      %v1918 = vld [vmem:[#allocation3 + $0xc] sm:$0xff]
      %v1919 = vld [vmem:[#allocation3 + $0x1c] sm:$0xff]
      %v1920 = vld [vmem:[#allocation3 + $0x24] sm:$0xff]
      %v1921 = vld [vmem:[#allocation3 + $0x34] sm:$0xff]
      %v1922 = vld [vmem:[#allocation3 + $0x3c] sm:$0xff]
      %v1923 = vld [vmem:[#allocation3 + $0x4c] sm:$0xff]
      %v1924 = vld [vmem:[#allocation3 + $0x54] sm:$0xff]
      %v1925 = vld [vmem:[#allocation3 + $0x64] sm:$0xff]
      %v1926 = vld [vmem:[#allocation3 + $0x6c] sm:$0xff]
      %v1927 = vld [vmem:[#allocation3 + $0x7c] sm:$0xff]
      %v1928 = vld [vmem:[#allocation3 + $0x84] sm:$0xff]
      %v1929 = vld [vmem:[#allocation3 + $0x94] sm:$0xff]
      %v1930 = vld [vmem:[#allocation3 + $0x9c] sm:$0xff]
      %v1931 = vld [vmem:[#allocation3 + $0xac] sm:$0xff]
      %v1932 = vld [vmem:[#allocation3 + $0xb4] sm:$0xff]
      %v1933 = vld [vmem:[#allocation3 + $0xc4] sm:$0xff]
      %v1934 = vld [vmem:[#allocation3 + $0xcc] sm:$0xff]
      %v1935 = vld [vmem:[#allocation3 + $0xdc] sm:$0xff]
      %v1936 = vld [vmem:[#allocation3 + $0xe4] sm:$0xff]
      %v1937 = vld [vmem:[#allocation3 + $0xf4] sm:$0xff]
      %v1938 = vld [vmem:[#allocation3 + $0xfc] sm:$0xff]
      %v1939 = vld [vmem:[#allocation3 + $0x10c] sm:$0xff]
      %v1940 = vld [vmem:[#allocation3 + $0x114] sm:$0xff]
      %v1941 = vld [vmem:[#allocation3 + $0x124] sm:$0xff]
      %v1942 = vld [vmem:[#allocation3 + $0x12c] sm:$0xff]
      %v1943 = vld [vmem:[#allocation3 + $0x13c] sm:$0xff]
      %v1944 = vld [vmem:[#allocation3 + $0x144] sm:$0xff]
      %v1945 = vld [vmem:[#allocation3 + $0x154] sm:$0xff]
      %v1946 = vld [vmem:[#allocation3 + $0x15c] sm:$0xff]
      %v1947 = vld [vmem:[#allocation3 + $0x16c] sm:$0xff]
      %v1948 = vld [vmem:[#allocation3 + $0x174] sm:$0xff]
      %s1949 = scalar_lea.vmem %s6, 16
      %v1950 = vld [vmem:[%s1949] sm:$0xff]
      %v1952 = vsel %vm495, %v1917, 0
      %v1955 = vsel %vm495, %v1918, 0
      %v1958 = vsel %vm495, %v1919, 0
      %v1961 = vsel %vm495, %v1920, 0
      %v1964 = vsel %vm495, %v1921, 0
      %v1967 = vsel %vm495, %v1922, 0
      %v1970 = vsel %vm495, %v1923, 0
      %v1973 = vsel %vm495, %v1924, 0
      %v1976 = vsel %vm495, %v1925, 0
      %v1979 = vsel %vm495, %v1926, 0
      %v1982 = vsel %vm495, %v1927, 0
      %v1985 = vsel %vm495, %v1928, 0
      %v1988 = vsel %vm495, %v1929, 0
      %v1991 = vsel %vm495, %v1930, 0
      %v1994 = vsel %vm495, %v1931, 0
      %v1997 = vsel %vm495, %v1932, 0
      %v2000 = vsel %vm495, %v1933, 0
      %v2003 = vsel %vm495, %v1934, 0
      %v2006 = vsel %vm495, %v1935, 0
      %v2009 = vsel %vm495, %v1936, 0
      %v2012 = vsel %vm495, %v1937, 0
      %v2015 = vsel %vm495, %v1938, 0
      %v2018 = vsel %vm495, %v1939, 0
      %v2021 = vsel %vm495, %v1940, 0
      %v2024 = vsel %vm495, %v1941, 0
      %v2027 = vsel %vm495, %v1942, 0
      %v2030 = vsel %vm495, %v1943, 0
      %v2033 = vsel %vm495, %v1944, 0
      %v2036 = vsel %vm495, %v1945, 0
      %v2039 = vsel %vm495, %v1946, 0
      %v2042 = vsel %vm495, %v1947, 0
      %v2045 = vsel %vm495, %v1948, 0
      %2047 = vmatpush.msra.mxu0 0.0
      %2048 = vmatpush.msra.mxu0 0.0
      %2049 = vmatpush.msra.mxu0 0.0
      %2050 = vmatpush.msra.mxu0 0.0
      %2051 = vmatpush.msra.mxu0 0.0
      %2052 = vmatpush.msra.mxu0 0.0
      %2053 = vmatpush.msra.mxu0 0.0
      %2054 = vmatpush.msra.mxu0 0.0
      %2055 = vmatpush.msra.mxu0 0.0
      %2056 = vmatpush.msra.mxu0 0.0
      %2057 = vmatpush.msra.mxu0 0.0
      %2058 = vmatpush.msra.mxu0 0.0
      %2059 = vmatpush.msra.mxu0 0.0
      %2060 = vmatpush.msra.mxu0 0.0
      %2061 = vmatpush.msra.mxu0 0.0
      %2062 = vmatpush.msra.mxu0 %v1950
      %2063 = vmatmul.f32.gmra.mxu0 %v1952
      %v2064 = vpop.f32.mrf.mxu0
      %v2065 = vadd.f32 0.0, %v2064
      %2066 = vmatmul.f32.gmra.mxu0 %v1955
      %v2067 = vpop.f32.mrf.mxu0
      %v2068 = vadd.f32 0.0, %v2067
      %2069 = vmatmul.f32.gmra.mxu0 %v1958
      %v2070 = vpop.f32.mrf.mxu0
      %v2071 = vadd.f32 0.0, %v2070
      %2072 = vmatmul.f32.gmra.mxu0 %v1961
      %v2073 = vpop.f32.mrf.mxu0
      %v2074 = vadd.f32 0.0, %v2073
      %2075 = vmatmul.f32.gmra.mxu0 %v1964
      %v2076 = vpop.f32.mrf.mxu0
      %v2077 = vadd.f32 0.0, %v2076
      %2078 = vmatmul.f32.gmra.mxu0 %v1967
      %v2079 = vpop.f32.mrf.mxu0
      %v2080 = vadd.f32 0.0, %v2079
      %2081 = vmatmul.f32.gmra.mxu0 %v1970
      %v2082 = vpop.f32.mrf.mxu0
      %v2083 = vadd.f32 0.0, %v2082
      %2084 = vmatmul.f32.gmra.mxu0 %v1973
      %v2085 = vpop.f32.mrf.mxu0
      %v2086 = vadd.f32 0.0, %v2085
      %2087 = vmatmul.f32.gmra.mxu0 %v1976
      %v2088 = vpop.f32.mrf.mxu0
      %v2089 = vadd.f32 0.0, %v2088
      %2090 = vmatmul.f32.gmra.mxu0 %v1979
      %v2091 = vpop.f32.mrf.mxu0
      %v2092 = vadd.f32 0.0, %v2091
      %2093 = vmatmul.f32.gmra.mxu0 %v1982
      %v2094 = vpop.f32.mrf.mxu0
      %v2095 = vadd.f32 0.0, %v2094
      %2096 = vmatmul.f32.gmra.mxu0 %v1985
      %v2097 = vpop.f32.mrf.mxu0
      %v2098 = vadd.f32 0.0, %v2097
      %2099 = vmatmul.f32.gmra.mxu0 %v1988
      %v2100 = vpop.f32.mrf.mxu0
      %v2101 = vadd.f32 0.0, %v2100
      %2102 = vmatmul.f32.gmra.mxu0 %v1991
      %v2103 = vpop.f32.mrf.mxu0
      %v2104 = vadd.f32 0.0, %v2103
      %2105 = vmatmul.f32.gmra.mxu0 %v1994
      %v2106 = vpop.f32.mrf.mxu0
      %v2107 = vadd.f32 0.0, %v2106
      %2108 = vmatmul.f32.gmra.mxu0 %v1997
      %v2109 = vpop.f32.mrf.mxu0
      %v2110 = vadd.f32 0.0, %v2109
      %2111 = vmatmul.f32.gmra.mxu0 %v2000
      %v2112 = vpop.f32.mrf.mxu0
      %v2113 = vadd.f32 0.0, %v2112
      %2114 = vmatmul.f32.gmra.mxu0 %v2003
      %v2115 = vpop.f32.mrf.mxu0
      %v2116 = vadd.f32 0.0, %v2115
      %2117 = vmatmul.f32.gmra.mxu0 %v2006
      %v2118 = vpop.f32.mrf.mxu0
      %v2119 = vadd.f32 0.0, %v2118
      %2120 = vmatmul.f32.gmra.mxu0 %v2009
      %v2121 = vpop.f32.mrf.mxu0
      %v2122 = vadd.f32 0.0, %v2121
      %2123 = vmatmul.f32.gmra.mxu0 %v2012
      %v2124 = vpop.f32.mrf.mxu0
      %v2125 = vadd.f32 0.0, %v2124
      %2126 = vmatmul.f32.gmra.mxu0 %v2015
      %v2127 = vpop.f32.mrf.mxu0
      %v2128 = vadd.f32 0.0, %v2127
      %2129 = vmatmul.f32.gmra.mxu0 %v2018
      %v2130 = vpop.f32.mrf.mxu0
      %v2131 = vadd.f32 0.0, %v2130
      %2132 = vmatmul.f32.gmra.mxu0 %v2021
      %v2133 = vpop.f32.mrf.mxu0
      %v2134 = vadd.f32 0.0, %v2133
      %2135 = vmatmul.f32.gmra.mxu0 %v2024
      %v2136 = vpop.f32.mrf.mxu0
      %v2137 = vadd.f32 0.0, %v2136
      %2138 = vmatmul.f32.gmra.mxu0 %v2027
      %v2139 = vpop.f32.mrf.mxu0
      %v2140 = vadd.f32 0.0, %v2139
      %2141 = vmatmul.f32.gmra.mxu0 %v2030
      %v2142 = vpop.f32.mrf.mxu0
      %v2143 = vadd.f32 0.0, %v2142
      %2144 = vmatmul.f32.gmra.mxu0 %v2033
      %v2145 = vpop.f32.mrf.mxu0
      %v2146 = vadd.f32 0.0, %v2145
      %2147 = vmatmul.f32.gmra.mxu0 %v2036
      %v2148 = vpop.f32.mrf.mxu0
      %v2149 = vadd.f32 0.0, %v2148
      %2150 = vmatmul.f32.gmra.mxu0 %v2039
      %v2151 = vpop.f32.mrf.mxu0
      %v2152 = vadd.f32 0.0, %v2151
      %2153 = vmatmul.f32.gmra.mxu0 %v2042
      %v2154 = vpop.f32.mrf.mxu0
      %v2155 = vadd.f32 0.0, %v2154
      %2156 = vmatmul.f32.gmra.mxu0 %v2045
      %v2157 = vpop.f32.mrf.mxu0
      %v2158 = vadd.f32 0.0, %v2157
      %2159 = vdwg.mxu0
      %v2160 = vadd.f32 %v1822, %v2065
      %v2161 = vadd.f32 %v1825, %v2068
      %v2162 = vadd.f32 %v1828, %v2071
      %v2163 = vadd.f32 %v1831, %v2074
      %v2164 = vadd.f32 %v1834, %v2077
      %v2165 = vadd.f32 %v1837, %v2080
      %v2166 = vadd.f32 %v1840, %v2083
      %v2167 = vadd.f32 %v1843, %v2086
      %v2168 = vadd.f32 %v1846, %v2089
      %v2169 = vadd.f32 %v1849, %v2092
      %v2170 = vadd.f32 %v1852, %v2095
      %v2171 = vadd.f32 %v1855, %v2098
      %v2172 = vadd.f32 %v1858, %v2101
      %v2173 = vadd.f32 %v1861, %v2104
      %v2174 = vadd.f32 %v1864, %v2107
      %v2175 = vadd.f32 %v1867, %v2110
      %v2176 = vadd.f32 %v1870, %v2113
      %v2177 = vadd.f32 %v1873, %v2116
      %v2178 = vadd.f32 %v1876, %v2119
      %v2179 = vadd.f32 %v1879, %v2122
      %v2180 = vadd.f32 %v1882, %v2125
      %v2181 = vadd.f32 %v1885, %v2128
      %v2182 = vadd.f32 %v1888, %v2131
      %v2183 = vadd.f32 %v1891, %v2134
      %v2184 = vadd.f32 %v1894, %v2137
      %v2185 = vadd.f32 %v1897, %v2140
      %v2186 = vadd.f32 %v1900, %v2143
      %v2187 = vadd.f32 %v1903, %v2146
      %v2188 = vadd.f32 %v1906, %v2149
      %v2189 = vadd.f32 %v1909, %v2152
      %v2190 = vadd.f32 %v1912, %v2155
      %v2191 = vadd.f32 %v1915, %v2158
      %v2193 = vperm.slane %v1366, 0
      %v2195 = vadd.f32 %v2160, %v2193
      %v2196 = vadd.f32 %v2161, %v2193
      %v2197 = vadd.f32 %v2162, %v2193
      %v2198 = vadd.f32 %v2163, %v2193
      %v2199 = vadd.f32 %v2164, %v2193
      %v2200 = vadd.f32 %v2165, %v2193
      %v2201 = vadd.f32 %v2166, %v2193
      %v2202 = vadd.f32 %v2167, %v2193
      %v2203 = vadd.f32 %v2168, %v2193
      %v2204 = vadd.f32 %v2169, %v2193
      %v2205 = vadd.f32 %v2170, %v2193
      %v2206 = vadd.f32 %v2171, %v2193
      %v2207 = vadd.f32 %v2172, %v2193
      %v2208 = vadd.f32 %v2173, %v2193
      %v2209 = vadd.f32 %v2174, %v2193
      %v2210 = vadd.f32 %v2175, %v2193
      %v2211 = vadd.f32 %v2176, %v2193
      %v2212 = vadd.f32 %v2177, %v2193
      %v2213 = vadd.f32 %v2178, %v2193
      %v2214 = vadd.f32 %v2179, %v2193
      %v2215 = vadd.f32 %v2180, %v2193
      %v2216 = vadd.f32 %v2181, %v2193
      %v2217 = vadd.f32 %v2182, %v2193
      %v2218 = vadd.f32 %v2183, %v2193
      %v2219 = vadd.f32 %v2184, %v2193
      %v2220 = vadd.f32 %v2185, %v2193
      %v2221 = vadd.f32 %v2186, %v2193
      %v2222 = vadd.f32 %v2187, %v2193
      %v2223 = vadd.f32 %v2188, %v2193
      %v2224 = vadd.f32 %v2189, %v2193
      %v2225 = vadd.f32 %v2190, %v2193
      %v2226 = vadd.f32 %v2191, %v2193
      %v2227 = vsel %vm495, %v2195, 0.0
      %v2228 = vsel %vm495, %v2196, 0.0
      %v2229 = vadd.f32 %v2227, %v2228
      %v2230 = vsel %vm495, %v2197, 0.0
      %v2231 = vadd.f32 %v2229, %v2230
      %v2232 = vsel %vm495, %v2198, 0.0
      %v2233 = vadd.f32 %v2231, %v2232
      %v2234 = vsel %vm495, %v2199, 0.0
      %v2235 = vadd.f32 %v2233, %v2234
      %v2236 = vsel %vm495, %v2200, 0.0
      %v2237 = vadd.f32 %v2235, %v2236
      %v2238 = vsel %vm495, %v2201, 0.0
      %v2239 = vadd.f32 %v2237, %v2238
      %v2240 = vsel %vm495, %v2202, 0.0
      %v2241 = vadd.f32 %v2239, %v2240
      %v2242 = vsel %vm495, %v2203, 0.0
      %v2243 = vadd.f32 %v2241, %v2242
      %v2244 = vsel %vm495, %v2204, 0.0
      %v2245 = vadd.f32 %v2243, %v2244
      %v2246 = vsel %vm495, %v2205, 0.0
      %v2247 = vadd.f32 %v2245, %v2246
      %v2248 = vsel %vm495, %v2206, 0.0
      %v2249 = vadd.f32 %v2247, %v2248
      %v2250 = vsel %vm495, %v2207, 0.0
      %v2251 = vadd.f32 %v2249, %v2250
      %v2252 = vsel %vm495, %v2208, 0.0
      %v2253 = vadd.f32 %v2251, %v2252
      %v2254 = vsel %vm495, %v2209, 0.0
      %v2255 = vadd.f32 %v2253, %v2254
      %v2256 = vsel %vm495, %v2210, 0.0
      %v2257 = vadd.f32 %v2255, %v2256
      %v2258 = vsel %vm495, %v2211, 0.0
      %v2259 = vadd.f32 %v2257, %v2258
      %v2260 = vsel %vm495, %v2212, 0.0
      %v2261 = vadd.f32 %v2259, %v2260
      %v2262 = vsel %vm495, %v2213, 0.0
      %v2263 = vadd.f32 %v2261, %v2262
      %v2264 = vsel %vm495, %v2214, 0.0
      %v2265 = vadd.f32 %v2263, %v2264
      %v2266 = vsel %vm495, %v2215, 0.0
      %v2267 = vadd.f32 %v2265, %v2266
      %v2268 = vsel %vm495, %v2216, 0.0
      %v2269 = vadd.f32 %v2267, %v2268
      %v2270 = vsel %vm495, %v2217, 0.0
      %v2271 = vadd.f32 %v2269, %v2270
      %v2272 = vsel %vm495, %v2218, 0.0
      %v2273 = vadd.f32 %v2271, %v2272
      %v2274 = vsel %vm495, %v2219, 0.0
      %v2275 = vadd.f32 %v2273, %v2274
      %v2276 = vsel %vm495, %v2220, 0.0
      %v2277 = vadd.f32 %v2275, %v2276
      %v2278 = vsel %vm495, %v2221, 0.0
      %v2279 = vadd.f32 %v2277, %v2278
      %v2280 = vsel %vm495, %v2222, 0.0
      %v2281 = vadd.f32 %v2279, %v2280
      %v2282 = vsel %vm495, %v2223, 0.0
      %v2283 = vadd.f32 %v2281, %v2282
      %v2284 = vsel %vm495, %v2224, 0.0
      %v2285 = vadd.f32 %v2283, %v2284
      %v2286 = vsel %vm495, %v2225, 0.0
      %v2287 = vadd.f32 %v2285, %v2286
      %v2288 = vsel %vm495, %v2226, 0.0
      %v2289 = vadd.f32 %v2287, %v2288
      %v2290 = vrot.slane %v2289, 4
      %v2291 = vadd.f32 %v2289, %v2290
      %v2292 = vrot.slane %v2291, 2
      %v2293 = vadd.f32 %v2291, %v2292
      %v2294 = vrot.slane %v2293, 1
      %v2295 = vadd.f32 %v2293, %v2294
      %v2296 = vrcp.pop 256.0
      %v2297 = vmul.f32 256.0, %v2296
      %v2298 = vsub.f32 1.0, %v2297
      %v2299 = vmul.f32 %v2296, %v2298
      %v2300 = vadd.f32 %v2296, %v2299
      %vm2301 = vweird.f32 %v2296
      %v2302 = vsel %vm2301, %v2296, %v2300
      %v2303 = vmul.f32 %v2295, %v2302
      %v2304 = vmul.f32 %v2195, %v2195
      %v2305 = vmul.f32 %v2196, %v2196
      %v2306 = vmul.f32 %v2197, %v2197
      %v2307 = vmul.f32 %v2198, %v2198
      %v2308 = vmul.f32 %v2199, %v2199
      %v2309 = vmul.f32 %v2200, %v2200
      %v2310 = vmul.f32 %v2201, %v2201
      %v2311 = vmul.f32 %v2202, %v2202
      %v2312 = vmul.f32 %v2203, %v2203
      %v2313 = vmul.f32 %v2204, %v2204
      %v2314 = vmul.f32 %v2205, %v2205
      %v2315 = vmul.f32 %v2206, %v2206
      %v2316 = vmul.f32 %v2207, %v2207
      %v2317 = vmul.f32 %v2208, %v2208
      %v2318 = vmul.f32 %v2209, %v2209
      %v2319 = vmul.f32 %v2210, %v2210
      %v2320 = vmul.f32 %v2211, %v2211
      %v2321 = vmul.f32 %v2212, %v2212
      %v2322 = vmul.f32 %v2213, %v2213
      %v2323 = vmul.f32 %v2214, %v2214
      %v2324 = vmul.f32 %v2215, %v2215
      %v2325 = vmul.f32 %v2216, %v2216
      %v2326 = vmul.f32 %v2217, %v2217
      %v2327 = vmul.f32 %v2218, %v2218
      %v2328 = vmul.f32 %v2219, %v2219
      %v2329 = vmul.f32 %v2220, %v2220
      %v2330 = vmul.f32 %v2221, %v2221
      %v2331 = vmul.f32 %v2222, %v2222
      %v2332 = vmul.f32 %v2223, %v2223
      %v2333 = vmul.f32 %v2224, %v2224
      %v2334 = vmul.f32 %v2225, %v2225
      %v2335 = vmul.f32 %v2226, %v2226
      %v2336 = vsel %vm495, %v2304, 0.0
      %v2337 = vsel %vm495, %v2305, 0.0
      %v2338 = vadd.f32 %v2336, %v2337
      %v2339 = vsel %vm495, %v2306, 0.0
      %v2340 = vadd.f32 %v2338, %v2339
      %v2341 = vsel %vm495, %v2307, 0.0
      %v2342 = vadd.f32 %v2340, %v2341
      %v2343 = vsel %vm495, %v2308, 0.0
      %v2344 = vadd.f32 %v2342, %v2343
      %v2345 = vsel %vm495, %v2309, 0.0
      %v2346 = vadd.f32 %v2344, %v2345
      %v2347 = vsel %vm495, %v2310, 0.0
      %v2348 = vadd.f32 %v2346, %v2347
      %v2349 = vsel %vm495, %v2311, 0.0
      %v2350 = vadd.f32 %v2348, %v2349
      %v2351 = vsel %vm495, %v2312, 0.0
      %v2352 = vadd.f32 %v2350, %v2351
      %v2353 = vsel %vm495, %v2313, 0.0
      %v2354 = vadd.f32 %v2352, %v2353
      %v2355 = vsel %vm495, %v2314, 0.0
      %v2356 = vadd.f32 %v2354, %v2355
      %v2357 = vsel %vm495, %v2315, 0.0
      %v2358 = vadd.f32 %v2356, %v2357
      %v2359 = vsel %vm495, %v2316, 0.0
      %v2360 = vadd.f32 %v2358, %v2359
      %v2361 = vsel %vm495, %v2317, 0.0
      %v2362 = vadd.f32 %v2360, %v2361
      %v2363 = vsel %vm495, %v2318, 0.0
      %v2364 = vadd.f32 %v2362, %v2363
      %v2365 = vsel %vm495, %v2319, 0.0
      %v2366 = vadd.f32 %v2364, %v2365
      %v2367 = vsel %vm495, %v2320, 0.0
      %v2368 = vadd.f32 %v2366, %v2367
      %v2369 = vsel %vm495, %v2321, 0.0
      %v2370 = vadd.f32 %v2368, %v2369
      %v2371 = vsel %vm495, %v2322, 0.0
      %v2372 = vadd.f32 %v2370, %v2371
      %v2373 = vsel %vm495, %v2323, 0.0
      %v2374 = vadd.f32 %v2372, %v2373
      %v2375 = vsel %vm495, %v2324, 0.0
      %v2376 = vadd.f32 %v2374, %v2375
      %v2377 = vsel %vm495, %v2325, 0.0
      %v2378 = vadd.f32 %v2376, %v2377
      %v2379 = vsel %vm495, %v2326, 0.0
      %v2380 = vadd.f32 %v2378, %v2379
      %v2381 = vsel %vm495, %v2327, 0.0
      %v2382 = vadd.f32 %v2380, %v2381
      %v2383 = vsel %vm495, %v2328, 0.0
      %v2384 = vadd.f32 %v2382, %v2383
      %v2385 = vsel %vm495, %v2329, 0.0
      %v2386 = vadd.f32 %v2384, %v2385
      %v2387 = vsel %vm495, %v2330, 0.0
      %v2388 = vadd.f32 %v2386, %v2387
      %v2389 = vsel %vm495, %v2331, 0.0
      %v2390 = vadd.f32 %v2388, %v2389
      %v2391 = vsel %vm495, %v2332, 0.0
      %v2392 = vadd.f32 %v2390, %v2391
      %v2393 = vsel %vm495, %v2333, 0.0
      %v2394 = vadd.f32 %v2392, %v2393
      %v2395 = vsel %vm495, %v2334, 0.0
      %v2396 = vadd.f32 %v2394, %v2395
      %v2397 = vsel %vm495, %v2335, 0.0
      %v2398 = vadd.f32 %v2396, %v2397
      %v2399 = vrot.slane %v2398, 4
      %v2400 = vadd.f32 %v2398, %v2399
      %v2401 = vrot.slane %v2400, 2
      %v2402 = vadd.f32 %v2400, %v2401
      %v2403 = vrot.slane %v2402, 1
      %v2404 = vadd.f32 %v2402, %v2403
      %v2405 = vmul.f32 %v2404, %v2302
      %v2406 = vmul.f32 %v2303, %v2303
      %v2407 = vsub.f32 %v2405, %v2406
      %v2408 = vmax.f32 %v2407, 0.0
      %v2409 = vsub.f32 %v2195, %v2303
      %v2410 = vsub.f32 %v2196, %v2303
      %v2411 = vsub.f32 %v2197, %v2303
      %v2412 = vsub.f32 %v2198, %v2303
      %v2413 = vsub.f32 %v2199, %v2303
      %v2414 = vsub.f32 %v2200, %v2303
      %v2415 = vsub.f32 %v2201, %v2303
      %v2416 = vsub.f32 %v2202, %v2303
      %v2417 = vsub.f32 %v2203, %v2303
      %v2418 = vsub.f32 %v2204, %v2303
      %v2419 = vsub.f32 %v2205, %v2303
      %v2420 = vsub.f32 %v2206, %v2303
      %v2421 = vsub.f32 %v2207, %v2303
      %v2422 = vsub.f32 %v2208, %v2303
      %v2423 = vsub.f32 %v2209, %v2303
      %v2424 = vsub.f32 %v2210, %v2303
      %v2425 = vsub.f32 %v2211, %v2303
      %v2426 = vsub.f32 %v2212, %v2303
      %v2427 = vsub.f32 %v2213, %v2303
      %v2428 = vsub.f32 %v2214, %v2303
      %v2429 = vsub.f32 %v2215, %v2303
      %v2430 = vsub.f32 %v2216, %v2303
      %v2431 = vsub.f32 %v2217, %v2303
      %v2432 = vsub.f32 %v2218, %v2303
      %v2433 = vsub.f32 %v2219, %v2303
      %v2434 = vsub.f32 %v2220, %v2303
      %v2435 = vsub.f32 %v2221, %v2303
      %v2436 = vsub.f32 %v2222, %v2303
      %v2437 = vsub.f32 %v2223, %v2303
      %v2438 = vsub.f32 %v2224, %v2303
      %v2439 = vsub.f32 %v2225, %v2303
      %v2440 = vsub.f32 %v2226, %v2303
      %v2441 = vadd.f32 %v2408, 0.001
      %v2442 = vrsqrt.pop %v2441
      %v2443 = vmul.f32 %v2442, %v2441
      %v2444 = vmul.f32 %v2443, %v2442
      %v2445 = vmul.f32 0.5, %v2444
      %v2446 = vsub.f32 1.5, %v2445
      %v2447 = vmul.f32 %v2442, %v2446
      %vm2448 = vweird.f32 %v2441
      %vm2449 = vweird.f32 %v2442
      %vm2450 = vmor %vm2448, %vm2449
      %v2451 = vsel %vm2450, %v2442, %v2447
      %v2452 = vmul.f32 %v2409, %v2451
      %v2453 = vmul.f32 %v2410, %v2451
      %v2454 = vmul.f32 %v2411, %v2451
      %v2455 = vmul.f32 %v2412, %v2451
      %v2456 = vmul.f32 %v2413, %v2451
      %v2457 = vmul.f32 %v2414, %v2451
      %v2458 = vmul.f32 %v2415, %v2451
      %v2459 = vmul.f32 %v2416, %v2451
      %v2460 = vmul.f32 %v2417, %v2451
      %v2461 = vmul.f32 %v2418, %v2451
      %v2462 = vmul.f32 %v2419, %v2451
      %v2463 = vmul.f32 %v2420, %v2451
      %v2464 = vmul.f32 %v2421, %v2451
      %v2465 = vmul.f32 %v2422, %v2451
      %v2466 = vmul.f32 %v2423, %v2451
      %v2467 = vmul.f32 %v2424, %v2451
      %v2468 = vmul.f32 %v2425, %v2451
      %v2469 = vmul.f32 %v2426, %v2451
      %v2470 = vmul.f32 %v2427, %v2451
      %v2471 = vmul.f32 %v2428, %v2451
      %v2472 = vmul.f32 %v2429, %v2451
      %v2473 = vmul.f32 %v2430, %v2451
      %v2474 = vmul.f32 %v2431, %v2451
      %v2475 = vmul.f32 %v2432, %v2451
      %v2476 = vmul.f32 %v2433, %v2451
      %v2477 = vmul.f32 %v2434, %v2451
      %v2478 = vmul.f32 %v2435, %v2451
      %v2479 = vmul.f32 %v2436, %v2451
      %v2480 = vmul.f32 %v2437, %v2451
      %v2481 = vmul.f32 %v2438, %v2451
      %v2482 = vmul.f32 %v2439, %v2451
      %v2483 = vmul.f32 %v2440, %v2451
      %v2484 = vadd.f32 %v2452, %v326
      %v2485 = vadd.f32 %v2453, %v327
      %v2486 = vadd.f32 %v2454, %v328
      %v2487 = vadd.f32 %v2455, %v329
      %v2488 = vadd.f32 %v2456, %v330
      %v2489 = vadd.f32 %v2457, %v331
      %v2490 = vadd.f32 %v2458, %v332
      %v2491 = vadd.f32 %v2459, %v333
      %v2492 = vadd.f32 %v2460, %v334
      %v2493 = vadd.f32 %v2461, %v335
      %v2494 = vadd.f32 %v2462, %v336
      %v2495 = vadd.f32 %v2463, %v337
      %v2496 = vadd.f32 %v2464, %v338
      %v2497 = vadd.f32 %v2465, %v339
      %v2498 = vadd.f32 %v2466, %v340
      %v2499 = vadd.f32 %v2467, %v341
      %v2500 = vadd.f32 %v2468, %v342
      %v2501 = vadd.f32 %v2469, %v343
      %v2502 = vadd.f32 %v2470, %v344
      %v2503 = vadd.f32 %v2471, %v345
      %v2504 = vadd.f32 %v2472, %v346
      %v2505 = vadd.f32 %v2473, %v347
      %v2506 = vadd.f32 %v2474, %v348
      %v2507 = vadd.f32 %v2475, %v349
      %v2508 = vadd.f32 %v2476, %v350
      %v2509 = vadd.f32 %v2477, %v351
      %v2510 = vadd.f32 %v2478, %v352
      %v2511 = vadd.f32 %v2479, %v353
      %v2512 = vadd.f32 %v2480, %v354
      %v2513 = vadd.f32 %v2481, %v355
      %v2514 = vadd.f32 %v2482, %v356
      %v2515 = vadd.f32 %v2483, %v357
      %v2516 = vmax.f32 %v2484, 0.0
      %v2517 = vmax.f32 %v2485, 0.0
      %v2518 = vmax.f32 %v2486, 0.0
      %v2519 = vmax.f32 %v2487, 0.0
      %v2520 = vmax.f32 %v2488, 0.0
      %v2521 = vmax.f32 %v2489, 0.0
      %v2522 = vmax.f32 %v2490, 0.0
      %v2523 = vmax.f32 %v2491, 0.0
      %v2524 = vmax.f32 %v2492, 0.0
      %v2525 = vmax.f32 %v2493, 0.0
      %v2526 = vmax.f32 %v2494, 0.0
      %v2527 = vmax.f32 %v2495, 0.0
      %v2528 = vmax.f32 %v2496, 0.0
      %v2529 = vmax.f32 %v2497, 0.0
      %v2530 = vmax.f32 %v2498, 0.0
      %v2531 = vmax.f32 %v2499, 0.0
      %v2532 = vmax.f32 %v2500, 0.0
      %v2533 = vmax.f32 %v2501, 0.0
      %v2534 = vmax.f32 %v2502, 0.0
      %v2535 = vmax.f32 %v2503, 0.0
      %v2536 = vmax.f32 %v2504, 0.0
      %v2537 = vmax.f32 %v2505, 0.0
      %v2538 = vmax.f32 %v2506, 0.0
      %v2539 = vmax.f32 %v2507, 0.0
      %v2540 = vmax.f32 %v2508, 0.0
      %v2541 = vmax.f32 %v2509, 0.0
      %v2542 = vmax.f32 %v2510, 0.0
      %v2543 = vmax.f32 %v2511, 0.0
      %v2544 = vmax.f32 %v2512, 0.0
      %v2545 = vmax.f32 %v2513, 0.0
      %v2546 = vmax.f32 %v2514, 0.0
      %v2547 = vmax.f32 %v2515, 0.0
      %2548 = vst.msk [vmem:[%s325] sm:$0xff] %vm495, %v2516
      %2549 = vst.msk [vmem:[%s325 + $0x8] sm:$0xff] %vm495, %v2517
      %2550 = vst.msk [vmem:[%s325 + $0x10] sm:$0xff] %vm495, %v2518
      %2551 = vst.msk [vmem:[%s325 + $0x18] sm:$0xff] %vm495, %v2519
      %2552 = vst.msk [vmem:[%s325 + $0x20] sm:$0xff] %vm495, %v2520
      %2553 = vst.msk [vmem:[%s325 + $0x28] sm:$0xff] %vm495, %v2521
      %2554 = vst.msk [vmem:[%s325 + $0x30] sm:$0xff] %vm495, %v2522
      %2555 = vst.msk [vmem:[%s325 + $0x38] sm:$0xff] %vm495, %v2523
      %2556 = vst.msk [vmem:[%s325 + $0x40] sm:$0xff] %vm495, %v2524
      %2557 = vst.msk [vmem:[%s325 + $0x48] sm:$0xff] %vm495, %v2525
      %2558 = vst.msk [vmem:[%s325 + $0x50] sm:$0xff] %vm495, %v2526
      %2559 = vst.msk [vmem:[%s325 + $0x58] sm:$0xff] %vm495, %v2527
      %2560 = vst.msk [vmem:[%s325 + $0x60] sm:$0xff] %vm495, %v2528
      %2561 = vst.msk [vmem:[%s325 + $0x68] sm:$0xff] %vm495, %v2529
      %2562 = vst.msk [vmem:[%s325 + $0x70] sm:$0xff] %vm495, %v2530
      %2563 = vst.msk [vmem:[%s325 + $0x78] sm:$0xff] %vm495, %v2531
      %2564 = vst.msk [vmem:[%s325 + $0x80] sm:$0xff] %vm495, %v2532
      %2565 = vst.msk [vmem:[%s325 + $0x88] sm:$0xff] %vm495, %v2533
      %2566 = vst.msk [vmem:[%s325 + $0x90] sm:$0xff] %vm495, %v2534
      %2567 = vst.msk [vmem:[%s325 + $0x98] sm:$0xff] %vm495, %v2535
      %2568 = vst.msk [vmem:[%s325 + $0xa0] sm:$0xff] %vm495, %v2536
      %2569 = vst.msk [vmem:[%s325 + $0xa8] sm:$0xff] %vm495, %v2537
      %2570 = vst.msk [vmem:[%s325 + $0xb0] sm:$0xff] %vm495, %v2538
      %2571 = vst.msk [vmem:[%s325 + $0xb8] sm:$0xff] %vm495, %v2539
      %2572 = vst.msk [vmem:[%s325 + $0xc0] sm:$0xff] %vm495, %v2540
      %2573 = vst.msk [vmem:[%s325 + $0xc8] sm:$0xff] %vm495, %v2541
      %2574 = vst.msk [vmem:[%s325 + $0xd0] sm:$0xff] %vm495, %v2542
      %2575 = vst.msk [vmem:[%s325 + $0xd8] sm:$0xff] %vm495, %v2543
      %2576 = vst.msk [vmem:[%s325 + $0xe0] sm:$0xff] %vm495, %v2544
      %2577 = vst.msk [vmem:[%s325 + $0xe8] sm:$0xff] %vm495, %v2545
      %2578 = vst.msk [vmem:[%s325 + $0xf0] sm:$0xff] %vm495, %v2546
      %2579 = vst.msk [vmem:[%s325 + $0xf8] sm:$0xff] %vm495, %v2547
      %p2580 = scmp.lt.s32.totalorder %s19, 1
      %s2581 = scalar_select %p2580, %s19, 1
      %s2582 = smul.addr %s2581, 32
      %s2583 = smul.addr %s2582, 8
      %s2584 = scalar_lea.vmem %s8, %s2583
      // Predicated region
      $region53: #{non_bottleneck_1d_inst_forward.3} parent=51 // pred_check
        %p2585 = pneg %p215
      $region54: #{non_bottleneck_1d_inst_forward.3} parent=51 // pred_check_branch
        %2587 = sbr.rel (%p2585) target = $region56
      $region55: #{non_bottleneck_1d_inst_forward.3} parent=51 // pred_region
        _
      $region56: #{non_bottleneck_1d_inst_forward.3} parent=51 // pred_fallthru
        _
    $region52: #{non_bottleneck_1d_inst_forward.3} parent=5 // pred_fallthru
      _
    %p2588 = scmp.le.s32.totalorder 2, %s14
    // Predicated region
    $region57: #{non_bottleneck_1d_inst_forward.3} parent=5 // pred_check
      %p2589 = pneg %p2588
    $region58: #{non_bottleneck_1d_inst_forward.3} parent=5 // pred_check_branch
      %2591 = sbr.rel (%p2589) target = $region60
    $region59: #{non_bottleneck_1d_inst_forward.3} parent=5 // pred_region
      %s2592 = ssub.s32 %s14, 2
      // Predicated region
      $region61: #{non_bottleneck_1d_inst_forward.3} parent=59 // pred_check
        %p2593 = pneg %p221
      $region62: #{non_bottleneck_1d_inst_forward.3} parent=59 // pred_check_branch
        %2595 = sbr.rel (%p2593) target = $region64
      $region63: #{non_bottleneck_1d_inst_forward.3} parent=59 // pred_region
        %p2596 = scmp.lt.s32.totalorder %s20, 1
        %s2597 = scalar_select %p2596, %s20, 1
        %s2598 = smul.addr %s2597, 32
        %s2599 = smul.addr %s2598, 8
        %s2600 = scalar_lea.vmem %s8, %s2599
      $region64: #{non_bottleneck_1d_inst_forward.3} parent=59 // pred_fallthru
        _
    $region60: #{non_bottleneck_1d_inst_forward.3} parent=5 // pred_fallthru
      _
  $region6: #{non_bottleneck_1d_inst_forward.3} parent=0 // loop_footer
    %s18 = sadd.s32 1, %s14
  $region7: #{non_bottleneck_1d_inst_forward.3} parent=0 // loop_footer_branch
    %13 = sbr.rel target = $region3
  $region8: #{non_bottleneck_1d_inst_forward.3} parent=0 // loop_exit
    _

</llo_original>
